<compile_context>
chip_gen: v6e
topology: v6e:2x2x1
jax: 0.10.0
libtpu: 0.0.40
codegen_flags: <defaults>
</compile_context>

<pallas_src>
import math

import jax
import jax.numpy as jnp
import numpy as np
from jax.experimental import pallas as pl
from jax.experimental.pallas import tpu as pltpu

INV_SQRT2 = 1.0 / math.sqrt(2.0)


def _ds(start, size, stride):
    """pl.ds helper that omits the stride when it is 1."""
    if stride == 1:
        return pl.ds(start, size)
    return pl.ds(start, size, stride=stride)


# ---------------------------------------------------------------------------
# Spectral norm (torch.nn.utils.spectral_norm, training mode, 1 power iter).
# Tiny O(C*K*K) work -> plain JAX.  Returns (w / sigma, updated u).
# ---------------------------------------------------------------------------
def spectral_normalize(weight, u, eps=1e-12):
    c_out = weight.shape[0]
    w_mat = weight.reshape(c_out, -1)
    v = w_mat.T @ u
    v = v / (jnp.linalg.norm(v) + eps)
    u_new = w_mat @ v
    u_new = u_new / (jnp.linalg.norm(u_new) + eps)
    sigma = jnp.dot(u_new, w_mat @ v)
    return weight / sigma, u_new


# ---------------------------------------------------------------------------
# Fused LeakyReLU -> 3x3 stride-1 conv (+bias) [-> +shortcut, * 1/sqrt(2)].
# NHWC; channel contraction on the MXU, one matmul per tap.  Grid: (N,).
# (Whole small padded image per step; production-scale inputs would tile H
#  exactly like the depthwise kernel below.)
# ---------------------------------------------------------------------------
def _make_conv3x3_kernel(KH, KW, Ho, Wo, Cout, slope, fuse_shortcut, post_scale):
    def kernel(*refs):
        if fuse_shortcut:
            x_ref, w_ref, b_ref, sc_ref, o_ref = refs
        else:
            x_ref, w_ref, b_ref, o_ref = refs
        w = w_ref[...].astype(jnp.float32)                 # (KH,KW,Cin,Cout) hoisted
        acc = jnp.zeros((Ho * Wo, Cout), jnp.float32)
        for kh in range(KH):
            for kw in range(KW):
                patch = x_ref[0, kh:kh + Ho, kw:kw + Wo, :].astype(jnp.float32)
                # LeakyReLU fused on the conv input (zero padding is invariant).
                patch = jnp.where(patch >= 0, patch, slope * patch)
                acc = acc + jnp.dot(patch.reshape(Ho * Wo, -1), w[kh, kw],
                                    preferred_element_type=jnp.float32)
        acc = acc + b_ref[...].astype(jnp.float32)         # (1, Cout) broadcast
        out = acc.reshape(Ho, Wo, Cout)
        if fuse_shortcut:
            out = (out + sc_ref[0].astype(jnp.float32)) * post_scale
        o_ref[0] = out.astype(o_ref.dtype)
    return kernel


def conv3x3_act(x, w_oihw, bias, *, slope=0.2, shortcut=None, post_scale=1.0):
    """x: (N, H, W, Cin) NHWC.  w: (Cout, Cin, KH, KW) torch layout."""
    N, H, W, Cin = x.shape
    Cout, _, KH, KW = w_oihw.shape
    ph, pw = KH // 2, KW // 2
    xp = jnp.pad(x, ((0, 0), (ph, ph), (pw, pw), (0, 0)))
    w_k = jnp.transpose(w_oihw, (2, 3, 1, 0))              # (KH, KW, Cin, Cout)
    b2 = bias.reshape(1, Cout)
    fuse = shortcut is not None

    in_specs = [
        pl.BlockSpec((1, H + 2 * ph, W + 2 * pw, Cin), lambda n: (n, 0, 0, 0)),
        pl.BlockSpec((KH, KW, Cin, Cout), lambda n: (0, 0, 0, 0)),
        pl.BlockSpec((1, Cout), lambda n: (0, 0)),
    ]
    args = [xp, w_k, b2]
    if fuse:
        in_specs.append(pl.BlockSpec((1, H, W, Cout), lambda n: (n, 0, 0, 0)))
        args.append(shortcut)

    kernel = _make_conv3x3_kernel(KH, KW, H, W, Cout, slope, fuse, post_scale)
    return pl.pallas_call(
        kernel,
        out_shape=jax.ShapeDtypeStruct((N, H, W, Cout), x.dtype),
        grid=(N,),
        in_specs=in_specs,
        out_specs=pl.BlockSpec((1, H, W, Cout), lambda n: (n, 0, 0, 0)),
        compiler_params=pltpu.CompilerParams(
            dimension_semantics=("parallel",),
            vmem_limit_bytes=32 * 1024 * 1024),
    )(*args)


# ---------------------------------------------------------------------------
# LearnedDownSample: spectral-normed depthwise conv (groups == channels).
#  - strided pl.ds taps from a 3-D VMEM staging buffer (no HBM parity splits,
#    no integer indexer mixed with strided slices)
#  - grid (N, H-tiles); the 1-row halo comes from a second, 1-row-tall view of
#    the same padded array (no overlapping-block copies, ~1.1x input DMA)
#  - VMEM-budgeted H tile, explicit vmem_limit_bytes
#  - hoisted weights/bias, f32 accumulation, bf16-capable activations
#  - stays on the VPU (depthwise conv has no useful MXU mapping)
# ---------------------------------------------------------------------------
def _make_depthwise_kernel(KH, KW, sh, sw, TH, Wo, halo, B):
    def kernel(*refs):
        if halo > 0:
            x_ref, xnext_ref, w_ref, b_ref, o_ref, xbuf = refs
        else:
            x_ref, w_ref, b_ref, o_ref, xbuf = refs
        C = o_ref.shape[-1]
        # Stage tile + halo rows contiguously so every tap is one strided read.
        xbuf[0:B, :, :] = x_ref[0]
        if halo > 0:
            xbuf[B:B + halo, :, :] = xnext_ref[0]
        w = w_ref[...].astype(jnp.float32)        # (KH, KW, C), hoisted once
        b = b_ref[...].astype(jnp.float32)        # (1, C)
        acc = jnp.zeros((TH, Wo, C), jnp.float32)
        for kh in range(KH):                      # fully unrolled VPU MACs
            for kw in range(KW):
                patch = xbuf[_ds(kh, TH, sh), _ds(kw, Wo, sw), :]
                acc = acc + patch.astype(jnp.float32) * w[kh, kw]
        o_ref[0] = (acc + b).astype(o_ref.dtype)
    return kernel


def learned_downsample(x, w_c1kk, bias, *, ksize, stride, padding,
                       tile_h=None, vmem_budget_bytes=16 * 1024 * 1024):
    """Depthwise strided conv.  x: (N, H, W, C) NHWC, w: (C, 1, KH, KW)."""
    KH, KW = ksize
    sh, sw = stride
    ph, pw = padding
    N, H, W, C = x.shape
    Wp = W + 2 * pw
    Ho = (H + 2 * ph - KH) // sh + 1
    Wo = (Wp - KW) // sw + 1

    if tile_h is None:
        # Budget-driven H tile (v7x only has 64 MiB physical / 32 MiB scoped
        # VMEM, so stay well under that).
        itemsize = jnp.dtype(x.dtype).itemsize
        row_in = Wp * C * itemsize
        row_out = Wo * C * itemsize
        tile_h = Ho
        while tile_h > 1 and (
            2 * tile_h * sh * row_in            # double-buffered main input view
            + 2 * max(KH - sh, 0) * row_in      # double-buffered halo view
            + 2 * tile_h * row_out              # double-buffered output
            + (tile_h * sh + KH) * row_in       # staging scratch
        ) > vmem_budget_bytes:
            tile_h = (tile_h + 1) // 2
    TH = max(1, min(tile_h, Ho))
    n_t = pl.cdiv(Ho, TH)
    Ho_pad = n_t * TH
    B = TH * sh                                  # input rows per (non-halo) block
    halo = max(KH - sh, 0)                       # rows borrowed from next block
    assert halo == 0 or B % halo == 0

    # Conv zero padding + bottom padding to a whole number of blocks, fused
    # into a single pad (the only remaining pre-kernel HBM pass).
    H_padded = (n_t + 1) * B
    pad_bottom = H_padded - H - ph
    xp = jnp.pad(x, ((0, 0), (ph, pad_bottom), (pw, pw), (0, 0)))

    w_k = jnp.transpose(w_c1kk[:, 0, :, :], (1, 2, 0))     # (KH, KW, C)
    b2 = bias.reshape(1, C)

    in_specs = [pl.BlockSpec((1, B, Wp, C), lambda n, t: (n, t, 0, 0))]
    args = [xp]
    if halo > 0:
        in_specs.append(
            pl.BlockSpec((1, halo, Wp, C),
                         lambda n, t: (n, ((t + 1) * B) // halo, 0, 0)))
        args.append(xp)
    in_specs += [
        pl.BlockSpec((KH, KW, C), lambda n, t: (0, 0, 0)),
        pl.BlockSpec((1, C), lambda n, t: (0, 0)),
    ]
    args += [w_k, b2]

    kernel = _make_depthwise_kernel(KH, KW, sh, sw, TH, Wo, halo, B)
    out = pl.pallas_call(
        kernel,
        out_shape=jax.ShapeDtypeStruct((N, Ho_pad, Wo, C), x.dtype),
        grid=(N, n_t),
        in_specs=in_specs,
        out_specs=pl.BlockSpec((1, TH, Wo, C), lambda n, t: (n, t, 0, 0)),
        scratch_shapes=[pltpu.VMEM((B + halo, Wp, C), x.dtype)],
        compiler_params=pltpu.CompilerParams(
            dimension_semantics=("parallel", "parallel"),
            vmem_limit_bytes=32 * 1024 * 1024),
    )(*args)
    return out[:, :Ho] if Ho_pad != Ho else out


# ---------------------------------------------------------------------------
# Shortcut: 2x2 average pool fused with the (spectral-normed) 1x1 conv.
# avg_pool and a 1x1 conv commute, so pooling first quarters the matmul work.
# The batch tile is staged into a 3-D VMEM scratch so the strided pooling taps
# never mix an integer indexer with strided pl.ds slices.
# ---------------------------------------------------------------------------
def _make_shortcut_kernel(Ho, Wo, Cin, Cout, pool_h, pool_w, apply_conv):
    def kernel(*refs):
        if apply_conv:
            x_ref, w_ref, o_ref, xbuf = refs
        else:
            x_ref, o_ref, xbuf = refs
        if pool_h == 1 and pool_w == 1:
            pooled = x_ref[0].astype(jnp.float32)
        else:
            xbuf[...] = x_ref[0]                           # stage to 3-D ref
            acc = jnp.zeros((Ho, Wo, Cin), jnp.float32)
            for a in range(pool_h):
                for b in range(pool_w):
                    acc = acc + xbuf[_ds(a, Ho, pool_h), _ds(b, Wo, pool_w),
                                     :].astype(jnp.float32)
            pooled = acc * (1.0 / (pool_h * pool_w))
        if apply_conv:
            w = w_ref[...].astype(jnp.float32)             # (Cin, Cout)
            out = jnp.dot(pooled.reshape(Ho * Wo, Cin), w,
                          preferred_element_type=jnp.float32)
            out = out.reshape(Ho, Wo, Cout)
        else:
            out = pooled
        o_ref[0] = out.astype(o_ref.dtype)
    return kernel


def shortcut_pool_1x1(x, w_oi11=None, *, pool=(2, 2)):
    """avg_pool(pool) followed by an optional 1x1 conv.  x: NHWC."""
    N, H, W, Cin = x.shape
    apply_conv = w_oi11 is not None
    Cout = w_oi11.shape[0] if apply_conv else Cin
    Ho, Wo = H // pool[0], W // pool[1]

    in_specs = [pl.BlockSpec((1, H, W, Cin), lambda n: (n, 0, 0, 0))]
    args = [x]
    if apply_conv:
        w_k = jnp.transpose(w_oi11[:, :, 0, 0], (1, 0))    # (Cin, Cout)
        in_specs.append(pl.BlockSpec((Cin, Cout), lambda n: (0, 0)))
        args.append(w_k)

    kernel = _make_shortcut_kernel(Ho, Wo, Cin, Cout, pool[0], pool[1],
                                   apply_conv)
    return pl.pallas_call(
        kernel,
        out_shape=jax.ShapeDtypeStruct((N, Ho, Wo, Cout), x.dtype),
        grid=(N,),
        in_specs=in_specs,
        out_specs=pl.BlockSpec((1, Ho, Wo, Cout), lambda n: (n, 0, 0, 0)),
        scratch_shapes=[pltpu.VMEM((H, W, Cin), x.dtype)],
        compiler_params=pltpu.CompilerParams(
            dimension_semantics=("parallel",),
            vmem_limit_bytes=32 * 1024 * 1024),
    )(*args)


# ---------------------------------------------------------------------------
# ResBlk forward.
# ---------------------------------------------------------------------------
def resblk_forward(x_nchw, params, *, downsample="half", negative_slope=0.2,
                   normalize=False, tile_h=None):
    """x_nchw: (N, C_in, H, W).  Returns (out_nchw, updated power-iter vectors)."""
    if normalize:
        # TODO(synk): InstanceNorm2d path (ResBlk default is normalize=False).
        raise NotImplementedError("normalize=True is not implemented")
    if downsample not in ("none", "half"):
        # TODO(synk): 'timepreserve'/'channelpreserve' wrapper plumbing (the
        # depthwise kernel itself already supports those kernel/stride configs).
        raise RuntimeError("Got unexpected donwsampletype %s" % downsample)

    N, Cin, H, W = x_nchw.shape
    Cout = params["w2"].shape[0]
    learned_sc = Cin != Cout
    if downsample == "half":
        assert H % 2 == 0 and W % 2 == 0  # TODO(synk): odd-size edge duplication

    w1_sn, u1_new = spectral_normalize(params["w1"], params["u1"])
    w2_sn, u2_new = spectral_normalize(params["w2"], params["u2"])
    new_u = {"u1": u1_new, "u2": u2_new}

    # Single NCHW -> NHWC relayout for the whole block (channels on lanes).
    x = jnp.transpose(x_nchw, (0, 2, 3, 1))

    # Residual branch.
    h = conv3x3_act(x, w1_sn, params["b1"], slope=negative_slope)
    if downsample == "half":
        wd_sn, ud_new = spectral_normalize(params["wd"], params["ud"])
        new_u["ud"] = ud_new
        h = learned_downsample(h, wd_sn, params["bd"], ksize=(3, 3),
                               stride=(2, 2), padding=(1, 1), tile_h=tile_h)

    # Shortcut branch.
    if learned_sc:
        wsc_sn, usc_new = spectral_normalize(params["w_sc"], params["u_sc"])
        new_u["u_sc"] = usc_new
    if downsample == "half":
        sc = shortcut_pool_1x1(x, wsc_sn if learned_sc else None, pool=(2, 2))
    elif learned_sc:
        sc = shortcut_pool_1x1(x, wsc_sn, pool=(1, 1))
    else:
        sc = x

    # conv2 with the shortcut add and the 1/sqrt(2) scale fused in.
    out = conv3x3_act(h, w2_sn, params["b2"], slope=negative_slope,
                      shortcut=sc, post_scale=INV_SQRT2)
    return jnp.transpose(out, (0, 3, 1, 2)), new_u


# ---------------------------------------------------------------------------
# Pure-JAX (lax) reference of the PyTorch ResBlk forward.
# ---------------------------------------------------------------------------
def resblk_reference(x, params, *, downsample="half", negative_slope=0.2):
    Cin = x.shape[1]
    Cout = params["w2"].shape[0]
    learned_sc = Cin != Cout
    prec = jax.lax.Precision.HIGHEST

    def conv(v, w, b, stride, pad, groups=1):
        y = jax.lax.conv_general_dilated(
            v, w, window_strides=stride,
            padding=((pad[0], pad[0]), (pad[1], pad[1])),
            feature_group_count=groups,
            dimension_numbers=("NCHW", "OIHW", "NCHW"), precision=prec)
        return y if b is None else y + b[None, :, None, None]

    def lrelu(v):
        return jnp.where(v >= 0, v, negative_slope * v)

    w1_sn, _ = spectral_normalize(params["w1"], params["u1"])
    w2_sn, _ = spectral_normalize(params["w2"], params["u2"])

    h = conv(lrelu(x), w1_sn, params["b1"], (1, 1), (1, 1))
    if downsample == "half":
        wd_sn, _ = spectral_normalize(params["wd"], params["ud"])
        h = conv(h, wd_sn, params["bd"], (2, 2), (1, 1), groups=Cin)
    h = conv(lrelu(h), w2_sn, params["b2"], (1, 1), (1, 1))

    if learned_sc:
        wsc_sn, _ = spectral_normalize(params["w_sc"], params["u_sc"])
        s = conv(x, wsc_sn, None, (1, 1), (0, 0))
    else:
        s = x
    if downsample == "half":
        s = jax.lax.reduce_window(s, 0.0, jax.lax.add,
                                  (1, 1, 2, 2), (1, 1, 2, 2), "VALID") / 4.0
    return (s + h) / math.sqrt(2.0)


if __name__ == "__main__":
    key = jax.random.PRNGKey(0)
    ks = jax.random.split(key, 16)
    N, Cin, Cout, H, W = 2, 4, 8, 16, 16
    x = jax.random.normal(ks[0], (N, Cin, H, W), jnp.float32)

    # nn.Conv2d default init: kaiming_uniform(a=sqrt(5)) -> U(+-1/sqrt(fan_in)).
    def w_init(k, shape, fan_in):
        bound = 1.0 / math.sqrt(fan_in)
        return jax.random.uniform(k, shape, jnp.float32, -bound, bound)

    def u_init(k, n):
        u = jax.random.normal(k, (n,), jnp.float32)
        return u / jnp.linalg.norm(u)

    params = {
        "w1": w_init(ks[1], (Cin, Cin, 3, 3), Cin * 9),
        "b1": w_init(ks[2], (Cin,), Cin * 9),
        "u1": u_init(ks[3], Cin),
        "wd": w_init(ks[4], (Cin, 1, 3, 3), 9),
        "bd": w_init(ks[5], (Cin,), 9),
        "ud": u_init(ks[6], Cin),
        "w2": w_init(ks[7], (Cout, Cin, 3, 3), Cin * 9),
        "b2": w_init(ks[8], (Cout,), Cin * 9),
        "u2": u_init(ks[9], Cout),
        "w_sc": w_init(ks[10], (Cout, Cin, 1, 1), Cin),
        "u_sc": u_init(ks[11], Cout),
    }

    # --- 'half' ResBlk (all three Pallas kernels, dim_in != dim_out). -------
    out, _ = resblk_forward(x, params, downsample="half", tile_h=4)
    out = jax.block_until_ready(out)
    assert out.shape == (N, Cout, H // 2, W // 2), out.shape
    ref = resblk_reference(x, params, downsample="half")
    np.testing.assert_allclose(np.asarray(out), np.asarray(ref),
                               rtol=2e-2, atol=2e-2)

    # --- 'none' ResBlk (identity shortcut, dim_in == dim_out). --------------
    p_none = {
        "w1": params["w1"], "b1": params["b1"], "u1": params["u1"],
        "w2": w_init(ks[12], (Cin, Cin, 3, 3), Cin * 9),
        "b2": w_init(ks[13], (Cin,), Cin * 9),
        "u2": u_init(ks[14], Cin),
    }
    out_n, _ = resblk_forward(x, p_none, downsample="none")
    out_n = jax.block_until_ready(out_n)
    assert out_n.shape == (N, Cin, H, W), out_n.shape
    ref_n = resblk_reference(x, p_none, downsample="none")
    np.testing.assert_allclose(np.asarray(out_n), np.asarray(ref_n),
                               rtol=2e-2, atol=2e-2)

    # --- bf16 activations (halve HBM bytes, keep f32 accumulation). ---------
    out_bf16, _ = resblk_forward(x.astype(jnp.bfloat16), params,
                                 downsample="half", tile_h=4)
    out_bf16 = jax.block_until_ready(out_bf16)
    assert out_bf16.dtype == jnp.bfloat16
    assert out_bf16.shape == (N, Cout, H // 2, W // 2)
    assert bool(jnp.all(jnp.isfinite(out_bf16.astype(jnp.float32))))

    print("KERNEL_OK")
</pallas_src>

<mosaic_0001>
module attributes {stable_mosaic.version = 11 : i64} {
  func.func @kernel(%arg0: i32, %arg1: memref<1x18x18x4xf32, #tpu.memory_space<vmem>>, %arg2: memref<3x3x4x4xf32, #tpu.memory_space<vmem>>, %arg3: memref<1x4xf32, #tpu.memory_space<vmem>>, %arg4: memref<1x16x16x4xf32, #tpu.memory_space<vmem>>) attributes {dimension_semantics = [#tpu.dimension_semantics<parallel>], iteration_bounds = array<i64: 2>, scalar_prefetch = 0 : i64, scratch_operands = 0 : i64, tpu.core_type = #tpu.core_type<tc>, window_params = [{transform_indices = @transform_0, window_bounds = array<i64: 1, 18, 18, 4>}, {pipeline_mode = #tpu.pipeline_mode<synchronous>, transform_indices = @transform_1, window_bounds = array<i64: 3, 3, 4, 4>}, {pipeline_mode = #tpu.pipeline_mode<synchronous>, transform_indices = @transform_2, window_bounds = array<i64: 1, 4>}, {transform_indices = @transform_3, window_bounds = array<i64: 1, 16, 16, 4>}]} {
    %c0 = arith.constant 0 : index
    %c0_0 = arith.constant 0 : index
    %c0_1 = arith.constant 0 : index
    %c0_2 = arith.constant 0 : index
    %0 = vector.load %arg2[%c0, %c0_0, %c0_1, %c0_2] : memref<3x3x4x4xf32, #tpu.memory_space<vmem>>, vector<3x3x4x4xf32>
    %cst = arith.constant 0.000000e+00 : f32
    %1 = vector.broadcast %cst : f32 to vector<256x4xf32>
    %c0_3 = arith.constant 0 : index
    %c0_4 = arith.constant 0 : index
    %c0_5 = arith.constant 0 : index
    %c0_6 = arith.constant 0 : index
    %2 = vector.load %arg1[%c0_3, %c0_4, %c0_5, %c0_6] : memref<1x18x18x4xf32, #tpu.memory_space<vmem>>, vector<1x16x16x4xf32>
    %3 = vector.shape_cast %2 : vector<1x16x16x4xf32> to vector<16x16x4xf32>
    %cst_7 = arith.constant 0.000000e+00 : f32
    %4 = vector.broadcast %cst_7 : f32 to vector<16x16x4xf32>
    %5 = arith.cmpf oge, %3, %4 : vector<16x16x4xf32>
    %cst_8 = arith.constant 2.000000e-01 : f32
    %6 = vector.broadcast %cst_8 : f32 to vector<16x16x4xf32>
    %7 = arith.mulf %6, %3 : vector<16x16x4xf32>
    %8 = arith.select %5, %3, %7 : vector<16x16x4xi1>, vector<16x16x4xf32>
    %9 = vector.shape_cast %8 : vector<16x16x4xf32> to vector<256x4xf32>
    %10 = vector.extract_strided_slice %0 {offsets = [0, 0, 0, 0], sizes = [1, 1, 4, 4], strides = [1, 1, 1, 1]} : vector<3x3x4x4xf32> to vector<1x1x4x4xf32>
    %11 = vector.shape_cast %10 : vector<1x1x4x4xf32> to vector<4x4xf32>
    %cst_9 = arith.constant dense<0.000000e+00> : vector<256x4xf32>
    %12 = tpu.matmul %9, %11, %cst_9 {dimension_numbers = #tpu.dot_dimension_numbers<[1], [0], [0], [1], [0, 0, 1, 1], [], []>} : vector<256x4xf32>, vector<4x4xf32>, vector<256x4xf32> -> vector<256x4xf32>
    %13 = arith.addf %1, %12 : vector<256x4xf32>
    %c0_10 = arith.constant 0 : index
    %c0_11 = arith.constant 0 : index
    %c1 = arith.constant 1 : index
    %c0_12 = arith.constant 0 : index
    %14 = vector.load %arg1[%c0_10, %c0_11, %c1, %c0_12] : memref<1x18x18x4xf32, #tpu.memory_space<vmem>>, vector<1x16x16x4xf32>
    %15 = vector.shape_cast %14 : vector<1x16x16x4xf32> to vector<16x16x4xf32>
    %cst_13 = arith.constant 0.000000e+00 : f32
    %16 = vector.broadcast %cst_13 : f32 to vector<16x16x4xf32>
    %17 = arith.cmpf oge, %15, %16 : vector<16x16x4xf32>
    %cst_14 = arith.constant 2.000000e-01 : f32
    %18 = vector.broadcast %cst_14 : f32 to vector<16x16x4xf32>
    %19 = arith.mulf %18, %15 : vector<16x16x4xf32>
    %20 = arith.select %17, %15, %19 : vector<16x16x4xi1>, vector<16x16x4xf32>
    %21 = vector.shape_cast %20 : vector<16x16x4xf32> to vector<256x4xf32>
    %22 = vector.extract_strided_slice %0 {offsets = [0, 1, 0, 0], sizes = [1, 1, 4, 4], strides = [1, 1, 1, 1]} : vector<3x3x4x4xf32> to vector<1x1x4x4xf32>
    %23 = vector.shape_cast %22 : vector<1x1x4x4xf32> to vector<4x4xf32>
    %cst_15 = arith.constant dense<0.000000e+00> : vector<256x4xf32>
    %24 = tpu.matmul %21, %23, %cst_15 {dimension_numbers = #tpu.dot_dimension_numbers<[1], [0], [0], [1], [0, 0, 1, 1], [], []>} : vector<256x4xf32>, vector<4x4xf32>, vector<256x4xf32> -> vector<256x4xf32>
    %25 = arith.addf %13, %24 : vector<256x4xf32>
    %c0_16 = arith.constant 0 : index
    %c0_17 = arith.constant 0 : index
    %c2 = arith.constant 2 : index
    %c0_18 = arith.constant 0 : index
    %26 = vector.load %arg1[%c0_16, %c0_17, %c2, %c0_18] : memref<1x18x18x4xf32, #tpu.memory_space<vmem>>, vector<1x16x16x4xf32>
    %27 = vector.shape_cast %26 : vector<1x16x16x4xf32> to vector<16x16x4xf32>
    %cst_19 = arith.constant 0.000000e+00 : f32
    %28 = vector.broadcast %cst_19 : f32 to vector<16x16x4xf32>
    %29 = arith.cmpf oge, %27, %28 : vector<16x16x4xf32>
    %cst_20 = arith.constant 2.000000e-01 : f32
    %30 = vector.broadcast %cst_20 : f32 to vector<16x16x4xf32>
    %31 = arith.mulf %30, %27 : vector<16x16x4xf32>
    %32 = arith.select %29, %27, %31 : vector<16x16x4xi1>, vector<16x16x4xf32>
    %33 = vector.shape_cast %32 : vector<16x16x4xf32> to vector<256x4xf32>
    %34 = vector.extract_strided_slice %0 {offsets = [0, 2, 0, 0], sizes = [1, 1, 4, 4], strides = [1, 1, 1, 1]} : vector<3x3x4x4xf32> to vector<1x1x4x4xf32>
    %35 = vector.shape_cast %34 : vector<1x1x4x4xf32> to vector<4x4xf32>
    %cst_21 = arith.constant dense<0.000000e+00> : vector<256x4xf32>
    %36 = tpu.matmul %33, %35, %cst_21 {dimension_numbers = #tpu.dot_dimension_numbers<[1], [0], [0], [1], [0, 0, 1, 1], [], []>} : vector<256x4xf32>, vector<4x4xf32>, vector<256x4xf32> -> vector<256x4xf32>
    %37 = arith.addf %25, %36 : vector<256x4xf32>
    %c0_22 = arith.constant 0 : index
    %c1_23 = arith.constant 1 : index
    %c0_24 = arith.constant 0 : index
    %c0_25 = arith.constant 0 : index
    %38 = vector.load %arg1[%c0_22, %c1_23, %c0_24, %c0_25] : memref<1x18x18x4xf32, #tpu.memory_space<vmem>>, vector<1x16x16x4xf32>
    %39 = vector.shape_cast %38 : vector<1x16x16x4xf32> to vector<16x16x4xf32>
    %cst_26 = arith.constant 0.000000e+00 : f32
    %40 = vector.broadcast %cst_26 : f32 to vector<16x16x4xf32>
    %41 = arith.cmpf oge, %39, %40 : vector<16x16x4xf32>
    %cst_27 = arith.constant 2.000000e-01 : f32
    %42 = vector.broadcast %cst_27 : f32 to vector<16x16x4xf32>
    %43 = arith.mulf %42, %39 : vector<16x16x4xf32>
    %44 = arith.select %41, %39, %43 : vector<16x16x4xi1>, vector<16x16x4xf32>
    %45 = vector.shape_cast %44 : vector<16x16x4xf32> to vector<256x4xf32>
    %46 = vector.extract_strided_slice %0 {offsets = [1, 0, 0, 0], sizes = [1, 1, 4, 4], strides = [1, 1, 1, 1]} : vector<3x3x4x4xf32> to vector<1x1x4x4xf32>
    %47 = vector.shape_cast %46 : vector<1x1x4x4xf32> to vector<4x4xf32>
    %cst_28 = arith.constant dense<0.000000e+00> : vector<256x4xf32>
    %48 = tpu.matmul %45, %47, %cst_28 {dimension_numbers = #tpu.dot_dimension_numbers<[1], [0], [0], [1], [0, 0, 1, 1], [], []>} : vector<256x4xf32>, vector<4x4xf32>, vector<256x4xf32> -> vector<256x4xf32>
    %49 = arith.addf %37, %48 : vector<256x4xf32>
    %c0_29 = arith.constant 0 : index
    %c1_30 = arith.constant 1 : index
    %c1_31 = arith.constant 1 : index
    %c0_32 = arith.constant 0 : index
    %50 = vector.load %arg1[%c0_29, %c1_30, %c1_31, %c0_32] : memref<1x18x18x4xf32, #tpu.memory_space<vmem>>, vector<1x16x16x4xf32>
    %51 = vector.shape_cast %50 : vector<1x16x16x4xf32> to vector<16x16x4xf32>
    %cst_33 = arith.constant 0.000000e+00 : f32
    %52 = vector.broadcast %cst_33 : f32 to vector<16x16x4xf32>
    %53 = arith.cmpf oge, %51, %52 : vector<16x16x4xf32>
    %cst_34 = arith.constant 2.000000e-01 : f32
    %54 = vector.broadcast %cst_34 : f32 to vector<16x16x4xf32>
    %55 = arith.mulf %54, %51 : vector<16x16x4xf32>
    %56 = arith.select %53, %51, %55 : vector<16x16x4xi1>, vector<16x16x4xf32>
    %57 = vector.shape_cast %56 : vector<16x16x4xf32> to vector<256x4xf32>
    %58 = vector.extract_strided_slice %0 {offsets = [1, 1, 0, 0], sizes = [1, 1, 4, 4], strides = [1, 1, 1, 1]} : vector<3x3x4x4xf32> to vector<1x1x4x4xf32>
    %59 = vector.shape_cast %58 : vector<1x1x4x4xf32> to vector<4x4xf32>
    %cst_35 = arith.constant dense<0.000000e+00> : vector<256x4xf32>
    %60 = tpu.matmul %57, %59, %cst_35 {dimension_numbers = #tpu.dot_dimension_numbers<[1], [0], [0], [1], [0, 0, 1, 1], [], []>} : vector<256x4xf32>, vector<4x4xf32>, vector<256x4xf32> -> vector<256x4xf32>
    %61 = arith.addf %49, %60 : vector<256x4xf32>
    %c0_36 = arith.constant 0 : index
    %c1_37 = arith.constant 1 : index
    %c2_38 = arith.constant 2 : index
    %c0_39 = arith.constant 0 : index
    %62 = vector.load %arg1[%c0_36, %c1_37, %c2_38, %c0_39] : memref<1x18x18x4xf32, #tpu.memory_space<vmem>>, vector<1x16x16x4xf32>
    %63 = vector.shape_cast %62 : vector<1x16x16x4xf32> to vector<16x16x4xf32>
    %cst_40 = arith.constant 0.000000e+00 : f32
    %64 = vector.broadcast %cst_40 : f32 to vector<16x16x4xf32>
    %65 = arith.cmpf oge, %63, %64 : vector<16x16x4xf32>
    %cst_41 = arith.constant 2.000000e-01 : f32
    %66 = vector.broadcast %cst_41 : f32 to vector<16x16x4xf32>
    %67 = arith.mulf %66, %63 : vector<16x16x4xf32>
    %68 = arith.select %65, %63, %67 : vector<16x16x4xi1>, vector<16x16x4xf32>
    %69 = vector.shape_cast %68 : vector<16x16x4xf32> to vector<256x4xf32>
    %70 = vector.extract_strided_slice %0 {offsets = [1, 2, 0, 0], sizes = [1, 1, 4, 4], strides = [1, 1, 1, 1]} : vector<3x3x4x4xf32> to vector<1x1x4x4xf32>
    %71 = vector.shape_cast %70 : vector<1x1x4x4xf32> to vector<4x4xf32>
    %cst_42 = arith.constant dense<0.000000e+00> : vector<256x4xf32>
    %72 = tpu.matmul %69, %71, %cst_42 {dimension_numbers = #tpu.dot_dimension_numbers<[1], [0], [0], [1], [0, 0, 1, 1], [], []>} : vector<256x4xf32>, vector<4x4xf32>, vector<256x4xf32> -> vector<256x4xf32>
    %73 = arith.addf %61, %72 : vector<256x4xf32>
    %c0_43 = arith.constant 0 : index
    %c2_44 = arith.constant 2 : index
    %c0_45 = arith.constant 0 : index
    %c0_46 = arith.constant 0 : index
    %74 = vector.load %arg1[%c0_43, %c2_44, %c0_45, %c0_46] : memref<1x18x18x4xf32, #tpu.memory_space<vmem>>, vector<1x16x16x4xf32>
    %75 = vector.shape_cast %74 : vector<1x16x16x4xf32> to vector<16x16x4xf32>
    %cst_47 = arith.constant 0.000000e+00 : f32
    %76 = vector.broadcast %cst_47 : f32 to vector<16x16x4xf32>
    %77 = arith.cmpf oge, %75, %76 : vector<16x16x4xf32>
    %cst_48 = arith.constant 2.000000e-01 : f32
    %78 = vector.broadcast %cst_48 : f32 to vector<16x16x4xf32>
    %79 = arith.mulf %78, %75 : vector<16x16x4xf32>
    %80 = arith.select %77, %75, %79 : vector<16x16x4xi1>, vector<16x16x4xf32>
    %81 = vector.shape_cast %80 : vector<16x16x4xf32> to vector<256x4xf32>
    %82 = vector.extract_strided_slice %0 {offsets = [2, 0, 0, 0], sizes = [1, 1, 4, 4], strides = [1, 1, 1, 1]} : vector<3x3x4x4xf32> to vector<1x1x4x4xf32>
    %83 = vector.shape_cast %82 : vector<1x1x4x4xf32> to vector<4x4xf32>
    %cst_49 = arith.constant dense<0.000000e+00> : vector<256x4xf32>
    %84 = tpu.matmul %81, %83, %cst_49 {dimension_numbers = #tpu.dot_dimension_numbers<[1], [0], [0], [1], [0, 0, 1, 1], [], []>} : vector<256x4xf32>, vector<4x4xf32>, vector<256x4xf32> -> vector<256x4xf32>
    %85 = arith.addf %73, %84 : vector<256x4xf32>
    %c0_50 = arith.constant 0 : index
    %c2_51 = arith.constant 2 : index
    %c1_52 = arith.constant 1 : index
    %c0_53 = arith.constant 0 : index
    %86 = vector.load %arg1[%c0_50, %c2_51, %c1_52, %c0_53] : memref<1x18x18x4xf32, #tpu.memory_space<vmem>>, vector<1x16x16x4xf32>
    %87 = vector.shape_cast %86 : vector<1x16x16x4xf32> to vector<16x16x4xf32>
    %cst_54 = arith.constant 0.000000e+00 : f32
    %88 = vector.broadcast %cst_54 : f32 to vector<16x16x4xf32>
    %89 = arith.cmpf oge, %87, %88 : vector<16x16x4xf32>
    %cst_55 = arith.constant 2.000000e-01 : f32
    %90 = vector.broadcast %cst_55 : f32 to vector<16x16x4xf32>
    %91 = arith.mulf %90, %87 : vector<16x16x4xf32>
    %92 = arith.select %89, %87, %91 : vector<16x16x4xi1>, vector<16x16x4xf32>
    %93 = vector.shape_cast %92 : vector<16x16x4xf32> to vector<256x4xf32>
    %94 = vector.extract_strided_slice %0 {offsets = [2, 1, 0, 0], sizes = [1, 1, 4, 4], strides = [1, 1, 1, 1]} : vector<3x3x4x4xf32> to vector<1x1x4x4xf32>
    %95 = vector.shape_cast %94 : vector<1x1x4x4xf32> to vector<4x4xf32>
    %cst_56 = arith.constant dense<0.000000e+00> : vector<256x4xf32>
    %96 = tpu.matmul %93, %95, %cst_56 {dimension_numbers = #tpu.dot_dimension_numbers<[1], [0], [0], [1], [0, 0, 1, 1], [], []>} : vector<256x4xf32>, vector<4x4xf32>, vector<256x4xf32> -> vector<256x4xf32>
    %97 = arith.addf %85, %96 : vector<256x4xf32>
    %c0_57 = arith.constant 0 : index
    %c2_58 = arith.constant 2 : index
    %c2_59 = arith.constant 2 : index
    %c0_60 = arith.constant 0 : index
    %98 = vector.load %arg1[%c0_57, %c2_58, %c2_59, %c0_60] : memref<1x18x18x4xf32, #tpu.memory_space<vmem>>, vector<1x16x16x4xf32>
    %99 = vector.shape_cast %98 : vector<1x16x16x4xf32> to vector<16x16x4xf32>
    %cst_61 = arith.constant 0.000000e+00 : f32
    %100 = vector.broadcast %cst_61 : f32 to vector<16x16x4xf32>
    %101 = arith.cmpf oge, %99, %100 : vector<16x16x4xf32>
    %cst_62 = arith.constant 2.000000e-01 : f32
    %102 = vector.broadcast %cst_62 : f32 to vector<16x16x4xf32>
    %103 = arith.mulf %102, %99 : vector<16x16x4xf32>
    %104 = arith.select %101, %99, %103 : vector<16x16x4xi1>, vector<16x16x4xf32>
    %105 = vector.shape_cast %104 : vector<16x16x4xf32> to vector<256x4xf32>
    %106 = vector.extract_strided_slice %0 {offsets = [2, 2, 0, 0], sizes = [1, 1, 4, 4], strides = [1, 1, 1, 1]} : vector<3x3x4x4xf32> to vector<1x1x4x4xf32>
    %107 = vector.shape_cast %106 : vector<1x1x4x4xf32> to vector<4x4xf32>
    %cst_63 = arith.constant dense<0.000000e+00> : vector<256x4xf32>
    %108 = tpu.matmul %105, %107, %cst_63 {dimension_numbers = #tpu.dot_dimension_numbers<[1], [0], [0], [1], [0, 0, 1, 1], [], []>} : vector<256x4xf32>, vector<4x4xf32>, vector<256x4xf32> -> vector<256x4xf32>
    %109 = arith.addf %97, %108 : vector<256x4xf32>
    %c0_64 = arith.constant 0 : index
    %c0_65 = arith.constant 0 : index
    %110 = vector.load %arg3[%c0_64, %c0_65] : memref<1x4xf32, #tpu.memory_space<vmem>>, vector<1x4xf32>
    %111 = vector.broadcast %110 : vector<1x4xf32> to vector<256x4xf32>
    %112 = arith.addf %109, %111 : vector<256x4xf32>
    %113 = vector.shape_cast %112 : vector<256x4xf32> to vector<16x16x4xf32>
    %c0_66 = arith.constant 0 : index
    %c0_67 = arith.constant 0 : index
    %c0_68 = arith.constant 0 : index
    %c0_69 = arith.constant 0 : index
    %114 = vector.load %arg4[%c0_66, %c0_67, %c0_68, %c0_69] : memref<1x16x16x4xf32, #tpu.memory_space<vmem>>, vector<1x16x16x4xf32>
    %115 = vector.shape_cast %114 : vector<1x16x16x4xf32> to vector<16x16x4xf32>
    %116 = vector.shape_cast %113 : vector<16x16x4xf32> to vector<1x16x16x4xf32>
    tpu.vector_store %arg4[%c0_66, %c0_67, %c0_68, %c0_69], %116 {strides = array<i32>} : memref<1x16x16x4xf32, #tpu.memory_space<vmem>>, vector<1x16x16x4xf32>,
    return
  }
  func.func @transform_0(%arg0: i32) -> (i32, i32, i32, i32) {
    %c0_i32 = arith.constant 0 : i32
    %c0_i32_0 = arith.constant 0 : i32
    %c0_i32_1 = arith.constant 0 : i32
    %c0_i32_2 = arith.constant 0 : i32
    return %arg0, %c0_i32, %c0_i32_0, %c0_i32_1 : i32, i32, i32, i32
  }
  func.func @transform_1(%arg0: i32) -> (i32, i32, i32, i32) {
    %c0_i32 = arith.constant 0 : i32
    %c0_i32_0 = arith.constant 0 : i32
    %c0_i32_1 = arith.constant 0 : i32
    %c0_i32_2 = arith.constant 0 : i32
    %c0_i32_3 = arith.constant 0 : i32
    return %c0_i32, %c0_i32_0, %c0_i32_1, %c0_i32_2 : i32, i32, i32, i32
  }
  func.func @transform_2(%arg0: i32) -> (i32, i32) {
    %c0_i32 = arith.constant 0 : i32
    %c0_i32_0 = arith.constant 0 : i32
    %c0_i32_1 = arith.constant 0 : i32
    return %c0_i32, %c0_i32_0 : i32, i32
  }
  func.func @transform_3(%arg0: i32) -> (i32, i32, i32, i32) {
    %c0_i32 = arith.constant 0 : i32
    %c0_i32_0 = arith.constant 0 : i32
    %c0_i32_1 = arith.constant 0 : i32
    %c0_i32_2 = arith.constant 0 : i32
    return %arg0, %c0_i32, %c0_i32_0, %c0_i32_1 : i32, i32, i32, i32
  }
}

</mosaic_0001>

<llo_original>
// kernel: tpu_custom_call.1
$region0: #{tpu_custom_call.1}
  #allocation0 [shape = 'u32[]', space=smem, size = 0x4, offset = 0x4, fixed_abs, tag = 'smem constant byte address 0x4 - core index']
  #allocation1 [shape = 'u32[144,128]{1,0:T(1,128)}', space=vmem, size = 0x12000, scoped, tag = 'internal scratch']
  %s0 = inlined_call_operand.vmem [shape: f32[2,18,18,4], index: 0, kind: input, shape index: {}]
  %s1 = inlined_call_operand.vmem [shape: f32[3,3,4,4], index: 1, kind: input, shape index: {}]
  %s2 = inlined_call_operand.vmem [shape: f32[1,4], index: 2, kind: input, shape index: {}]
  %s3 = inlined_call_operand.vmem [shape: f32[2,16,16,4], index: 3, kind: output, shape index: {}]
  %s4 = sld [smem:[#allocation0]]
  $region45: #{tpu_custom_call.1} parent=0
    _
  %s6 = ssub.s32 1, %s4
  %s7 = scalar_select 0, %s6, %s4
  loop: start=0, step=1, limit=4
  $region2: #{tpu_custom_call.1} parent=0 // loop_pre_header
    _
  $region3: #{tpu_custom_call.1} parent=0 // loop_header
    %s9 = sphi 0, %s13
    %p10 = scmp.ge.s32.totalorder %s9, 4
    %s19 = sphi 0, %s21
    %s22 = sphi 0, %s19
    %s23 = sphi 0, %s22
    %s39 = sphi 0, %s23
    %s43 = sphi 0, %s43
    %s45 = sphi 0, %s43
    %s46 = sphi 0, %s45
    %s60 = sphi 0, %s46
    %s64 = sphi 0, %s64
    %s66 = sphi 0, %s64
    %s67 = sphi 0, %s66
    %s81 = sphi 0, %s67
    %s87 = sphi 0, %s89
    %s90 = sphi 0, %s87
    %s91 = sphi 0, %s90
    %s107 = sphi 0, %s91
  $region4: #{tpu_custom_call.1} parent=0 // loop_header_branch
    %12 = sbr.rel (%p10) target = $region8
  $region5: #{tpu_custom_call.1} parent=0 // loop_body
    %s14 = ssub.s32 %s9, 1
    %s15 = ssub.s32 %s9, 2
    %s16 = sadd.s32 %s9, 1
    %s17 = ssub.s32 %s9, %s16
    %p18 = scmp.eq.s32.totalorder %s17, 0
    %s20 = sadd.s32 %s19, 1
    %s21 = scalar_select %p18, %s19, %s20
    %p24 = pneg %p18
    %p25 = scmp.eq.s32.totalorder %s9, 1
    %p26 = por %p24, %p25
    %p27 = scmp.ne.s32.totalorder %s19, %s22
    %p28 = scmp.eq.s32.totalorder %s9, 0
    %p29 = por %p27, %p28
    %p30 = scmp.ne.s32.totalorder %s19, %s22
    %p31 = scmp.eq.s32.totalorder %s14, 1
    %p32 = por %p30, %p31
    %p33 = scmp.ne.s32.totalorder %s22, %s23
    %p34 = scmp.eq.s32.totalorder %s14, 0
    %p35 = por %p33, %p34
    %p36 = scmp.ne.s32.totalorder %s22, %s23
    %p37 = scmp.eq.s32.totalorder %s15, 1
    %p38 = por %p36, %p37
    %p40 = scmp.ne.s32.totalorder %s23, %s39
    %p41 = scmp.eq.s32.totalorder %s15, 0
    %p42 = por %p40, %p41
    %s44 = sadd.s32 %s43, 1
    %p47 = scmp.eq.s32.totalorder %s9, 1
    %p48 = scmp.ne.s32.totalorder %s43, %s45
    %p49 = scmp.eq.s32.totalorder %s9, 0
    %p50 = por %p48, %p49
    %p51 = scmp.ne.s32.totalorder %s43, %s45
    %p52 = scmp.eq.s32.totalorder %s14, 1
    %p53 = por %p51, %p52
    %p54 = scmp.ne.s32.totalorder %s45, %s46
    %p55 = scmp.eq.s32.totalorder %s14, 0
    %p56 = por %p54, %p55
    %p57 = scmp.ne.s32.totalorder %s45, %s46
    %p58 = scmp.eq.s32.totalorder %s15, 1
    %p59 = por %p57, %p58
    %p61 = scmp.ne.s32.totalorder %s46, %s60
    %p62 = scmp.eq.s32.totalorder %s15, 0
    %p63 = por %p61, %p62
    %s65 = sadd.s32 %s64, 1
    %p68 = scmp.eq.s32.totalorder %s9, 1
    %p69 = scmp.ne.s32.totalorder %s64, %s66
    %p70 = scmp.eq.s32.totalorder %s9, 0
    %p71 = por %p69, %p70
    %p72 = scmp.ne.s32.totalorder %s64, %s66
    %p73 = scmp.eq.s32.totalorder %s14, 1
    %p74 = por %p72, %p73
    %p75 = scmp.ne.s32.totalorder %s66, %s67
    %p76 = scmp.eq.s32.totalorder %s14, 0
    %p77 = por %p75, %p76
    %p78 = scmp.ne.s32.totalorder %s66, %s67
    %p79 = scmp.eq.s32.totalorder %s15, 1
    %p80 = por %p78, %p79
    %p82 = scmp.ne.s32.totalorder %s67, %s81
    %p83 = scmp.eq.s32.totalorder %s15, 0
    %p84 = por %p82, %p83
    %s85 = ssub.s32 %s9, %s16
    %p86 = scmp.eq.s32.totalorder %s85, 0
    %s88 = sadd.s32 %s87, 1
    %s89 = scalar_select %p86, %s87, %s88
    %p92 = pneg %p86
    %p93 = scmp.eq.s32.totalorder %s9, 1
    %p94 = por %p92, %p93
    %p95 = scmp.ne.s32.totalorder %s87, %s90
    %p96 = scmp.eq.s32.totalorder %s9, 0
    %p97 = por %p95, %p96
    %p98 = scmp.ne.s32.totalorder %s87, %s90
    %p99 = scmp.eq.s32.totalorder %s14, 1
    %p100 = por %p98, %p99
    %p101 = scmp.ne.s32.totalorder %s90, %s91
    %p102 = scmp.eq.s32.totalorder %s14, 0
    %p103 = por %p101, %p102
    %p104 = scmp.ne.s32.totalorder %s90, %s91
    %p105 = scmp.eq.s32.totalorder %s15, 1
    %p106 = por %p104, %p105
    %p108 = scmp.ne.s32.totalorder %s91, %s107
    %p109 = scmp.eq.s32.totalorder %s15, 0
    %p110 = por %p108, %p109
    %p111 = scmp.le.s32.totalorder 1, %s9
    %p112 = scmp.lt.s32.totalorder %s9, 3
    %p113 = pnand %p111, %p112
    %p114 = pneg %p113
    // Predicated region
    $region9: #{tpu_custom_call.1} parent=5 // pred_check
      _
    $region10: #{tpu_custom_call.1} parent=5 // pred_check_branch
      %116 = sbr.rel (%p113) target = $region12
    $region11: #{tpu_custom_call.1} parent=5 // pred_region
      %s117 = ssub.s32 %s9, 1
      // Predicated region
      $region13: #{tpu_custom_call.1} parent=11 // pred_check
        %p118 = pneg %p56
      $region14: #{tpu_custom_call.1} parent=11 // pred_check_branch
        %120 = sbr.rel (%p118) target = $region16
      $region15: #{tpu_custom_call.1} parent=11 // pred_region
        _
      $region16: #{tpu_custom_call.1} parent=11 // pred_fallthru
        _
      // Predicated region
      $region17: #{tpu_custom_call.1} parent=11 // pred_check
        %p121 = pneg %p77
      $region18: #{tpu_custom_call.1} parent=11 // pred_check_branch
        %123 = sbr.rel (%p121) target = $region20
      $region19: #{tpu_custom_call.1} parent=11 // pred_region
        _
      $region20: #{tpu_custom_call.1} parent=11 // pred_fallthru
        _
    $region12: #{tpu_custom_call.1} parent=5 // pred_fallthru
      _
    %p124 = scmp.lt.s32.totalorder %s9, 2
    // Predicated region
    $region21: #{tpu_custom_call.1} parent=5 // pred_check
      %p125 = pneg %p124
    $region22: #{tpu_custom_call.1} parent=5 // pred_check_branch
      %127 = sbr.rel (%p125) target = $region24
    $region23: #{tpu_custom_call.1} parent=5 // pred_region
      // Predicated region
      $region25: #{tpu_custom_call.1} parent=23 // pred_check
        %p128 = pneg %p29
      $region26: #{tpu_custom_call.1} parent=23 // pred_check_branch
        %130 = sbr.rel (%p128) target = $region28
      $region27: #{tpu_custom_call.1} parent=23 // pred_region
        %p131 = scmp.lt.s32.totalorder %s9, 1
        %s132 = scalar_select %p131, %s9, 1
        %s133 = smul.addr %s132, 54
        %s134 = smul.addr %s133, 8
        %s135 = scalar_lea.vmem %s0, %s134
      $region28: #{tpu_custom_call.1} parent=23 // pred_fallthru
        _
    $region24: #{tpu_custom_call.1} parent=5 // pred_fallthru
      _
    %p136 = scmp.le.s32.totalorder 1, %s9
    %p137 = scmp.lt.s32.totalorder %s9, 3
    %p138 = pnand %p136, %p137
    %p139 = pneg %p138
    // Predicated region
    $region29: #{tpu_custom_call.1} parent=5 // pred_check
      _
    $region30: #{tpu_custom_call.1} parent=5 // pred_check_branch
      %141 = sbr.rel (%p138) target = $region32
    $region31: #{tpu_custom_call.1} parent=5 // pred_region
      %s142 = ssub.s32 %s9, 1
      %p143 = scmp.lt.s32.totalorder %s14, 1
      %s144 = scalar_select %p143, %s14, 1
      %s145 = smul.addr %s144, 54
      %s146 = smul.addr %s145, 8
      %s147 = scalar_lea.vmem %s0, %s146
      %p148 = pneg %p35
      %p149 = pneg %p32
      %p150 = pneg %p56
      %p151 = pneg %p53
      %p152 = pneg %p77
      %p153 = pneg %p74
      %p154 = pneg %p103
      %p155 = pneg %p100
      %p156 = scmp.lt.s32.totalorder %s14, 1
      %s157 = scalar_select %p156, %s14, 1
      %s158 = smul.addr %s157, 32
      %s159 = smul.addr %s158, 8
      %s160 = scalar_lea.vmem %s3, %s159
      %p161 = scmp.lt.s32.totalorder %s14, 1
      %s162 = scalar_select %p161, %s14, 1
      %s163 = smul.addr %s162, 54
      %s164 = smul.addr %s163, 8
      %s165 = scalar_lea.vmem %s0, %s164
      %p166 = scmp.lt.s32.totalorder %s14, 1
      %s167 = scalar_select %p166, %s14, 1
      %s168 = smul.addr %s167, 32
      %s169 = smul.addr %s168, 8
      %s170 = scalar_lea.vmem %s3, %s169
      %v171 = vld [vmem:[%s1] sm:$0xf]
      %v172 = vld [vmem:[%s1 + $0x4] sm:$0xf]
      %v173 = vld [vmem:[%s1 + $0x8] sm:$0xf]
      %v174 = vld [vmem:[%s1 + $0xc] sm:$0xf]
      %v175 = vld [vmem:[%s1 + $0x10] sm:$0xf]
      %v176 = vld [vmem:[%s1 + $0x14] sm:$0xf]
      %v177 = vld [vmem:[%s1 + $0x18] sm:$0xf]
      %v178 = vld [vmem:[%s1 + $0x1c] sm:$0xf]
      %v179 = vld [vmem:[%s1 + $0x20] sm:$0xf]
      %v180 = vld [vmem:[%s165] sm:$0xff]
      %v181 = vld [vmem:[%s165 + $0x8] sm:$0xff]
      %v182 = vld [vmem:[%s165 + $0x18] sm:$0xff]
      %v183 = vld [vmem:[%s165 + $0x20] sm:$0xff]
      %v184 = vld [vmem:[%s165 + $0x30] sm:$0xff]
      %v185 = vld [vmem:[%s165 + $0x38] sm:$0xff]
      %v186 = vld [vmem:[%s165 + $0x48] sm:$0xff]
      %v187 = vld [vmem:[%s165 + $0x50] sm:$0xff]
      %v188 = vld [vmem:[%s165 + $0x60] sm:$0xff]
      %v189 = vld [vmem:[%s165 + $0x68] sm:$0xff]
      %v190 = vld [vmem:[%s165 + $0x78] sm:$0xff]
      %v191 = vld [vmem:[%s165 + $0x80] sm:$0xff]
      %v192 = vld [vmem:[%s165 + $0x90] sm:$0xff]
      %v193 = vld [vmem:[%s165 + $0x98] sm:$0xff]
      %v194 = vld [vmem:[%s165 + $0xa8] sm:$0xff]
      %v195 = vld [vmem:[%s165 + $0xb0] sm:$0xff]
      %v196 = vld [vmem:[%s165 + $0xc0] sm:$0xff]
      %v197 = vld [vmem:[%s165 + $0xc8] sm:$0xff]
      %v198 = vld [vmem:[%s165 + $0xd8] sm:$0xff]
      %v199 = vld [vmem:[%s165 + $0xe0] sm:$0xff]
      %v200 = vld [vmem:[%s165 + $0xf0] sm:$0xff]
      %v201 = vld [vmem:[%s165 + $0xf8] sm:$0xff]
      %v202 = vld [vmem:[%s165 + $0x108] sm:$0xff]
      %v203 = vld [vmem:[%s165 + $0x110] sm:$0xff]
      %v204 = vld [vmem:[%s165 + $0x120] sm:$0xff]
      %v205 = vld [vmem:[%s165 + $0x128] sm:$0xff]
      %v206 = vld [vmem:[%s165 + $0x138] sm:$0xff]
      %v207 = vld [vmem:[%s165 + $0x140] sm:$0xff]
      %v208 = vld [vmem:[%s165 + $0x150] sm:$0xff]
      %v209 = vld [vmem:[%s165 + $0x158] sm:$0xff]
      %v210 = vld [vmem:[%s165 + $0x168] sm:$0xff]
      %v211 = vld [vmem:[%s165 + $0x170] sm:$0xff]
      %vm212 = vcmp.ge.f32.partialorder %v180, 0.0
      %vm213 = vcmp.ge.f32.partialorder %v181, 0.0
      %vm214 = vcmp.ge.f32.partialorder %v182, 0.0
      %vm215 = vcmp.ge.f32.partialorder %v183, 0.0
      %vm216 = vcmp.ge.f32.partialorder %v184, 0.0
      %vm217 = vcmp.ge.f32.partialorder %v185, 0.0
      %vm218 = vcmp.ge.f32.partialorder %v186, 0.0
      %vm219 = vcmp.ge.f32.partialorder %v187, 0.0
      %vm220 = vcmp.ge.f32.partialorder %v188, 0.0
      %vm221 = vcmp.ge.f32.partialorder %v189, 0.0
      %vm222 = vcmp.ge.f32.partialorder %v190, 0.0
      %vm223 = vcmp.ge.f32.partialorder %v191, 0.0
      %vm224 = vcmp.ge.f32.partialorder %v192, 0.0
      %vm225 = vcmp.ge.f32.partialorder %v193, 0.0
      %vm226 = vcmp.ge.f32.partialorder %v194, 0.0
      %vm227 = vcmp.ge.f32.partialorder %v195, 0.0
      %vm228 = vcmp.ge.f32.partialorder %v196, 0.0
      %vm229 = vcmp.ge.f32.partialorder %v197, 0.0
      %vm230 = vcmp.ge.f32.partialorder %v198, 0.0
      %vm231 = vcmp.ge.f32.partialorder %v199, 0.0
      %vm232 = vcmp.ge.f32.partialorder %v200, 0.0
      %vm233 = vcmp.ge.f32.partialorder %v201, 0.0
      %vm234 = vcmp.ge.f32.partialorder %v202, 0.0
      %vm235 = vcmp.ge.f32.partialorder %v203, 0.0
      %vm236 = vcmp.ge.f32.partialorder %v204, 0.0
      %vm237 = vcmp.ge.f32.partialorder %v205, 0.0
      %vm238 = vcmp.ge.f32.partialorder %v206, 0.0
      %vm239 = vcmp.ge.f32.partialorder %v207, 0.0
      %vm240 = vcmp.ge.f32.partialorder %v208, 0.0
      %vm241 = vcmp.ge.f32.partialorder %v209, 0.0
      %vm242 = vcmp.ge.f32.partialorder %v210, 0.0
      %vm243 = vcmp.ge.f32.partialorder %v211, 0.0
      %v244 = vmul.f32 %v180, 0.2
      %v245 = vmul.f32 %v181, 0.2
      %v246 = vmul.f32 %v182, 0.2
      %v247 = vmul.f32 %v183, 0.2
      %v248 = vmul.f32 %v184, 0.2
      %v249 = vmul.f32 %v185, 0.2
      %v250 = vmul.f32 %v186, 0.2
      %v251 = vmul.f32 %v187, 0.2
      %v252 = vmul.f32 %v188, 0.2
      %v253 = vmul.f32 %v189, 0.2
      %v254 = vmul.f32 %v190, 0.2
      %v255 = vmul.f32 %v191, 0.2
      %v256 = vmul.f32 %v192, 0.2
      %v257 = vmul.f32 %v193, 0.2
      %v258 = vmul.f32 %v194, 0.2
      %v259 = vmul.f32 %v195, 0.2
      %v260 = vmul.f32 %v196, 0.2
      %v261 = vmul.f32 %v197, 0.2
      %v262 = vmul.f32 %v198, 0.2
      %v263 = vmul.f32 %v199, 0.2
      %v264 = vmul.f32 %v200, 0.2
      %v265 = vmul.f32 %v201, 0.2
      %v266 = vmul.f32 %v202, 0.2
      %v267 = vmul.f32 %v203, 0.2
      %v268 = vmul.f32 %v204, 0.2
      %v269 = vmul.f32 %v205, 0.2
      %v270 = vmul.f32 %v206, 0.2
      %v271 = vmul.f32 %v207, 0.2
      %v272 = vmul.f32 %v208, 0.2
      %v273 = vmul.f32 %v209, 0.2
      %v274 = vmul.f32 %v210, 0.2
      %v275 = vmul.f32 %v211, 0.2
      %v276 = vsel %vm212, %v180, %v244
      %v277 = vsel %vm213, %v181, %v245
      %v278 = vsel %vm214, %v182, %v246
      %v279 = vsel %vm215, %v183, %v247
      %v280 = vsel %vm216, %v184, %v248
      %v281 = vsel %vm217, %v185, %v249
      %v282 = vsel %vm218, %v186, %v250
      %v283 = vsel %vm219, %v187, %v251
      %v284 = vsel %vm220, %v188, %v252
      %v285 = vsel %vm221, %v189, %v253
      %v286 = vsel %vm222, %v190, %v254
      %v287 = vsel %vm223, %v191, %v255
      %v288 = vsel %vm224, %v192, %v256
      %v289 = vsel %vm225, %v193, %v257
      %v290 = vsel %vm226, %v194, %v258
      %v291 = vsel %vm227, %v195, %v259
      %v292 = vsel %vm228, %v196, %v260
      %v293 = vsel %vm229, %v197, %v261
      %v294 = vsel %vm230, %v198, %v262
      %v295 = vsel %vm231, %v199, %v263
      %v296 = vsel %vm232, %v200, %v264
      %v297 = vsel %vm233, %v201, %v265
      %v298 = vsel %vm234, %v202, %v266
      %v299 = vsel %vm235, %v203, %v267
      %v300 = vsel %vm236, %v204, %v268
      %v301 = vsel %vm237, %v205, %v269
      %v302 = vsel %vm238, %v206, %v270
      %v303 = vsel %vm239, %v207, %v271
      %v304 = vsel %vm240, %v208, %v272
      %v305 = vsel %vm241, %v209, %v273
      %v306 = vsel %vm242, %v210, %v274
      %v307 = vsel %vm243, %v211, %v275
      %v308 = vld [vmem:[%s165 + $0x1] sm:$0xff]
      %v309 = vld [vmem:[%s165 + $0x9] sm:$0xff]
      %v310 = vld [vmem:[%s165 + $0x19] sm:$0xff]
      %v311 = vld [vmem:[%s165 + $0x21] sm:$0xff]
      %v312 = vld [vmem:[%s165 + $0x31] sm:$0xff]
      %v313 = vld [vmem:[%s165 + $0x39] sm:$0xff]
      %v314 = vld [vmem:[%s165 + $0x49] sm:$0xff]
      %v315 = vld [vmem:[%s165 + $0x51] sm:$0xff]
      %v316 = vld [vmem:[%s165 + $0x61] sm:$0xff]
      %v317 = vld [vmem:[%s165 + $0x69] sm:$0xff]
      %v318 = vld [vmem:[%s165 + $0x79] sm:$0xff]
      %v319 = vld [vmem:[%s165 + $0x81] sm:$0xff]
      %v320 = vld [vmem:[%s165 + $0x91] sm:$0xff]
      %v321 = vld [vmem:[%s165 + $0x99] sm:$0xff]
      %v322 = vld [vmem:[%s165 + $0xa9] sm:$0xff]
      %v323 = vld [vmem:[%s165 + $0xb1] sm:$0xff]
      %v324 = vld [vmem:[%s165 + $0xc1] sm:$0xff]
      %v325 = vld [vmem:[%s165 + $0xc9] sm:$0xff]
      %v326 = vld [vmem:[%s165 + $0xd9] sm:$0xff]
      %v327 = vld [vmem:[%s165 + $0xe1] sm:$0xff]
      %v328 = vld [vmem:[%s165 + $0xf1] sm:$0xff]
      %v329 = vld [vmem:[%s165 + $0xf9] sm:$0xff]
      %v330 = vld [vmem:[%s165 + $0x109] sm:$0xff]
      %v331 = vld [vmem:[%s165 + $0x111] sm:$0xff]
      %v332 = vld [vmem:[%s165 + $0x121] sm:$0xff]
      %v333 = vld [vmem:[%s165 + $0x129] sm:$0xff]
      %v334 = vld [vmem:[%s165 + $0x139] sm:$0xff]
      %v335 = vld [vmem:[%s165 + $0x141] sm:$0xff]
      %v336 = vld [vmem:[%s165 + $0x151] sm:$0xff]
      %v337 = vld [vmem:[%s165 + $0x159] sm:$0xff]
      %v338 = vld [vmem:[%s165 + $0x169] sm:$0xff]
      %v339 = vld [vmem:[%s165 + $0x171] sm:$0xff]
      %vm340 = vcmp.ge.f32.partialorder %v308, 0.0
      %vm341 = vcmp.ge.f32.partialorder %v309, 0.0
      %vm342 = vcmp.ge.f32.partialorder %v310, 0.0
      %vm343 = vcmp.ge.f32.partialorder %v311, 0.0
      %vm344 = vcmp.ge.f32.partialorder %v312, 0.0
      %vm345 = vcmp.ge.f32.partialorder %v313, 0.0
      %vm346 = vcmp.ge.f32.partialorder %v314, 0.0
      %vm347 = vcmp.ge.f32.partialorder %v315, 0.0
      %vm348 = vcmp.ge.f32.partialorder %v316, 0.0
      %vm349 = vcmp.ge.f32.partialorder %v317, 0.0
      %vm350 = vcmp.ge.f32.partialorder %v318, 0.0
      %vm351 = vcmp.ge.f32.partialorder %v319, 0.0
      %vm352 = vcmp.ge.f32.partialorder %v320, 0.0
      %vm353 = vcmp.ge.f32.partialorder %v321, 0.0
      %vm354 = vcmp.ge.f32.partialorder %v322, 0.0
      %vm355 = vcmp.ge.f32.partialorder %v323, 0.0
      %vm356 = vcmp.ge.f32.partialorder %v324, 0.0
      %vm357 = vcmp.ge.f32.partialorder %v325, 0.0
      %vm358 = vcmp.ge.f32.partialorder %v326, 0.0
      %vm359 = vcmp.ge.f32.partialorder %v327, 0.0
      %vm360 = vcmp.ge.f32.partialorder %v328, 0.0
      %vm361 = vcmp.ge.f32.partialorder %v329, 0.0
      %vm362 = vcmp.ge.f32.partialorder %v330, 0.0
      %vm363 = vcmp.ge.f32.partialorder %v331, 0.0
      %vm364 = vcmp.ge.f32.partialorder %v332, 0.0
      %vm365 = vcmp.ge.f32.partialorder %v333, 0.0
      %vm366 = vcmp.ge.f32.partialorder %v334, 0.0
      %vm367 = vcmp.ge.f32.partialorder %v335, 0.0
      %vm368 = vcmp.ge.f32.partialorder %v336, 0.0
      %vm369 = vcmp.ge.f32.partialorder %v337, 0.0
      %vm370 = vcmp.ge.f32.partialorder %v338, 0.0
      %vm371 = vcmp.ge.f32.partialorder %v339, 0.0
      %v372 = vmul.f32 %v308, 0.2
      %v373 = vmul.f32 %v309, 0.2
      %v374 = vmul.f32 %v310, 0.2
      %v375 = vmul.f32 %v311, 0.2
      %v376 = vmul.f32 %v312, 0.2
      %v377 = vmul.f32 %v313, 0.2
      %v378 = vmul.f32 %v314, 0.2
      %v379 = vmul.f32 %v315, 0.2
      %v380 = vmul.f32 %v316, 0.2
      %v381 = vmul.f32 %v317, 0.2
      %v382 = vmul.f32 %v318, 0.2
      %v383 = vmul.f32 %v319, 0.2
      %v384 = vmul.f32 %v320, 0.2
      %v385 = vmul.f32 %v321, 0.2
      %v386 = vmul.f32 %v322, 0.2
      %v387 = vmul.f32 %v323, 0.2
      %v388 = vmul.f32 %v324, 0.2
      %v389 = vmul.f32 %v325, 0.2
      %v390 = vmul.f32 %v326, 0.2
      %v391 = vmul.f32 %v327, 0.2
      %v392 = vmul.f32 %v328, 0.2
      %v393 = vmul.f32 %v329, 0.2
      %v394 = vmul.f32 %v330, 0.2
      %v395 = vmul.f32 %v331, 0.2
      %v396 = vmul.f32 %v332, 0.2
      %v397 = vmul.f32 %v333, 0.2
      %v398 = vmul.f32 %v334, 0.2
      %v399 = vmul.f32 %v335, 0.2
      %v400 = vmul.f32 %v336, 0.2
      %v401 = vmul.f32 %v337, 0.2
      %v402 = vmul.f32 %v338, 0.2
      %v403 = vmul.f32 %v339, 0.2
      %v404 = vsel %vm340, %v308, %v372
      %v405 = vsel %vm341, %v309, %v373
      %v406 = vsel %vm342, %v310, %v374
      %v407 = vsel %vm343, %v311, %v375
      %v408 = vsel %vm344, %v312, %v376
      %v409 = vsel %vm345, %v313, %v377
      %v410 = vsel %vm346, %v314, %v378
      %v411 = vsel %vm347, %v315, %v379
      %v412 = vsel %vm348, %v316, %v380
      %v413 = vsel %vm349, %v317, %v381
      %v414 = vsel %vm350, %v318, %v382
      %v415 = vsel %vm351, %v319, %v383
      %v416 = vsel %vm352, %v320, %v384
      %v417 = vsel %vm353, %v321, %v385
      %v418 = vsel %vm354, %v322, %v386
      %v419 = vsel %vm355, %v323, %v387
      %v420 = vsel %vm356, %v324, %v388
      %v421 = vsel %vm357, %v325, %v389
      %v422 = vsel %vm358, %v326, %v390
      %v423 = vsel %vm359, %v327, %v391
      %v424 = vsel %vm360, %v328, %v392
      %v425 = vsel %vm361, %v329, %v393
      %v426 = vsel %vm362, %v330, %v394
      %v427 = vsel %vm363, %v331, %v395
      %v428 = vsel %vm364, %v332, %v396
      %v429 = vsel %vm365, %v333, %v397
      %v430 = vsel %vm366, %v334, %v398
      %v431 = vsel %vm367, %v335, %v399
      %v432 = vsel %vm368, %v336, %v400
      %v433 = vsel %vm369, %v337, %v401
      %v434 = vsel %vm370, %v338, %v402
      %v435 = vsel %vm371, %v339, %v403
      %vm436 = vcmask 31744
      %v438 = vsel %vm436, %v404, 0
      %v441 = vsel %vm436, %v405, 0
      %v444 = vsel %vm436, %v406, 0
      %v447 = vsel %vm436, %v407, 0
      %v450 = vsel %vm436, %v408, 0
      %v453 = vsel %vm436, %v409, 0
      %v456 = vsel %vm436, %v410, 0
      %v459 = vsel %vm436, %v411, 0
      %v462 = vsel %vm436, %v412, 0
      %v465 = vsel %vm436, %v413, 0
      %v468 = vsel %vm436, %v414, 0
      %v471 = vsel %vm436, %v415, 0
      %v474 = vsel %vm436, %v416, 0
      %v477 = vsel %vm436, %v417, 0
      %v480 = vsel %vm436, %v418, 0
      %v483 = vsel %vm436, %v419, 0
      %v486 = vsel %vm436, %v420, 0
      %v489 = vsel %vm436, %v421, 0
      %v492 = vsel %vm436, %v422, 0
      %v495 = vsel %vm436, %v423, 0
      %v498 = vsel %vm436, %v424, 0
      %v501 = vsel %vm436, %v425, 0
      %v504 = vsel %vm436, %v426, 0
      %v507 = vsel %vm436, %v427, 0
      %v510 = vsel %vm436, %v428, 0
      %v513 = vsel %vm436, %v429, 0
      %v516 = vsel %vm436, %v430, 0
      %v519 = vsel %vm436, %v431, 0
      %v522 = vsel %vm436, %v432, 0
      %v525 = vsel %vm436, %v433, 0
      %v528 = vsel %vm436, %v434, 0
      %v531 = vsel %vm436, %v435, 0
      %vm533 = vcmask 1043456
      %v535 = vsel %vm533, %v172, 0
      %537 = vmatprep.subr.mxu0 0.0
      %538 = vmatpush1.msra.mxu0 0.0
      %539 = vmatprep.subr.mxu0 0.0
      %540 = vmatpush1.msra.mxu0 0.0
      %541 = vmatprep.subr.mxu0 0.0
      %542 = vmatpush1.msra.mxu0 0.0
      %543 = vmatprep.subr.mxu0 0.0
      %544 = vmatpush1.msra.mxu0 0.0
      %545 = vmatprep.subr.mxu0 0.0
      %546 = vmatpush1.msra.mxu0 0.0
      %547 = vmatprep.subr.mxu0 0.0
      %548 = vmatpush1.msra.mxu0 0.0
      %549 = vmatprep.subr.mxu0 0.0
      %550 = vmatpush1.msra.mxu0 0.0
      %551 = vmatprep.subr.mxu0 0.0
      %552 = vmatpush1.msra.mxu0 0.0
      %553 = vmatprep.subr.mxu0 0.0
      %554 = vmatpush1.msra.mxu0 0.0
      %555 = vmatprep.subr.mxu0 0.0
      %556 = vmatpush1.msra.mxu0 0.0
      %557 = vmatprep.subr.mxu0 0.0
      %558 = vmatpush1.msra.mxu0 0.0
      %559 = vmatprep.subr.mxu0 0.0
      %560 = vmatpush1.msra.mxu0 0.0
      %561 = vmatprep.subr.mxu0 0.0
      %562 = vmatpush1.msra.mxu0 0.0
      %563 = vmatprep.subr.mxu0 0.0
      %564 = vmatpush1.msra.mxu0 0.0
      %565 = vmatprep.subr.mxu0 0.0
      %566 = vmatpush1.msra.mxu0 0.0
      %567 = vmatprep.subr.mxu0 0.0
      %568 = vmatpush1.msra.mxu0 %v535
      %569 = vmatprep.subr.mxu0 0.0
      %570 = vmatpush2.msra.mxu0 0.0
      %571 = vmatprep.subr.mxu0 0.0
      %572 = vmatpush2.msra.mxu0 0.0
      %573 = vmatprep.subr.mxu0 0.0
      %574 = vmatpush2.msra.mxu0 0.0
      %575 = vmatprep.subr.mxu0 0.0
      %576 = vmatpush2.msra.mxu0 0.0
      %577 = vmatprep.subr.mxu0 0.0
      %578 = vmatpush2.msra.mxu0 0.0
      %579 = vmatprep.subr.mxu0 0.0
      %580 = vmatpush2.msra.mxu0 0.0
      %581 = vmatprep.subr.mxu0 0.0
      %582 = vmatpush2.msra.mxu0 0.0
      %583 = vmatprep.subr.mxu0 0.0
      %584 = vmatpush2.msra.mxu0 0.0
      %585 = vmatprep.subr.mxu0 0.0
      %586 = vmatpush2.msra.mxu0 0.0
      %587 = vmatprep.subr.mxu0 0.0
      %588 = vmatpush2.msra.mxu0 0.0
      %589 = vmatprep.subr.mxu0 0.0
      %590 = vmatpush2.msra.mxu0 0.0
      %591 = vmatprep.subr.mxu0 0.0
      %592 = vmatpush2.msra.mxu0 0.0
      %593 = vmatprep.subr.mxu0 0.0
      %594 = vmatpush2.msra.mxu0 0.0
      %595 = vmatprep.subr.mxu0 0.0
      %596 = vmatpush2.msra.mxu0 0.0
      %597 = vmatprep.subr.mxu0 0.0
      %598 = vmatpush2.msra.mxu0 0.0
      %599 = vmatprep.subr.mxu0 0.0
      %600 = vmatpush2.msra.mxu0 0.0
      %601 = vmatprep.mubr.f32.mxu0 0.0
      %602 = vmatmul.mubr.f32.gmra.mxu0 %v438
      %v603 = vpop.f32.mrf.mxu0
      %v604 = vadd.f32 0.0, %v603
      %v605 = vpop.f32.mrf.mxu0
      %606 = vmatprep.mubr.f32.mxu0 0.0
      %607 = vmatmul.mubr.f32.gmra.mxu0 %v441
      %v608 = vpop.f32.mrf.mxu0
      %v609 = vadd.f32 0.0, %v608
      %v610 = vpop.f32.mrf.mxu0
      %611 = vmatprep.mubr.f32.mxu0 0.0
      %612 = vmatmul.mubr.f32.gmra.mxu0 %v444
      %v613 = vpop.f32.mrf.mxu0
      %v614 = vadd.f32 0.0, %v613
      %v615 = vpop.f32.mrf.mxu0
      %616 = vmatprep.mubr.f32.mxu0 0.0
      %617 = vmatmul.mubr.f32.gmra.mxu0 %v447
      %v618 = vpop.f32.mrf.mxu0
      %v619 = vadd.f32 0.0, %v618
      %v620 = vpop.f32.mrf.mxu0
      %621 = vmatprep.mubr.f32.mxu0 0.0
      %622 = vmatmul.mubr.f32.gmra.mxu0 %v450
      %v623 = vpop.f32.mrf.mxu0
      %v624 = vadd.f32 0.0, %v623
      %v625 = vpop.f32.mrf.mxu0
      %626 = vmatprep.mubr.f32.mxu0 0.0
      %627 = vmatmul.mubr.f32.gmra.mxu0 %v453
      %v628 = vpop.f32.mrf.mxu0
      %v629 = vadd.f32 0.0, %v628
      %v630 = vpop.f32.mrf.mxu0
      %631 = vmatprep.mubr.f32.mxu0 0.0
      %632 = vmatmul.mubr.f32.gmra.mxu0 %v456
      %v633 = vpop.f32.mrf.mxu0
      %v634 = vadd.f32 0.0, %v633
      %v635 = vpop.f32.mrf.mxu0
      %636 = vmatprep.mubr.f32.mxu0 0.0
      %637 = vmatmul.mubr.f32.gmra.mxu0 %v459
      %v638 = vpop.f32.mrf.mxu0
      %v639 = vadd.f32 0.0, %v638
      %v640 = vpop.f32.mrf.mxu0
      %641 = vmatprep.mubr.f32.mxu0 0.0
      %642 = vmatmul.mubr.f32.gmra.mxu0 %v462
      %v643 = vpop.f32.mrf.mxu0
      %v644 = vadd.f32 0.0, %v643
      %v645 = vpop.f32.mrf.mxu0
      %646 = vmatprep.mubr.f32.mxu0 0.0
      %647 = vmatmul.mubr.f32.gmra.mxu0 %v465
      %v648 = vpop.f32.mrf.mxu0
      %v649 = vadd.f32 0.0, %v648
      %v650 = vpop.f32.mrf.mxu0
      %651 = vmatprep.mubr.f32.mxu0 0.0
      %652 = vmatmul.mubr.f32.gmra.mxu0 %v468
      %v653 = vpop.f32.mrf.mxu0
      %v654 = vadd.f32 0.0, %v653
      %v655 = vpop.f32.mrf.mxu0
      %656 = vmatprep.mubr.f32.mxu0 0.0
      %657 = vmatmul.mubr.f32.gmra.mxu0 %v471
      %v658 = vpop.f32.mrf.mxu0
      %v659 = vadd.f32 0.0, %v658
      %v660 = vpop.f32.mrf.mxu0
      %661 = vmatprep.mubr.f32.mxu0 0.0
      %662 = vmatmul.mubr.f32.gmra.mxu0 %v474
      %v663 = vpop.f32.mrf.mxu0
      %v664 = vadd.f32 0.0, %v663
      %v665 = vpop.f32.mrf.mxu0
      %666 = vmatprep.mubr.f32.mxu0 0.0
      %667 = vmatmul.mubr.f32.gmra.mxu0 %v477
      %v668 = vpop.f32.mrf.mxu0
      %v669 = vadd.f32 0.0, %v668
      %v670 = vpop.f32.mrf.mxu0
      %671 = vmatprep.mubr.f32.mxu0 0.0
      %672 = vmatmul.mubr.f32.gmra.mxu0 %v480
      %v673 = vpop.f32.mrf.mxu0
      %v674 = vadd.f32 0.0, %v673
      %v675 = vpop.f32.mrf.mxu0
      %676 = vmatprep.mubr.f32.mxu0 0.0
      %677 = vmatmul.mubr.f32.gmra.mxu0 %v483
      %v678 = vpop.f32.mrf.mxu0
      %v679 = vadd.f32 0.0, %v678
      %v680 = vpop.f32.mrf.mxu0
      %681 = vmatprep.mubr.f32.mxu0 0.0
      %682 = vmatmul.mubr.f32.gmra.mxu0 %v486
      %v683 = vpop.f32.mrf.mxu0
      %v684 = vadd.f32 0.0, %v683
      %v685 = vpop.f32.mrf.mxu0
      %686 = vmatprep.mubr.f32.mxu0 0.0
      %687 = vmatmul.mubr.f32.gmra.mxu0 %v489
      %v688 = vpop.f32.mrf.mxu0
      %v689 = vadd.f32 0.0, %v688
      %v690 = vpop.f32.mrf.mxu0
      %691 = vmatprep.mubr.f32.mxu0 0.0
      %692 = vmatmul.mubr.f32.gmra.mxu0 %v492
      %v693 = vpop.f32.mrf.mxu0
      %v694 = vadd.f32 0.0, %v693
      %v695 = vpop.f32.mrf.mxu0
      %696 = vmatprep.mubr.f32.mxu0 0.0
      %697 = vmatmul.mubr.f32.gmra.mxu0 %v495
      %v698 = vpop.f32.mrf.mxu0
      %v699 = vadd.f32 0.0, %v698
      %v700 = vpop.f32.mrf.mxu0
      %701 = vmatprep.mubr.f32.mxu0 0.0
      %702 = vmatmul.mubr.f32.gmra.mxu0 %v498
      %v703 = vpop.f32.mrf.mxu0
      %v704 = vadd.f32 0.0, %v703
      %v705 = vpop.f32.mrf.mxu0
      %706 = vmatprep.mubr.f32.mxu0 0.0
      %707 = vmatmul.mubr.f32.gmra.mxu0 %v501
      %v708 = vpop.f32.mrf.mxu0
      %v709 = vadd.f32 0.0, %v708
      %v710 = vpop.f32.mrf.mxu0
      %711 = vmatprep.mubr.f32.mxu0 0.0
      %712 = vmatmul.mubr.f32.gmra.mxu0 %v504
      %v713 = vpop.f32.mrf.mxu0
      %v714 = vadd.f32 0.0, %v713
      %v715 = vpop.f32.mrf.mxu0
      %716 = vmatprep.mubr.f32.mxu0 0.0
      %717 = vmatmul.mubr.f32.gmra.mxu0 %v507
      %v718 = vpop.f32.mrf.mxu0
      %v719 = vadd.f32 0.0, %v718
      %v720 = vpop.f32.mrf.mxu0
      %721 = vmatprep.mubr.f32.mxu0 0.0
      %722 = vmatmul.mubr.f32.gmra.mxu0 %v510
      %v723 = vpop.f32.mrf.mxu0
      %v724 = vadd.f32 0.0, %v723
      %v725 = vpop.f32.mrf.mxu0
      %726 = vmatprep.mubr.f32.mxu0 0.0
      %727 = vmatmul.mubr.f32.gmra.mxu0 %v513
      %v728 = vpop.f32.mrf.mxu0
      %v729 = vadd.f32 0.0, %v728
      %v730 = vpop.f32.mrf.mxu0
      %731 = vmatprep.mubr.f32.mxu0 0.0
      %732 = vmatmul.mubr.f32.gmra.mxu0 %v516
      %v733 = vpop.f32.mrf.mxu0
      %v734 = vadd.f32 0.0, %v733
      %v735 = vpop.f32.mrf.mxu0
      %736 = vmatprep.mubr.f32.mxu0 0.0
      %737 = vmatmul.mubr.f32.gmra.mxu0 %v519
      %v738 = vpop.f32.mrf.mxu0
      %v739 = vadd.f32 0.0, %v738
      %v740 = vpop.f32.mrf.mxu0
      %741 = vmatprep.mubr.f32.mxu0 0.0
      %742 = vmatmul.mubr.f32.gmra.mxu0 %v522
      %v743 = vpop.f32.mrf.mxu0
      %v744 = vadd.f32 0.0, %v743
      %v745 = vpop.f32.mrf.mxu0
      %746 = vmatprep.mubr.f32.mxu0 0.0
      %747 = vmatmul.mubr.f32.gmra.mxu0 %v525
      %v748 = vpop.f32.mrf.mxu0
      %v749 = vadd.f32 0.0, %v748
      %v750 = vpop.f32.mrf.mxu0
      %751 = vmatprep.mubr.f32.mxu0 0.0
      %752 = vmatmul.mubr.f32.gmra.mxu0 %v528
      %v753 = vpop.f32.mrf.mxu0
      %v754 = vadd.f32 0.0, %v753
      %v755 = vpop.f32.mrf.mxu0
      %756 = vmatprep.mubr.f32.mxu0 0.0
      %757 = vmatmul.mubr.f32.gmra.mxu0 %v531
      %v758 = vpop.f32.mrf.mxu0
      %v759 = vadd.f32 0.0, %v758
      %v760 = vpop.f32.mrf.mxu0
      %761 = vdwg.mxu0
      %v763 = vsel %vm436, %v276, 0
      %v766 = vsel %vm436, %v277, 0
      %v769 = vsel %vm436, %v278, 0
      %v772 = vsel %vm436, %v279, 0
      %v775 = vsel %vm436, %v280, 0
      %v778 = vsel %vm436, %v281, 0
      %v781 = vsel %vm436, %v282, 0
      %v784 = vsel %vm436, %v283, 0
      %v787 = vsel %vm436, %v284, 0
      %v790 = vsel %vm436, %v285, 0
      %v793 = vsel %vm436, %v286, 0
      %v796 = vsel %vm436, %v287, 0
      %v799 = vsel %vm436, %v288, 0
      %v802 = vsel %vm436, %v289, 0
      %v805 = vsel %vm436, %v290, 0
      %v808 = vsel %vm436, %v291, 0
      %v811 = vsel %vm436, %v292, 0
      %v814 = vsel %vm436, %v293, 0
      %v817 = vsel %vm436, %v294, 0
      %v820 = vsel %vm436, %v295, 0
      %v823 = vsel %vm436, %v296, 0
      %v826 = vsel %vm436, %v297, 0
      %v829 = vsel %vm436, %v298, 0
      %v832 = vsel %vm436, %v299, 0
      %v835 = vsel %vm436, %v300, 0
      %v838 = vsel %vm436, %v301, 0
      %v841 = vsel %vm436, %v302, 0
      %v844 = vsel %vm436, %v303, 0
      %v847 = vsel %vm436, %v304, 0
      %v850 = vsel %vm436, %v305, 0
      %v853 = vsel %vm436, %v306, 0
      %v856 = vsel %vm436, %v307, 0
      %v859 = vsel %vm533, %v171, 0
      %861 = vmatprep.subr.mxu0 0.0
      %862 = vmatpush1.msra.mxu0 0.0
      %863 = vmatprep.subr.mxu0 0.0
      %864 = vmatpush1.msra.mxu0 0.0
      %865 = vmatprep.subr.mxu0 0.0
      %866 = vmatpush1.msra.mxu0 0.0
      %867 = vmatprep.subr.mxu0 0.0
      %868 = vmatpush1.msra.mxu0 0.0
      %869 = vmatprep.subr.mxu0 0.0
      %870 = vmatpush1.msra.mxu0 0.0
      %871 = vmatprep.subr.mxu0 0.0
      %872 = vmatpush1.msra.mxu0 0.0
      %873 = vmatprep.subr.mxu0 0.0
      %874 = vmatpush1.msra.mxu0 0.0
      %875 = vmatprep.subr.mxu0 0.0
      %876 = vmatpush1.msra.mxu0 0.0
      %877 = vmatprep.subr.mxu0 0.0
      %878 = vmatpush1.msra.mxu0 0.0
      %879 = vmatprep.subr.mxu0 0.0
      %880 = vmatpush1.msra.mxu0 0.0
      %881 = vmatprep.subr.mxu0 0.0
      %882 = vmatpush1.msra.mxu0 0.0
      %883 = vmatprep.subr.mxu0 0.0
      %884 = vmatpush1.msra.mxu0 0.0
      %885 = vmatprep.subr.mxu0 0.0
      %886 = vmatpush1.msra.mxu0 0.0
      %887 = vmatprep.subr.mxu0 0.0
      %888 = vmatpush1.msra.mxu0 0.0
      %889 = vmatprep.subr.mxu0 0.0
      %890 = vmatpush1.msra.mxu0 0.0
      %891 = vmatprep.subr.mxu0 0.0
      %892 = vmatpush1.msra.mxu0 %v859
      %893 = vmatprep.subr.mxu0 0.0
      %894 = vmatpush2.msra.mxu0 0.0
      %895 = vmatprep.subr.mxu0 0.0
      %896 = vmatpush2.msra.mxu0 0.0
      %897 = vmatprep.subr.mxu0 0.0
      %898 = vmatpush2.msra.mxu0 0.0
      %899 = vmatprep.subr.mxu0 0.0
      %900 = vmatpush2.msra.mxu0 0.0
      %901 = vmatprep.subr.mxu0 0.0
      %902 = vmatpush2.msra.mxu0 0.0
      %903 = vmatprep.subr.mxu0 0.0
      %904 = vmatpush2.msra.mxu0 0.0
      %905 = vmatprep.subr.mxu0 0.0
      %906 = vmatpush2.msra.mxu0 0.0
      %907 = vmatprep.subr.mxu0 0.0
      %908 = vmatpush2.msra.mxu0 0.0
      %909 = vmatprep.subr.mxu0 0.0
      %910 = vmatpush2.msra.mxu0 0.0
      %911 = vmatprep.subr.mxu0 0.0
      %912 = vmatpush2.msra.mxu0 0.0
      %913 = vmatprep.subr.mxu0 0.0
      %914 = vmatpush2.msra.mxu0 0.0
      %915 = vmatprep.subr.mxu0 0.0
      %916 = vmatpush2.msra.mxu0 0.0
      %917 = vmatprep.subr.mxu0 0.0
      %918 = vmatpush2.msra.mxu0 0.0
      %919 = vmatprep.subr.mxu0 0.0
      %920 = vmatpush2.msra.mxu0 0.0
      %921 = vmatprep.subr.mxu0 0.0
      %922 = vmatpush2.msra.mxu0 0.0
      %923 = vmatprep.subr.mxu0 0.0
      %924 = vmatpush2.msra.mxu0 0.0
      %925 = vmatprep.mubr.f32.mxu0 0.0
      %926 = vmatmul.mubr.f32.gmra.mxu0 %v763
      %v927 = vpop.f32.mrf.mxu0
      %v928 = vadd.f32 %v604, %v927
      %v929 = vpop.f32.mrf.mxu0
      %930 = vmatprep.mubr.f32.mxu0 0.0
      %931 = vmatmul.mubr.f32.gmra.mxu0 %v766
      %v932 = vpop.f32.mrf.mxu0
      %v933 = vadd.f32 %v609, %v932
      %v934 = vpop.f32.mrf.mxu0
      %935 = vmatprep.mubr.f32.mxu0 0.0
      %936 = vmatmul.mubr.f32.gmra.mxu0 %v769
      %v937 = vpop.f32.mrf.mxu0
      %v938 = vadd.f32 %v614, %v937
      %v939 = vpop.f32.mrf.mxu0
      %940 = vmatprep.mubr.f32.mxu0 0.0
      %941 = vmatmul.mubr.f32.gmra.mxu0 %v772
      %v942 = vpop.f32.mrf.mxu0
      %v943 = vadd.f32 %v619, %v942
      %v944 = vpop.f32.mrf.mxu0
      %945 = vmatprep.mubr.f32.mxu0 0.0
      %946 = vmatmul.mubr.f32.gmra.mxu0 %v775
      %v947 = vpop.f32.mrf.mxu0
      %v948 = vadd.f32 %v624, %v947
      %v949 = vpop.f32.mrf.mxu0
      %950 = vmatprep.mubr.f32.mxu0 0.0
      %951 = vmatmul.mubr.f32.gmra.mxu0 %v778
      %v952 = vpop.f32.mrf.mxu0
      %v953 = vadd.f32 %v629, %v952
      %v954 = vpop.f32.mrf.mxu0
      %955 = vmatprep.mubr.f32.mxu0 0.0
      %956 = vmatmul.mubr.f32.gmra.mxu0 %v781
      %v957 = vpop.f32.mrf.mxu0
      %v958 = vadd.f32 %v634, %v957
      %v959 = vpop.f32.mrf.mxu0
      %960 = vmatprep.mubr.f32.mxu0 0.0
      %961 = vmatmul.mubr.f32.gmra.mxu0 %v784
      %v962 = vpop.f32.mrf.mxu0
      %v963 = vadd.f32 %v639, %v962
      %v964 = vpop.f32.mrf.mxu0
      %965 = vmatprep.mubr.f32.mxu0 0.0
      %966 = vmatmul.mubr.f32.gmra.mxu0 %v787
      %v967 = vpop.f32.mrf.mxu0
      %v968 = vadd.f32 %v644, %v967
      %v969 = vpop.f32.mrf.mxu0
      %970 = vmatprep.mubr.f32.mxu0 0.0
      %971 = vmatmul.mubr.f32.gmra.mxu0 %v790
      %v972 = vpop.f32.mrf.mxu0
      %v973 = vadd.f32 %v649, %v972
      %v974 = vpop.f32.mrf.mxu0
      %975 = vmatprep.mubr.f32.mxu0 0.0
      %976 = vmatmul.mubr.f32.gmra.mxu0 %v793
      %v977 = vpop.f32.mrf.mxu0
      %v978 = vadd.f32 %v654, %v977
      %v979 = vpop.f32.mrf.mxu0
      %980 = vmatprep.mubr.f32.mxu0 0.0
      %981 = vmatmul.mubr.f32.gmra.mxu0 %v796
      %v982 = vpop.f32.mrf.mxu0
      %v983 = vadd.f32 %v659, %v982
      %v984 = vpop.f32.mrf.mxu0
      %985 = vmatprep.mubr.f32.mxu0 0.0
      %986 = vmatmul.mubr.f32.gmra.mxu0 %v799
      %v987 = vpop.f32.mrf.mxu0
      %v988 = vadd.f32 %v664, %v987
      %v989 = vpop.f32.mrf.mxu0
      %990 = vmatprep.mubr.f32.mxu0 0.0
      %991 = vmatmul.mubr.f32.gmra.mxu0 %v802
      %v992 = vpop.f32.mrf.mxu0
      %v993 = vadd.f32 %v669, %v992
      %v994 = vpop.f32.mrf.mxu0
      %995 = vmatprep.mubr.f32.mxu0 0.0
      %996 = vmatmul.mubr.f32.gmra.mxu0 %v805
      %v997 = vpop.f32.mrf.mxu0
      %v998 = vadd.f32 %v674, %v997
      %v999 = vpop.f32.mrf.mxu0
      %1000 = vmatprep.mubr.f32.mxu0 0.0
      %1001 = vmatmul.mubr.f32.gmra.mxu0 %v808
      %v1002 = vpop.f32.mrf.mxu0
      %v1003 = vadd.f32 %v679, %v1002
      %v1004 = vpop.f32.mrf.mxu0
      %1005 = vmatprep.mubr.f32.mxu0 0.0
      %1006 = vmatmul.mubr.f32.gmra.mxu0 %v811
      %v1007 = vpop.f32.mrf.mxu0
      %v1008 = vadd.f32 %v684, %v1007
      %v1009 = vpop.f32.mrf.mxu0
      %1010 = vmatprep.mubr.f32.mxu0 0.0
      %1011 = vmatmul.mubr.f32.gmra.mxu0 %v814
      %v1012 = vpop.f32.mrf.mxu0
      %v1013 = vadd.f32 %v689, %v1012
      %v1014 = vpop.f32.mrf.mxu0
      %1015 = vmatprep.mubr.f32.mxu0 0.0
      %1016 = vmatmul.mubr.f32.gmra.mxu0 %v817
      %v1017 = vpop.f32.mrf.mxu0
      %v1018 = vadd.f32 %v694, %v1017
      %v1019 = vpop.f32.mrf.mxu0
      %1020 = vmatprep.mubr.f32.mxu0 0.0
      %1021 = vmatmul.mubr.f32.gmra.mxu0 %v820
      %v1022 = vpop.f32.mrf.mxu0
      %v1023 = vadd.f32 %v699, %v1022
      %v1024 = vpop.f32.mrf.mxu0
      %1025 = vmatprep.mubr.f32.mxu0 0.0
      %1026 = vmatmul.mubr.f32.gmra.mxu0 %v823
      %v1027 = vpop.f32.mrf.mxu0
      %v1028 = vadd.f32 %v704, %v1027
      %v1029 = vpop.f32.mrf.mxu0
      %1030 = vmatprep.mubr.f32.mxu0 0.0
      %1031 = vmatmul.mubr.f32.gmra.mxu0 %v826
      %v1032 = vpop.f32.mrf.mxu0
      %v1033 = vadd.f32 %v709, %v1032
      %v1034 = vpop.f32.mrf.mxu0
      %1035 = vmatprep.mubr.f32.mxu0 0.0
      %1036 = vmatmul.mubr.f32.gmra.mxu0 %v829
      %v1037 = vpop.f32.mrf.mxu0
      %v1038 = vadd.f32 %v714, %v1037
      %v1039 = vpop.f32.mrf.mxu0
      %1040 = vmatprep.mubr.f32.mxu0 0.0
      %1041 = vmatmul.mubr.f32.gmra.mxu0 %v832
      %v1042 = vpop.f32.mrf.mxu0
      %v1043 = vadd.f32 %v719, %v1042
      %v1044 = vpop.f32.mrf.mxu0
      %1045 = vmatprep.mubr.f32.mxu0 0.0
      %1046 = vmatmul.mubr.f32.gmra.mxu0 %v835
      %v1047 = vpop.f32.mrf.mxu0
      %v1048 = vadd.f32 %v724, %v1047
      %v1049 = vpop.f32.mrf.mxu0
      %1050 = vmatprep.mubr.f32.mxu0 0.0
      %1051 = vmatmul.mubr.f32.gmra.mxu0 %v838
      %v1052 = vpop.f32.mrf.mxu0
      %v1053 = vadd.f32 %v729, %v1052
      %v1054 = vpop.f32.mrf.mxu0
      %1055 = vmatprep.mubr.f32.mxu0 0.0
      %1056 = vmatmul.mubr.f32.gmra.mxu0 %v841
      %v1057 = vpop.f32.mrf.mxu0
      %v1058 = vadd.f32 %v734, %v1057
      %v1059 = vpop.f32.mrf.mxu0
      %1060 = vmatprep.mubr.f32.mxu0 0.0
      %1061 = vmatmul.mubr.f32.gmra.mxu0 %v844
      %v1062 = vpop.f32.mrf.mxu0
      %v1063 = vadd.f32 %v739, %v1062
      %v1064 = vpop.f32.mrf.mxu0
      %1065 = vmatprep.mubr.f32.mxu0 0.0
      %1066 = vmatmul.mubr.f32.gmra.mxu0 %v847
      %v1067 = vpop.f32.mrf.mxu0
      %v1068 = vadd.f32 %v744, %v1067
      %v1069 = vpop.f32.mrf.mxu0
      %1070 = vmatprep.mubr.f32.mxu0 0.0
      %1071 = vmatmul.mubr.f32.gmra.mxu0 %v850
      %v1072 = vpop.f32.mrf.mxu0
      %v1073 = vadd.f32 %v749, %v1072
      %v1074 = vpop.f32.mrf.mxu0
      %1075 = vmatprep.mubr.f32.mxu0 0.0
      %1076 = vmatmul.mubr.f32.gmra.mxu0 %v853
      %v1077 = vpop.f32.mrf.mxu0
      %v1078 = vadd.f32 %v754, %v1077
      %v1079 = vpop.f32.mrf.mxu0
      %1080 = vmatprep.mubr.f32.mxu0 0.0
      %1081 = vmatmul.mubr.f32.gmra.mxu0 %v856
      %v1082 = vpop.f32.mrf.mxu0
      %v1083 = vadd.f32 %v759, %v1082
      %v1084 = vpop.f32.mrf.mxu0
      %1085 = vdwg.mxu0
      %v1086 = vld [vmem:[%s165 + $0x2] sm:$0xff]
      %v1087 = vld [vmem:[%s165 + $0xa] sm:$0xff]
      %v1088 = vld [vmem:[%s165 + $0x1a] sm:$0xff]
      %v1089 = vld [vmem:[%s165 + $0x22] sm:$0xff]
      %v1090 = vld [vmem:[%s165 + $0x32] sm:$0xff]
      %v1091 = vld [vmem:[%s165 + $0x3a] sm:$0xff]
      %v1092 = vld [vmem:[%s165 + $0x4a] sm:$0xff]
      %v1093 = vld [vmem:[%s165 + $0x52] sm:$0xff]
      %v1094 = vld [vmem:[%s165 + $0x62] sm:$0xff]
      %v1095 = vld [vmem:[%s165 + $0x6a] sm:$0xff]
      %v1096 = vld [vmem:[%s165 + $0x7a] sm:$0xff]
      %v1097 = vld [vmem:[%s165 + $0x82] sm:$0xff]
      %v1098 = vld [vmem:[%s165 + $0x92] sm:$0xff]
      %v1099 = vld [vmem:[%s165 + $0x9a] sm:$0xff]
      %v1100 = vld [vmem:[%s165 + $0xaa] sm:$0xff]
      %v1101 = vld [vmem:[%s165 + $0xb2] sm:$0xff]
      %v1102 = vld [vmem:[%s165 + $0xc2] sm:$0xff]
      %v1103 = vld [vmem:[%s165 + $0xca] sm:$0xff]
      %v1104 = vld [vmem:[%s165 + $0xda] sm:$0xff]
      %v1105 = vld [vmem:[%s165 + $0xe2] sm:$0xff]
      %v1106 = vld [vmem:[%s165 + $0xf2] sm:$0xff]
      %v1107 = vld [vmem:[%s165 + $0xfa] sm:$0xff]
      %v1108 = vld [vmem:[%s165 + $0x10a] sm:$0xff]
      %v1109 = vld [vmem:[%s165 + $0x112] sm:$0xff]
      %v1110 = vld [vmem:[%s165 + $0x122] sm:$0xff]
      %v1111 = vld [vmem:[%s165 + $0x12a] sm:$0xff]
      %v1112 = vld [vmem:[%s165 + $0x13a] sm:$0xff]
      %v1113 = vld [vmem:[%s165 + $0x142] sm:$0xff]
      %v1114 = vld [vmem:[%s165 + $0x152] sm:$0xff]
      %v1115 = vld [vmem:[%s165 + $0x15a] sm:$0xff]
      %v1116 = vld [vmem:[%s165 + $0x16a] sm:$0xff]
      %v1117 = vld [vmem:[%s165 + $0x172] sm:$0xff]
      %vm1118 = vcmp.ge.f32.partialorder %v1086, 0.0
      %vm1119 = vcmp.ge.f32.partialorder %v1087, 0.0
      %vm1120 = vcmp.ge.f32.partialorder %v1088, 0.0
      %vm1121 = vcmp.ge.f32.partialorder %v1089, 0.0
      %vm1122 = vcmp.ge.f32.partialorder %v1090, 0.0
      %vm1123 = vcmp.ge.f32.partialorder %v1091, 0.0
      %vm1124 = vcmp.ge.f32.partialorder %v1092, 0.0
      %vm1125 = vcmp.ge.f32.partialorder %v1093, 0.0
      %vm1126 = vcmp.ge.f32.partialorder %v1094, 0.0
      %vm1127 = vcmp.ge.f32.partialorder %v1095, 0.0
      %vm1128 = vcmp.ge.f32.partialorder %v1096, 0.0
      %vm1129 = vcmp.ge.f32.partialorder %v1097, 0.0
      %vm1130 = vcmp.ge.f32.partialorder %v1098, 0.0
      %vm1131 = vcmp.ge.f32.partialorder %v1099, 0.0
      %vm1132 = vcmp.ge.f32.partialorder %v1100, 0.0
      %vm1133 = vcmp.ge.f32.partialorder %v1101, 0.0
      %vm1134 = vcmp.ge.f32.partialorder %v1102, 0.0
      %vm1135 = vcmp.ge.f32.partialorder %v1103, 0.0
      %vm1136 = vcmp.ge.f32.partialorder %v1104, 0.0
      %vm1137 = vcmp.ge.f32.partialorder %v1105, 0.0
      %vm1138 = vcmp.ge.f32.partialorder %v1106, 0.0
      %vm1139 = vcmp.ge.f32.partialorder %v1107, 0.0
      %vm1140 = vcmp.ge.f32.partialorder %v1108, 0.0
      %vm1141 = vcmp.ge.f32.partialorder %v1109, 0.0
      %vm1142 = vcmp.ge.f32.partialorder %v1110, 0.0
      %vm1143 = vcmp.ge.f32.partialorder %v1111, 0.0
      %vm1144 = vcmp.ge.f32.partialorder %v1112, 0.0
      %vm1145 = vcmp.ge.f32.partialorder %v1113, 0.0
      %vm1146 = vcmp.ge.f32.partialorder %v1114, 0.0
      %vm1147 = vcmp.ge.f32.partialorder %v1115, 0.0
      %vm1148 = vcmp.ge.f32.partialorder %v1116, 0.0
      %vm1149 = vcmp.ge.f32.partialorder %v1117, 0.0
      %v1150 = vmul.f32 %v1086, 0.2
      %v1151 = vmul.f32 %v1087, 0.2
      %v1152 = vmul.f32 %v1088, 0.2
      %v1153 = vmul.f32 %v1089, 0.2
      %v1154 = vmul.f32 %v1090, 0.2
      %v1155 = vmul.f32 %v1091, 0.2
      %v1156 = vmul.f32 %v1092, 0.2
      %v1157 = vmul.f32 %v1093, 0.2
      %v1158 = vmul.f32 %v1094, 0.2
      %v1159 = vmul.f32 %v1095, 0.2
      %v1160 = vmul.f32 %v1096, 0.2
      %v1161 = vmul.f32 %v1097, 0.2
      %v1162 = vmul.f32 %v1098, 0.2
      %v1163 = vmul.f32 %v1099, 0.2
      %v1164 = vmul.f32 %v1100, 0.2
      %v1165 = vmul.f32 %v1101, 0.2
      %v1166 = vmul.f32 %v1102, 0.2
      %v1167 = vmul.f32 %v1103, 0.2
      %v1168 = vmul.f32 %v1104, 0.2
      %v1169 = vmul.f32 %v1105, 0.2
      %v1170 = vmul.f32 %v1106, 0.2
      %v1171 = vmul.f32 %v1107, 0.2
      %v1172 = vmul.f32 %v1108, 0.2
      %v1173 = vmul.f32 %v1109, 0.2
      %v1174 = vmul.f32 %v1110, 0.2
      %v1175 = vmul.f32 %v1111, 0.2
      %v1176 = vmul.f32 %v1112, 0.2
      %v1177 = vmul.f32 %v1113, 0.2
      %v1178 = vmul.f32 %v1114, 0.2
      %v1179 = vmul.f32 %v1115, 0.2
      %v1180 = vmul.f32 %v1116, 0.2
      %v1181 = vmul.f32 %v1117, 0.2
      %v1182 = vsel %vm1118, %v1086, %v1150
      %v1183 = vsel %vm1119, %v1087, %v1151
      %v1184 = vsel %vm1120, %v1088, %v1152
      %v1185 = vsel %vm1121, %v1089, %v1153
      %v1186 = vsel %vm1122, %v1090, %v1154
      %v1187 = vsel %vm1123, %v1091, %v1155
      %v1188 = vsel %vm1124, %v1092, %v1156
      %v1189 = vsel %vm1125, %v1093, %v1157
      %v1190 = vsel %vm1126, %v1094, %v1158
      %v1191 = vsel %vm1127, %v1095, %v1159
      %v1192 = vsel %vm1128, %v1096, %v1160
      %v1193 = vsel %vm1129, %v1097, %v1161
      %v1194 = vsel %vm1130, %v1098, %v1162
      %v1195 = vsel %vm1131, %v1099, %v1163
      %v1196 = vsel %vm1132, %v1100, %v1164
      %v1197 = vsel %vm1133, %v1101, %v1165
      %v1198 = vsel %vm1134, %v1102, %v1166
      %v1199 = vsel %vm1135, %v1103, %v1167
      %v1200 = vsel %vm1136, %v1104, %v1168
      %v1201 = vsel %vm1137, %v1105, %v1169
      %v1202 = vsel %vm1138, %v1106, %v1170
      %v1203 = vsel %vm1139, %v1107, %v1171
      %v1204 = vsel %vm1140, %v1108, %v1172
      %v1205 = vsel %vm1141, %v1109, %v1173
      %v1206 = vsel %vm1142, %v1110, %v1174
      %v1207 = vsel %vm1143, %v1111, %v1175
      %v1208 = vsel %vm1144, %v1112, %v1176
      %v1209 = vsel %vm1145, %v1113, %v1177
      %v1210 = vsel %vm1146, %v1114, %v1178
      %v1211 = vsel %vm1147, %v1115, %v1179
      %v1212 = vsel %vm1148, %v1116, %v1180
      %v1213 = vsel %vm1149, %v1117, %v1181
      %v1215 = vsel %vm436, %v1182, 0
      %v1218 = vsel %vm436, %v1183, 0
      %v1221 = vsel %vm436, %v1184, 0
      %v1224 = vsel %vm436, %v1185, 0
      %v1227 = vsel %vm436, %v1186, 0
      %v1230 = vsel %vm436, %v1187, 0
      %v1233 = vsel %vm436, %v1188, 0
      %v1236 = vsel %vm436, %v1189, 0
      %v1239 = vsel %vm436, %v1190, 0
      %v1242 = vsel %vm436, %v1191, 0
      %v1245 = vsel %vm436, %v1192, 0
      %v1248 = vsel %vm436, %v1193, 0
      %v1251 = vsel %vm436, %v1194, 0
      %v1254 = vsel %vm436, %v1195, 0
      %v1257 = vsel %vm436, %v1196, 0
      %v1260 = vsel %vm436, %v1197, 0
      %v1263 = vsel %vm436, %v1198, 0
      %v1266 = vsel %vm436, %v1199, 0
      %v1269 = vsel %vm436, %v1200, 0
      %v1272 = vsel %vm436, %v1201, 0
      %v1275 = vsel %vm436, %v1202, 0
      %v1278 = vsel %vm436, %v1203, 0
      %v1281 = vsel %vm436, %v1204, 0
      %v1284 = vsel %vm436, %v1205, 0
      %v1287 = vsel %vm436, %v1206, 0
      %v1290 = vsel %vm436, %v1207, 0
      %v1293 = vsel %vm436, %v1208, 0
      %v1296 = vsel %vm436, %v1209, 0
      %v1299 = vsel %vm436, %v1210, 0
      %v1302 = vsel %vm436, %v1211, 0
      %v1305 = vsel %vm436, %v1212, 0
      %v1308 = vsel %vm436, %v1213, 0
      %v1311 = vsel %vm533, %v173, 0
      %1313 = vmatprep.subr.mxu0 0.0
      %1314 = vmatpush1.msra.mxu0 0.0
      %1315 = vmatprep.subr.mxu0 0.0
      %1316 = vmatpush1.msra.mxu0 0.0
      %1317 = vmatprep.subr.mxu0 0.0
      %1318 = vmatpush1.msra.mxu0 0.0
      %1319 = vmatprep.subr.mxu0 0.0
      %1320 = vmatpush1.msra.mxu0 0.0
      %1321 = vmatprep.subr.mxu0 0.0
      %1322 = vmatpush1.msra.mxu0 0.0
      %1323 = vmatprep.subr.mxu0 0.0
      %1324 = vmatpush1.msra.mxu0 0.0
      %1325 = vmatprep.subr.mxu0 0.0
      %1326 = vmatpush1.msra.mxu0 0.0
      %1327 = vmatprep.subr.mxu0 0.0
      %1328 = vmatpush1.msra.mxu0 0.0
      %1329 = vmatprep.subr.mxu0 0.0
      %1330 = vmatpush1.msra.mxu0 0.0
      %1331 = vmatprep.subr.mxu0 0.0
      %1332 = vmatpush1.msra.mxu0 0.0
      %1333 = vmatprep.subr.mxu0 0.0
      %1334 = vmatpush1.msra.mxu0 0.0
      %1335 = vmatprep.subr.mxu0 0.0
      %1336 = vmatpush1.msra.mxu0 0.0
      %1337 = vmatprep.subr.mxu0 0.0
      %1338 = vmatpush1.msra.mxu0 0.0
      %1339 = vmatprep.subr.mxu0 0.0
      %1340 = vmatpush1.msra.mxu0 0.0
      %1341 = vmatprep.subr.mxu0 0.0
      %1342 = vmatpush1.msra.mxu0 0.0
      %1343 = vmatprep.subr.mxu0 0.0
      %1344 = vmatpush1.msra.mxu0 %v1311
      %1345 = vmatprep.subr.mxu0 0.0
      %1346 = vmatpush2.msra.mxu0 0.0
      %1347 = vmatprep.subr.mxu0 0.0
      %1348 = vmatpush2.msra.mxu0 0.0
      %1349 = vmatprep.subr.mxu0 0.0
      %1350 = vmatpush2.msra.mxu0 0.0
      %1351 = vmatprep.subr.mxu0 0.0
      %1352 = vmatpush2.msra.mxu0 0.0
      %1353 = vmatprep.subr.mxu0 0.0
      %1354 = vmatpush2.msra.mxu0 0.0
      %1355 = vmatprep.subr.mxu0 0.0
      %1356 = vmatpush2.msra.mxu0 0.0
      %1357 = vmatprep.subr.mxu0 0.0
      %1358 = vmatpush2.msra.mxu0 0.0
      %1359 = vmatprep.subr.mxu0 0.0
      %1360 = vmatpush2.msra.mxu0 0.0
      %1361 = vmatprep.subr.mxu0 0.0
      %1362 = vmatpush2.msra.mxu0 0.0
      %1363 = vmatprep.subr.mxu0 0.0
      %1364 = vmatpush2.msra.mxu0 0.0
      %1365 = vmatprep.subr.mxu0 0.0
      %1366 = vmatpush2.msra.mxu0 0.0
      %1367 = vmatprep.subr.mxu0 0.0
      %1368 = vmatpush2.msra.mxu0 0.0
      %1369 = vmatprep.subr.mxu0 0.0
      %1370 = vmatpush2.msra.mxu0 0.0
      %1371 = vmatprep.subr.mxu0 0.0
      %1372 = vmatpush2.msra.mxu0 0.0
      %1373 = vmatprep.subr.mxu0 0.0
      %1374 = vmatpush2.msra.mxu0 0.0
      %1375 = vmatprep.subr.mxu0 0.0
      %1376 = vmatpush2.msra.mxu0 0.0
      %1377 = vmatprep.mubr.f32.mxu0 0.0
      %1378 = vmatmul.mubr.f32.gmra.mxu0 %v1215
      %v1379 = vpop.f32.mrf.mxu0
      %v1380 = vadd.f32 0.0, %v1379
      %v1381 = vpop.f32.mrf.mxu0
      %1382 = vmatprep.mubr.f32.mxu0 0.0
      %1383 = vmatmul.mubr.f32.gmra.mxu0 %v1218
      %v1384 = vpop.f32.mrf.mxu0
      %v1385 = vadd.f32 0.0, %v1384
      %v1386 = vpop.f32.mrf.mxu0
      %1387 = vmatprep.mubr.f32.mxu0 0.0
      %1388 = vmatmul.mubr.f32.gmra.mxu0 %v1221
      %v1389 = vpop.f32.mrf.mxu0
      %v1390 = vadd.f32 0.0, %v1389
      %v1391 = vpop.f32.mrf.mxu0
      %1392 = vmatprep.mubr.f32.mxu0 0.0
      %1393 = vmatmul.mubr.f32.gmra.mxu0 %v1224
      %v1394 = vpop.f32.mrf.mxu0
      %v1395 = vadd.f32 0.0, %v1394
      %v1396 = vpop.f32.mrf.mxu0
      %1397 = vmatprep.mubr.f32.mxu0 0.0
      %1398 = vmatmul.mubr.f32.gmra.mxu0 %v1227
      %v1399 = vpop.f32.mrf.mxu0
      %v1400 = vadd.f32 0.0, %v1399
      %v1401 = vpop.f32.mrf.mxu0
      %1402 = vmatprep.mubr.f32.mxu0 0.0
      %1403 = vmatmul.mubr.f32.gmra.mxu0 %v1230
      %v1404 = vpop.f32.mrf.mxu0
      %v1405 = vadd.f32 0.0, %v1404
      %v1406 = vpop.f32.mrf.mxu0
      %1407 = vmatprep.mubr.f32.mxu0 0.0
      %1408 = vmatmul.mubr.f32.gmra.mxu0 %v1233
      %v1409 = vpop.f32.mrf.mxu0
      %v1410 = vadd.f32 0.0, %v1409
      %v1411 = vpop.f32.mrf.mxu0
      %1412 = vmatprep.mubr.f32.mxu0 0.0
      %1413 = vmatmul.mubr.f32.gmra.mxu0 %v1236
      %v1414 = vpop.f32.mrf.mxu0
      %v1415 = vadd.f32 0.0, %v1414
      %v1416 = vpop.f32.mrf.mxu0
      %1417 = vmatprep.mubr.f32.mxu0 0.0
      %1418 = vmatmul.mubr.f32.gmra.mxu0 %v1239
      %v1419 = vpop.f32.mrf.mxu0
      %v1420 = vadd.f32 0.0, %v1419
      %v1421 = vpop.f32.mrf.mxu0
      %1422 = vmatprep.mubr.f32.mxu0 0.0
      %1423 = vmatmul.mubr.f32.gmra.mxu0 %v1242
      %v1424 = vpop.f32.mrf.mxu0
      %v1425 = vadd.f32 0.0, %v1424
      %v1426 = vpop.f32.mrf.mxu0
      %1427 = vmatprep.mubr.f32.mxu0 0.0
      %1428 = vmatmul.mubr.f32.gmra.mxu0 %v1245
      %v1429 = vpop.f32.mrf.mxu0
      %v1430 = vadd.f32 0.0, %v1429
      %v1431 = vpop.f32.mrf.mxu0
      %1432 = vmatprep.mubr.f32.mxu0 0.0
      %1433 = vmatmul.mubr.f32.gmra.mxu0 %v1248
      %v1434 = vpop.f32.mrf.mxu0
      %v1435 = vadd.f32 0.0, %v1434
      %v1436 = vpop.f32.mrf.mxu0
      %1437 = vmatprep.mubr.f32.mxu0 0.0
      %1438 = vmatmul.mubr.f32.gmra.mxu0 %v1251
      %v1439 = vpop.f32.mrf.mxu0
      %v1440 = vadd.f32 0.0, %v1439
      %v1441 = vpop.f32.mrf.mxu0
      %1442 = vmatprep.mubr.f32.mxu0 0.0
      %1443 = vmatmul.mubr.f32.gmra.mxu0 %v1254
      %v1444 = vpop.f32.mrf.mxu0
      %v1445 = vadd.f32 0.0, %v1444
      %v1446 = vpop.f32.mrf.mxu0
      %1447 = vmatprep.mubr.f32.mxu0 0.0
      %1448 = vmatmul.mubr.f32.gmra.mxu0 %v1257
      %v1449 = vpop.f32.mrf.mxu0
      %v1450 = vadd.f32 0.0, %v1449
      %v1451 = vpop.f32.mrf.mxu0
      %1452 = vmatprep.mubr.f32.mxu0 0.0
      %1453 = vmatmul.mubr.f32.gmra.mxu0 %v1260
      %v1454 = vpop.f32.mrf.mxu0
      %v1455 = vadd.f32 0.0, %v1454
      %v1456 = vpop.f32.mrf.mxu0
      %1457 = vmatprep.mubr.f32.mxu0 0.0
      %1458 = vmatmul.mubr.f32.gmra.mxu0 %v1263
      %v1459 = vpop.f32.mrf.mxu0
      %v1460 = vadd.f32 0.0, %v1459
      %v1461 = vpop.f32.mrf.mxu0
      %1462 = vmatprep.mubr.f32.mxu0 0.0
      %1463 = vmatmul.mubr.f32.gmra.mxu0 %v1266
      %v1464 = vpop.f32.mrf.mxu0
      %v1465 = vadd.f32 0.0, %v1464
      %v1466 = vpop.f32.mrf.mxu0
      %1467 = vmatprep.mubr.f32.mxu0 0.0
      %1468 = vmatmul.mubr.f32.gmra.mxu0 %v1269
      %v1469 = vpop.f32.mrf.mxu0
      %v1470 = vadd.f32 0.0, %v1469
      %v1471 = vpop.f32.mrf.mxu0
      %1472 = vmatprep.mubr.f32.mxu0 0.0
      %1473 = vmatmul.mubr.f32.gmra.mxu0 %v1272
      %v1474 = vpop.f32.mrf.mxu0
      %v1475 = vadd.f32 0.0, %v1474
      %v1476 = vpop.f32.mrf.mxu0
      %1477 = vmatprep.mubr.f32.mxu0 0.0
      %1478 = vmatmul.mubr.f32.gmra.mxu0 %v1275
      %v1479 = vpop.f32.mrf.mxu0
      %v1480 = vadd.f32 0.0, %v1479
      %v1481 = vpop.f32.mrf.mxu0
      %1482 = vmatprep.mubr.f32.mxu0 0.0
      %1483 = vmatmul.mubr.f32.gmra.mxu0 %v1278
      %v1484 = vpop.f32.mrf.mxu0
      %v1485 = vadd.f32 0.0, %v1484
      %v1486 = vpop.f32.mrf.mxu0
      %1487 = vmatprep.mubr.f32.mxu0 0.0
      %1488 = vmatmul.mubr.f32.gmra.mxu0 %v1281
      %v1489 = vpop.f32.mrf.mxu0
      %v1490 = vadd.f32 0.0, %v1489
      %v1491 = vpop.f32.mrf.mxu0
      %1492 = vmatprep.mubr.f32.mxu0 0.0
      %1493 = vmatmul.mubr.f32.gmra.mxu0 %v1284
      %v1494 = vpop.f32.mrf.mxu0
      %v1495 = vadd.f32 0.0, %v1494
      %v1496 = vpop.f32.mrf.mxu0
      %1497 = vmatprep.mubr.f32.mxu0 0.0
      %1498 = vmatmul.mubr.f32.gmra.mxu0 %v1287
      %v1499 = vpop.f32.mrf.mxu0
      %v1500 = vadd.f32 0.0, %v1499
      %v1501 = vpop.f32.mrf.mxu0
      %1502 = vmatprep.mubr.f32.mxu0 0.0
      %1503 = vmatmul.mubr.f32.gmra.mxu0 %v1290
      %v1504 = vpop.f32.mrf.mxu0
      %v1505 = vadd.f32 0.0, %v1504
      %v1506 = vpop.f32.mrf.mxu0
      %1507 = vmatprep.mubr.f32.mxu0 0.0
      %1508 = vmatmul.mubr.f32.gmra.mxu0 %v1293
      %v1509 = vpop.f32.mrf.mxu0
      %v1510 = vadd.f32 0.0, %v1509
      %v1511 = vpop.f32.mrf.mxu0
      %1512 = vmatprep.mubr.f32.mxu0 0.0
      %1513 = vmatmul.mubr.f32.gmra.mxu0 %v1296
      %v1514 = vpop.f32.mrf.mxu0
      %v1515 = vadd.f32 0.0, %v1514
      %v1516 = vpop.f32.mrf.mxu0
      %1517 = vmatprep.mubr.f32.mxu0 0.0
      %1518 = vmatmul.mubr.f32.gmra.mxu0 %v1299
      %v1519 = vpop.f32.mrf.mxu0
      %v1520 = vadd.f32 0.0, %v1519
      %v1521 = vpop.f32.mrf.mxu0
      %1522 = vmatprep.mubr.f32.mxu0 0.0
      %1523 = vmatmul.mubr.f32.gmra.mxu0 %v1302
      %v1524 = vpop.f32.mrf.mxu0
      %v1525 = vadd.f32 0.0, %v1524
      %v1526 = vpop.f32.mrf.mxu0
      %1527 = vmatprep.mubr.f32.mxu0 0.0
      %1528 = vmatmul.mubr.f32.gmra.mxu0 %v1305
      %v1529 = vpop.f32.mrf.mxu0
      %v1530 = vadd.f32 0.0, %v1529
      %v1531 = vpop.f32.mrf.mxu0
      %1532 = vmatprep.mubr.f32.mxu0 0.0
      %1533 = vmatmul.mubr.f32.gmra.mxu0 %v1308
      %v1534 = vpop.f32.mrf.mxu0
      %v1535 = vadd.f32 0.0, %v1534
      %v1536 = vpop.f32.mrf.mxu0
      %1537 = vdwg.mxu0
      %v1538 = vadd.f32 %v928, %v1380
      %v1539 = vadd.f32 %v933, %v1385
      %v1540 = vadd.f32 %v938, %v1390
      %v1541 = vadd.f32 %v943, %v1395
      %v1542 = vadd.f32 %v948, %v1400
      %v1543 = vadd.f32 %v953, %v1405
      %v1544 = vadd.f32 %v958, %v1410
      %v1545 = vadd.f32 %v963, %v1415
      %v1546 = vadd.f32 %v968, %v1420
      %v1547 = vadd.f32 %v973, %v1425
      %v1548 = vadd.f32 %v978, %v1430
      %v1549 = vadd.f32 %v983, %v1435
      %v1550 = vadd.f32 %v988, %v1440
      %v1551 = vadd.f32 %v993, %v1445
      %v1552 = vadd.f32 %v998, %v1450
      %v1553 = vadd.f32 %v1003, %v1455
      %v1554 = vadd.f32 %v1008, %v1460
      %v1555 = vadd.f32 %v1013, %v1465
      %v1556 = vadd.f32 %v1018, %v1470
      %v1557 = vadd.f32 %v1023, %v1475
      %v1558 = vadd.f32 %v1028, %v1480
      %v1559 = vadd.f32 %v1033, %v1485
      %v1560 = vadd.f32 %v1038, %v1490
      %v1561 = vadd.f32 %v1043, %v1495
      %v1562 = vadd.f32 %v1048, %v1500
      %v1563 = vadd.f32 %v1053, %v1505
      %v1564 = vadd.f32 %v1058, %v1510
      %v1565 = vadd.f32 %v1063, %v1515
      %v1566 = vadd.f32 %v1068, %v1520
      %v1567 = vadd.f32 %v1073, %v1525
      %v1568 = vadd.f32 %v1078, %v1530
      %v1569 = vadd.f32 %v1083, %v1535
      %s1570 = scalar_lea.vmem %s165, 24
      %v1571 = vld [vmem:[%s1570] sm:$0xff]
      %v1572 = vld [vmem:[%s1570 + $0x8] sm:$0xff]
      %v1573 = vld [vmem:[%s1570 + $0x18] sm:$0xff]
      %v1574 = vld [vmem:[%s1570 + $0x20] sm:$0xff]
      %v1575 = vld [vmem:[%s1570 + $0x30] sm:$0xff]
      %v1576 = vld [vmem:[%s1570 + $0x38] sm:$0xff]
      %v1577 = vld [vmem:[%s1570 + $0x48] sm:$0xff]
      %v1578 = vld [vmem:[%s1570 + $0x50] sm:$0xff]
      %v1579 = vld [vmem:[%s1570 + $0x60] sm:$0xff]
      %v1580 = vld [vmem:[%s1570 + $0x68] sm:$0xff]
      %v1581 = vld [vmem:[%s1570 + $0x78] sm:$0xff]
      %v1582 = vld [vmem:[%s1570 + $0x80] sm:$0xff]
      %v1583 = vld [vmem:[%s1570 + $0x90] sm:$0xff]
      %v1584 = vld [vmem:[%s1570 + $0x98] sm:$0xff]
      %v1585 = vld [vmem:[%s1570 + $0xa8] sm:$0xff]
      %v1586 = vld [vmem:[%s1570 + $0xb0] sm:$0xff]
      %v1587 = vld [vmem:[%s1570 + $0xc0] sm:$0xff]
      %v1588 = vld [vmem:[%s1570 + $0xc8] sm:$0xff]
      %v1589 = vld [vmem:[%s1570 + $0xd8] sm:$0xff]
      %v1590 = vld [vmem:[%s1570 + $0xe0] sm:$0xff]
      %v1591 = vld [vmem:[%s1570 + $0xf0] sm:$0xff]
      %v1592 = vld [vmem:[%s1570 + $0xf8] sm:$0xff]
      %v1593 = vld [vmem:[%s1570 + $0x108] sm:$0xff]
      %v1594 = vld [vmem:[%s1570 + $0x110] sm:$0xff]
      %v1595 = vld [vmem:[%s1570 + $0x120] sm:$0xff]
      %v1596 = vld [vmem:[%s1570 + $0x128] sm:$0xff]
      %v1597 = vld [vmem:[%s1570 + $0x138] sm:$0xff]
      %v1598 = vld [vmem:[%s1570 + $0x140] sm:$0xff]
      %v1599 = vld [vmem:[%s1570 + $0x150] sm:$0xff]
      %v1600 = vld [vmem:[%s1570 + $0x158] sm:$0xff]
      %v1601 = vld [vmem:[%s1570 + $0x168] sm:$0xff]
      %v1602 = vld [vmem:[%s1570 + $0x170] sm:$0xff]
      %vm1603 = vcmp.ge.f32.partialorder %v1571, 0.0
      %vm1604 = vcmp.ge.f32.partialorder %v1572, 0.0
      %vm1605 = vcmp.ge.f32.partialorder %v1573, 0.0
      %vm1606 = vcmp.ge.f32.partialorder %v1574, 0.0
      %vm1607 = vcmp.ge.f32.partialorder %v1575, 0.0
      %vm1608 = vcmp.ge.f32.partialorder %v1576, 0.0
      %vm1609 = vcmp.ge.f32.partialorder %v1577, 0.0
      %vm1610 = vcmp.ge.f32.partialorder %v1578, 0.0
      %vm1611 = vcmp.ge.f32.partialorder %v1579, 0.0
      %vm1612 = vcmp.ge.f32.partialorder %v1580, 0.0
      %vm1613 = vcmp.ge.f32.partialorder %v1581, 0.0
      %vm1614 = vcmp.ge.f32.partialorder %v1582, 0.0
      %vm1615 = vcmp.ge.f32.partialorder %v1583, 0.0
      %vm1616 = vcmp.ge.f32.partialorder %v1584, 0.0
      %vm1617 = vcmp.ge.f32.partialorder %v1585, 0.0
      %vm1618 = vcmp.ge.f32.partialorder %v1586, 0.0
      %vm1619 = vcmp.ge.f32.partialorder %v1587, 0.0
      %vm1620 = vcmp.ge.f32.partialorder %v1588, 0.0
      %vm1621 = vcmp.ge.f32.partialorder %v1589, 0.0
      %vm1622 = vcmp.ge.f32.partialorder %v1590, 0.0
      %vm1623 = vcmp.ge.f32.partialorder %v1591, 0.0
      %vm1624 = vcmp.ge.f32.partialorder %v1592, 0.0
      %vm1625 = vcmp.ge.f32.partialorder %v1593, 0.0
      %vm1626 = vcmp.ge.f32.partialorder %v1594, 0.0
      %vm1627 = vcmp.ge.f32.partialorder %v1595, 0.0
      %vm1628 = vcmp.ge.f32.partialorder %v1596, 0.0
      %vm1629 = vcmp.ge.f32.partialorder %v1597, 0.0
      %vm1630 = vcmp.ge.f32.partialorder %v1598, 0.0
      %vm1631 = vcmp.ge.f32.partialorder %v1599, 0.0
      %vm1632 = vcmp.ge.f32.partialorder %v1600, 0.0
      %vm1633 = vcmp.ge.f32.partialorder %v1601, 0.0
      %vm1634 = vcmp.ge.f32.partialorder %v1602, 0.0
      %v1635 = vmul.f32 %v1571, 0.2
      %v1636 = vmul.f32 %v1572, 0.2
      %v1637 = vmul.f32 %v1573, 0.2
      %v1638 = vmul.f32 %v1574, 0.2
      %v1639 = vmul.f32 %v1575, 0.2
      %v1640 = vmul.f32 %v1576, 0.2
      %v1641 = vmul.f32 %v1577, 0.2
      %v1642 = vmul.f32 %v1578, 0.2
      %v1643 = vmul.f32 %v1579, 0.2
      %v1644 = vmul.f32 %v1580, 0.2
      %v1645 = vmul.f32 %v1581, 0.2
      %v1646 = vmul.f32 %v1582, 0.2
      %v1647 = vmul.f32 %v1583, 0.2
      %v1648 = vmul.f32 %v1584, 0.2
      %v1649 = vmul.f32 %v1585, 0.2
      %v1650 = vmul.f32 %v1586, 0.2
      %v1651 = vmul.f32 %v1587, 0.2
      %v1652 = vmul.f32 %v1588, 0.2
      %v1653 = vmul.f32 %v1589, 0.2
      %v1654 = vmul.f32 %v1590, 0.2
      %v1655 = vmul.f32 %v1591, 0.2
      %v1656 = vmul.f32 %v1592, 0.2
      %v1657 = vmul.f32 %v1593, 0.2
      %v1658 = vmul.f32 %v1594, 0.2
      %v1659 = vmul.f32 %v1595, 0.2
      %v1660 = vmul.f32 %v1596, 0.2
      %v1661 = vmul.f32 %v1597, 0.2
      %v1662 = vmul.f32 %v1598, 0.2
      %v1663 = vmul.f32 %v1599, 0.2
      %v1664 = vmul.f32 %v1600, 0.2
      %v1665 = vmul.f32 %v1601, 0.2
      %v1666 = vmul.f32 %v1602, 0.2
      %v1667 = vsel %vm1603, %v1571, %v1635
      %v1668 = vsel %vm1604, %v1572, %v1636
      %v1669 = vsel %vm1605, %v1573, %v1637
      %v1670 = vsel %vm1606, %v1574, %v1638
      %v1671 = vsel %vm1607, %v1575, %v1639
      %v1672 = vsel %vm1608, %v1576, %v1640
      %v1673 = vsel %vm1609, %v1577, %v1641
      %v1674 = vsel %vm1610, %v1578, %v1642
      %v1675 = vsel %vm1611, %v1579, %v1643
      %v1676 = vsel %vm1612, %v1580, %v1644
      %v1677 = vsel %vm1613, %v1581, %v1645
      %v1678 = vsel %vm1614, %v1582, %v1646
      %v1679 = vsel %vm1615, %v1583, %v1647
      %v1680 = vsel %vm1616, %v1584, %v1648
      %v1681 = vsel %vm1617, %v1585, %v1649
      %v1682 = vsel %vm1618, %v1586, %v1650
      %v1683 = vsel %vm1619, %v1587, %v1651
      %v1684 = vsel %vm1620, %v1588, %v1652
      %v1685 = vsel %vm1621, %v1589, %v1653
      %v1686 = vsel %vm1622, %v1590, %v1654
      %v1687 = vsel %vm1623, %v1591, %v1655
      %v1688 = vsel %vm1624, %v1592, %v1656
      %v1689 = vsel %vm1625, %v1593, %v1657
      %v1690 = vsel %vm1626, %v1594, %v1658
      %v1691 = vsel %vm1627, %v1595, %v1659
      %v1692 = vsel %vm1628, %v1596, %v1660
      %v1693 = vsel %vm1629, %v1597, %v1661
      %v1694 = vsel %vm1630, %v1598, %v1662
      %v1695 = vsel %vm1631, %v1599, %v1663
      %v1696 = vsel %vm1632, %v1600, %v1664
      %v1697 = vsel %vm1633, %v1601, %v1665
      %v1698 = vsel %vm1634, %v1602, %v1666
      %v1700 = vsel %vm436, %v1667, 0
      %v1703 = vsel %vm436, %v1668, 0
      %v1706 = vsel %vm436, %v1669, 0
      %v1709 = vsel %vm436, %v1670, 0
      %v1712 = vsel %vm436, %v1671, 0
      %v1715 = vsel %vm436, %v1672, 0
      %v1718 = vsel %vm436, %v1673, 0
      %v1721 = vsel %vm436, %v1674, 0
      %v1724 = vsel %vm436, %v1675, 0
      %v1727 = vsel %vm436, %v1676, 0
      %v1730 = vsel %vm436, %v1677, 0
      %v1733 = vsel %vm436, %v1678, 0
      %v1736 = vsel %vm436, %v1679, 0
      %v1739 = vsel %vm436, %v1680, 0
      %v1742 = vsel %vm436, %v1681, 0
      %v1745 = vsel %vm436, %v1682, 0
      %v1748 = vsel %vm436, %v1683, 0
      %v1751 = vsel %vm436, %v1684, 0
      %v1754 = vsel %vm436, %v1685, 0
      %v1757 = vsel %vm436, %v1686, 0
      %v1760 = vsel %vm436, %v1687, 0
      %v1763 = vsel %vm436, %v1688, 0
      %v1766 = vsel %vm436, %v1689, 0
      %v1769 = vsel %vm436, %v1690, 0
      %v1772 = vsel %vm436, %v1691, 0
      %v1775 = vsel %vm436, %v1692, 0
      %v1778 = vsel %vm436, %v1693, 0
      %v1781 = vsel %vm436, %v1694, 0
      %v1784 = vsel %vm436, %v1695, 0
      %v1787 = vsel %vm436, %v1696, 0
      %v1790 = vsel %vm436, %v1697, 0
      %v1793 = vsel %vm436, %v1698, 0
      %v1796 = vsel %vm533, %v174, 0
      %1798 = vmatprep.subr.mxu0 0.0
      %1799 = vmatpush1.msra.mxu0 0.0
      %1800 = vmatprep.subr.mxu0 0.0
      %1801 = vmatpush1.msra.mxu0 0.0
      %1802 = vmatprep.subr.mxu0 0.0
      %1803 = vmatpush1.msra.mxu0 0.0
      %1804 = vmatprep.subr.mxu0 0.0
      %1805 = vmatpush1.msra.mxu0 0.0
      %1806 = vmatprep.subr.mxu0 0.0
      %1807 = vmatpush1.msra.mxu0 0.0
      %1808 = vmatprep.subr.mxu0 0.0
      %1809 = vmatpush1.msra.mxu0 0.0
      %1810 = vmatprep.subr.mxu0 0.0
      %1811 = vmatpush1.msra.mxu0 0.0
      %1812 = vmatprep.subr.mxu0 0.0
      %1813 = vmatpush1.msra.mxu0 0.0
      %1814 = vmatprep.subr.mxu0 0.0
      %1815 = vmatpush1.msra.mxu0 0.0
      %1816 = vmatprep.subr.mxu0 0.0
      %1817 = vmatpush1.msra.mxu0 0.0
      %1818 = vmatprep.subr.mxu0 0.0
      %1819 = vmatpush1.msra.mxu0 0.0
      %1820 = vmatprep.subr.mxu0 0.0
      %1821 = vmatpush1.msra.mxu0 0.0
      %1822 = vmatprep.subr.mxu0 0.0
      %1823 = vmatpush1.msra.mxu0 0.0
      %1824 = vmatprep.subr.mxu0 0.0
      %1825 = vmatpush1.msra.mxu0 0.0
      %1826 = vmatprep.subr.mxu0 0.0
      %1827 = vmatpush1.msra.mxu0 0.0
      %1828 = vmatprep.subr.mxu0 0.0
      %1829 = vmatpush1.msra.mxu0 %v1796
      %1830 = vmatprep.subr.mxu0 0.0
      %1831 = vmatpush2.msra.mxu0 0.0
      %1832 = vmatprep.subr.mxu0 0.0
      %1833 = vmatpush2.msra.mxu0 0.0
      %1834 = vmatprep.subr.mxu0 0.0
      %1835 = vmatpush2.msra.mxu0 0.0
      %1836 = vmatprep.subr.mxu0 0.0
      %1837 = vmatpush2.msra.mxu0 0.0
      %1838 = vmatprep.subr.mxu0 0.0
      %1839 = vmatpush2.msra.mxu0 0.0
      %1840 = vmatprep.subr.mxu0 0.0
      %1841 = vmatpush2.msra.mxu0 0.0
      %1842 = vmatprep.subr.mxu0 0.0
      %1843 = vmatpush2.msra.mxu0 0.0
      %1844 = vmatprep.subr.mxu0 0.0
      %1845 = vmatpush2.msra.mxu0 0.0
      %1846 = vmatprep.subr.mxu0 0.0
      %1847 = vmatpush2.msra.mxu0 0.0
      %1848 = vmatprep.subr.mxu0 0.0
      %1849 = vmatpush2.msra.mxu0 0.0
      %1850 = vmatprep.subr.mxu0 0.0
      %1851 = vmatpush2.msra.mxu0 0.0
      %1852 = vmatprep.subr.mxu0 0.0
      %1853 = vmatpush2.msra.mxu0 0.0
      %1854 = vmatprep.subr.mxu0 0.0
      %1855 = vmatpush2.msra.mxu0 0.0
      %1856 = vmatprep.subr.mxu0 0.0
      %1857 = vmatpush2.msra.mxu0 0.0
      %1858 = vmatprep.subr.mxu0 0.0
      %1859 = vmatpush2.msra.mxu0 0.0
      %1860 = vmatprep.subr.mxu0 0.0
      %1861 = vmatpush2.msra.mxu0 0.0
      %1862 = vmatprep.mubr.f32.mxu0 0.0
      %1863 = vmatmul.mubr.f32.gmra.mxu0 %v1700
      %v1864 = vpop.f32.mrf.mxu0
      %v1865 = vadd.f32 0.0, %v1864
      %v1866 = vpop.f32.mrf.mxu0
      %1867 = vmatprep.mubr.f32.mxu0 0.0
      %1868 = vmatmul.mubr.f32.gmra.mxu0 %v1703
      %v1869 = vpop.f32.mrf.mxu0
      %v1870 = vadd.f32 0.0, %v1869
      %v1871 = vpop.f32.mrf.mxu0
      %1872 = vmatprep.mubr.f32.mxu0 0.0
      %1873 = vmatmul.mubr.f32.gmra.mxu0 %v1706
      %v1874 = vpop.f32.mrf.mxu0
      %v1875 = vadd.f32 0.0, %v1874
      %v1876 = vpop.f32.mrf.mxu0
      %1877 = vmatprep.mubr.f32.mxu0 0.0
      %1878 = vmatmul.mubr.f32.gmra.mxu0 %v1709
      %v1879 = vpop.f32.mrf.mxu0
      %v1880 = vadd.f32 0.0, %v1879
      %v1881 = vpop.f32.mrf.mxu0
      %1882 = vmatprep.mubr.f32.mxu0 0.0
      %1883 = vmatmul.mubr.f32.gmra.mxu0 %v1712
      %v1884 = vpop.f32.mrf.mxu0
      %v1885 = vadd.f32 0.0, %v1884
      %v1886 = vpop.f32.mrf.mxu0
      %1887 = vmatprep.mubr.f32.mxu0 0.0
      %1888 = vmatmul.mubr.f32.gmra.mxu0 %v1715
      %v1889 = vpop.f32.mrf.mxu0
      %v1890 = vadd.f32 0.0, %v1889
      %v1891 = vpop.f32.mrf.mxu0
      %1892 = vmatprep.mubr.f32.mxu0 0.0
      %1893 = vmatmul.mubr.f32.gmra.mxu0 %v1718
      %v1894 = vpop.f32.mrf.mxu0
      %v1895 = vadd.f32 0.0, %v1894
      %v1896 = vpop.f32.mrf.mxu0
      %1897 = vmatprep.mubr.f32.mxu0 0.0
      %1898 = vmatmul.mubr.f32.gmra.mxu0 %v1721
      %v1899 = vpop.f32.mrf.mxu0
      %v1900 = vadd.f32 0.0, %v1899
      %v1901 = vpop.f32.mrf.mxu0
      %1902 = vmatprep.mubr.f32.mxu0 0.0
      %1903 = vmatmul.mubr.f32.gmra.mxu0 %v1724
      %v1904 = vpop.f32.mrf.mxu0
      %v1905 = vadd.f32 0.0, %v1904
      %v1906 = vpop.f32.mrf.mxu0
      %1907 = vmatprep.mubr.f32.mxu0 0.0
      %1908 = vmatmul.mubr.f32.gmra.mxu0 %v1727
      %v1909 = vpop.f32.mrf.mxu0
      %v1910 = vadd.f32 0.0, %v1909
      %v1911 = vpop.f32.mrf.mxu0
      %1912 = vmatprep.mubr.f32.mxu0 0.0
      %1913 = vmatmul.mubr.f32.gmra.mxu0 %v1730
      %v1914 = vpop.f32.mrf.mxu0
      %v1915 = vadd.f32 0.0, %v1914
      %v1916 = vpop.f32.mrf.mxu0
      %1917 = vmatprep.mubr.f32.mxu0 0.0
      %1918 = vmatmul.mubr.f32.gmra.mxu0 %v1733
      %v1919 = vpop.f32.mrf.mxu0
      %v1920 = vadd.f32 0.0, %v1919
      %v1921 = vpop.f32.mrf.mxu0
      %1922 = vmatprep.mubr.f32.mxu0 0.0
      %1923 = vmatmul.mubr.f32.gmra.mxu0 %v1736
      %v1924 = vpop.f32.mrf.mxu0
      %v1925 = vadd.f32 0.0, %v1924
      %v1926 = vpop.f32.mrf.mxu0
      %1927 = vmatprep.mubr.f32.mxu0 0.0
      %1928 = vmatmul.mubr.f32.gmra.mxu0 %v1739
      %v1929 = vpop.f32.mrf.mxu0
      %v1930 = vadd.f32 0.0, %v1929
      %v1931 = vpop.f32.mrf.mxu0
      %1932 = vmatprep.mubr.f32.mxu0 0.0
      %1933 = vmatmul.mubr.f32.gmra.mxu0 %v1742
      %v1934 = vpop.f32.mrf.mxu0
      %v1935 = vadd.f32 0.0, %v1934
      %v1936 = vpop.f32.mrf.mxu0
      %1937 = vmatprep.mubr.f32.mxu0 0.0
      %1938 = vmatmul.mubr.f32.gmra.mxu0 %v1745
      %v1939 = vpop.f32.mrf.mxu0
      %v1940 = vadd.f32 0.0, %v1939
      %v1941 = vpop.f32.mrf.mxu0
      %1942 = vmatprep.mubr.f32.mxu0 0.0
      %1943 = vmatmul.mubr.f32.gmra.mxu0 %v1748
      %v1944 = vpop.f32.mrf.mxu0
      %v1945 = vadd.f32 0.0, %v1944
      %v1946 = vpop.f32.mrf.mxu0
      %1947 = vmatprep.mubr.f32.mxu0 0.0
      %1948 = vmatmul.mubr.f32.gmra.mxu0 %v1751
      %v1949 = vpop.f32.mrf.mxu0
      %v1950 = vadd.f32 0.0, %v1949
      %v1951 = vpop.f32.mrf.mxu0
      %1952 = vmatprep.mubr.f32.mxu0 0.0
      %1953 = vmatmul.mubr.f32.gmra.mxu0 %v1754
      %v1954 = vpop.f32.mrf.mxu0
      %v1955 = vadd.f32 0.0, %v1954
      %v1956 = vpop.f32.mrf.mxu0
      %1957 = vmatprep.mubr.f32.mxu0 0.0
      %1958 = vmatmul.mubr.f32.gmra.mxu0 %v1757
      %v1959 = vpop.f32.mrf.mxu0
      %v1960 = vadd.f32 0.0, %v1959
      %v1961 = vpop.f32.mrf.mxu0
      %1962 = vmatprep.mubr.f32.mxu0 0.0
      %1963 = vmatmul.mubr.f32.gmra.mxu0 %v1760
      %v1964 = vpop.f32.mrf.mxu0
      %v1965 = vadd.f32 0.0, %v1964
      %v1966 = vpop.f32.mrf.mxu0
      %1967 = vmatprep.mubr.f32.mxu0 0.0
      %1968 = vmatmul.mubr.f32.gmra.mxu0 %v1763
      %v1969 = vpop.f32.mrf.mxu0
      %v1970 = vadd.f32 0.0, %v1969
      %v1971 = vpop.f32.mrf.mxu0
      %1972 = vmatprep.mubr.f32.mxu0 0.0
      %1973 = vmatmul.mubr.f32.gmra.mxu0 %v1766
      %v1974 = vpop.f32.mrf.mxu0
      %v1975 = vadd.f32 0.0, %v1974
      %v1976 = vpop.f32.mrf.mxu0
      %1977 = vmatprep.mubr.f32.mxu0 0.0
      %1978 = vmatmul.mubr.f32.gmra.mxu0 %v1769
      %v1979 = vpop.f32.mrf.mxu0
      %v1980 = vadd.f32 0.0, %v1979
      %v1981 = vpop.f32.mrf.mxu0
      %1982 = vmatprep.mubr.f32.mxu0 0.0
      %1983 = vmatmul.mubr.f32.gmra.mxu0 %v1772
      %v1984 = vpop.f32.mrf.mxu0
      %v1985 = vadd.f32 0.0, %v1984
      %v1986 = vpop.f32.mrf.mxu0
      %1987 = vmatprep.mubr.f32.mxu0 0.0
      %1988 = vmatmul.mubr.f32.gmra.mxu0 %v1775
      %v1989 = vpop.f32.mrf.mxu0
      %v1990 = vadd.f32 0.0, %v1989
      %v1991 = vpop.f32.mrf.mxu0
      %1992 = vmatprep.mubr.f32.mxu0 0.0
      %1993 = vmatmul.mubr.f32.gmra.mxu0 %v1778
      %v1994 = vpop.f32.mrf.mxu0
      %v1995 = vadd.f32 0.0, %v1994
      %v1996 = vpop.f32.mrf.mxu0
      %1997 = vmatprep.mubr.f32.mxu0 0.0
      %1998 = vmatmul.mubr.f32.gmra.mxu0 %v1781
      %v1999 = vpop.f32.mrf.mxu0
      %v2000 = vadd.f32 0.0, %v1999
      %v2001 = vpop.f32.mrf.mxu0
      %2002 = vmatprep.mubr.f32.mxu0 0.0
      %2003 = vmatmul.mubr.f32.gmra.mxu0 %v1784
      %v2004 = vpop.f32.mrf.mxu0
      %v2005 = vadd.f32 0.0, %v2004
      %v2006 = vpop.f32.mrf.mxu0
      %2007 = vmatprep.mubr.f32.mxu0 0.0
      %2008 = vmatmul.mubr.f32.gmra.mxu0 %v1787
      %v2009 = vpop.f32.mrf.mxu0
      %v2010 = vadd.f32 0.0, %v2009
      %v2011 = vpop.f32.mrf.mxu0
      %2012 = vmatprep.mubr.f32.mxu0 0.0
      %2013 = vmatmul.mubr.f32.gmra.mxu0 %v1790
      %v2014 = vpop.f32.mrf.mxu0
      %v2015 = vadd.f32 0.0, %v2014
      %v2016 = vpop.f32.mrf.mxu0
      %2017 = vmatprep.mubr.f32.mxu0 0.0
      %2018 = vmatmul.mubr.f32.gmra.mxu0 %v1793
      %v2019 = vpop.f32.mrf.mxu0
      %v2020 = vadd.f32 0.0, %v2019
      %v2021 = vpop.f32.mrf.mxu0
      %2022 = vdwg.mxu0
      %v2023 = vadd.f32 %v1538, %v1865
      %v2024 = vadd.f32 %v1539, %v1870
      %v2025 = vadd.f32 %v1540, %v1875
      %v2026 = vadd.f32 %v1541, %v1880
      %v2027 = vadd.f32 %v1542, %v1885
      %v2028 = vadd.f32 %v1543, %v1890
      %v2029 = vadd.f32 %v1544, %v1895
      %v2030 = vadd.f32 %v1545, %v1900
      %v2031 = vadd.f32 %v1546, %v1905
      %v2032 = vadd.f32 %v1547, %v1910
      %v2033 = vadd.f32 %v1548, %v1915
      %v2034 = vadd.f32 %v1549, %v1920
      %v2035 = vadd.f32 %v1550, %v1925
      %v2036 = vadd.f32 %v1551, %v1930
      %v2037 = vadd.f32 %v1552, %v1935
      %v2038 = vadd.f32 %v1553, %v1940
      %v2039 = vadd.f32 %v1554, %v1945
      %v2040 = vadd.f32 %v1555, %v1950
      %v2041 = vadd.f32 %v1556, %v1955
      %v2042 = vadd.f32 %v1557, %v1960
      %v2043 = vadd.f32 %v1558, %v1965
      %v2044 = vadd.f32 %v1559, %v1970
      %v2045 = vadd.f32 %v1560, %v1975
      %v2046 = vadd.f32 %v1561, %v1980
      %v2047 = vadd.f32 %v1562, %v1985
      %v2048 = vadd.f32 %v1563, %v1990
      %v2049 = vadd.f32 %v1564, %v1995
      %v2050 = vadd.f32 %v1565, %v2000
      %v2051 = vadd.f32 %v1566, %v2005
      %v2052 = vadd.f32 %v1567, %v2010
      %v2053 = vadd.f32 %v1568, %v2015
      %v2054 = vadd.f32 %v1569, %v2020
      %v2055 = vld [vmem:[%s1570 + $0x1] sm:$0xff]
      %v2056 = vld [vmem:[%s1570 + $0x9] sm:$0xff]
      %v2057 = vld [vmem:[%s1570 + $0x19] sm:$0xff]
      %v2058 = vld [vmem:[%s1570 + $0x21] sm:$0xff]
      %v2059 = vld [vmem:[%s1570 + $0x31] sm:$0xff]
      %v2060 = vld [vmem:[%s1570 + $0x39] sm:$0xff]
      %v2061 = vld [vmem:[%s1570 + $0x49] sm:$0xff]
      %v2062 = vld [vmem:[%s1570 + $0x51] sm:$0xff]
      %v2063 = vld [vmem:[%s1570 + $0x61] sm:$0xff]
      %v2064 = vld [vmem:[%s1570 + $0x69] sm:$0xff]
      %v2065 = vld [vmem:[%s1570 + $0x79] sm:$0xff]
      %v2066 = vld [vmem:[%s1570 + $0x81] sm:$0xff]
      %v2067 = vld [vmem:[%s1570 + $0x91] sm:$0xff]
      %v2068 = vld [vmem:[%s1570 + $0x99] sm:$0xff]
      %v2069 = vld [vmem:[%s1570 + $0xa9] sm:$0xff]
      %v2070 = vld [vmem:[%s1570 + $0xb1] sm:$0xff]
      %v2071 = vld [vmem:[%s1570 + $0xc1] sm:$0xff]
      %v2072 = vld [vmem:[%s1570 + $0xc9] sm:$0xff]
      %v2073 = vld [vmem:[%s1570 + $0xd9] sm:$0xff]
      %v2074 = vld [vmem:[%s1570 + $0xe1] sm:$0xff]
      %v2075 = vld [vmem:[%s1570 + $0xf1] sm:$0xff]
      %v2076 = vld [vmem:[%s1570 + $0xf9] sm:$0xff]
      %v2077 = vld [vmem:[%s1570 + $0x109] sm:$0xff]
      %v2078 = vld [vmem:[%s1570 + $0x111] sm:$0xff]
      %v2079 = vld [vmem:[%s1570 + $0x121] sm:$0xff]
      %v2080 = vld [vmem:[%s1570 + $0x129] sm:$0xff]
      %v2081 = vld [vmem:[%s1570 + $0x139] sm:$0xff]
      %v2082 = vld [vmem:[%s1570 + $0x141] sm:$0xff]
      %v2083 = vld [vmem:[%s1570 + $0x151] sm:$0xff]
      %v2084 = vld [vmem:[%s1570 + $0x159] sm:$0xff]
      %v2085 = vld [vmem:[%s1570 + $0x169] sm:$0xff]
      %v2086 = vld [vmem:[%s1570 + $0x171] sm:$0xff]
      %vm2087 = vcmp.ge.f32.partialorder %v2055, 0.0
      %vm2088 = vcmp.ge.f32.partialorder %v2056, 0.0
      %vm2089 = vcmp.ge.f32.partialorder %v2057, 0.0
      %vm2090 = vcmp.ge.f32.partialorder %v2058, 0.0
      %vm2091 = vcmp.ge.f32.partialorder %v2059, 0.0
      %vm2092 = vcmp.ge.f32.partialorder %v2060, 0.0
      %vm2093 = vcmp.ge.f32.partialorder %v2061, 0.0
      %vm2094 = vcmp.ge.f32.partialorder %v2062, 0.0
      %vm2095 = vcmp.ge.f32.partialorder %v2063, 0.0
      %vm2096 = vcmp.ge.f32.partialorder %v2064, 0.0
      %vm2097 = vcmp.ge.f32.partialorder %v2065, 0.0
      %vm2098 = vcmp.ge.f32.partialorder %v2066, 0.0
      %vm2099 = vcmp.ge.f32.partialorder %v2067, 0.0
      %vm2100 = vcmp.ge.f32.partialorder %v2068, 0.0
      %vm2101 = vcmp.ge.f32.partialorder %v2069, 0.0
      %vm2102 = vcmp.ge.f32.partialorder %v2070, 0.0
      %vm2103 = vcmp.ge.f32.partialorder %v2071, 0.0
      %vm2104 = vcmp.ge.f32.partialorder %v2072, 0.0
      %vm2105 = vcmp.ge.f32.partialorder %v2073, 0.0
      %vm2106 = vcmp.ge.f32.partialorder %v2074, 0.0
      %vm2107 = vcmp.ge.f32.partialorder %v2075, 0.0
      %vm2108 = vcmp.ge.f32.partialorder %v2076, 0.0
      %vm2109 = vcmp.ge.f32.partialorder %v2077, 0.0
      %vm2110 = vcmp.ge.f32.partialorder %v2078, 0.0
      %vm2111 = vcmp.ge.f32.partialorder %v2079, 0.0
      %vm2112 = vcmp.ge.f32.partialorder %v2080, 0.0
      %vm2113 = vcmp.ge.f32.partialorder %v2081, 0.0
      %vm2114 = vcmp.ge.f32.partialorder %v2082, 0.0
      %vm2115 = vcmp.ge.f32.partialorder %v2083, 0.0
      %vm2116 = vcmp.ge.f32.partialorder %v2084, 0.0
      %vm2117 = vcmp.ge.f32.partialorder %v2085, 0.0
      %vm2118 = vcmp.ge.f32.partialorder %v2086, 0.0
      %v2119 = vmul.f32 %v2055, 0.2
      %v2120 = vmul.f32 %v2056, 0.2
      %v2121 = vmul.f32 %v2057, 0.2
      %v2122 = vmul.f32 %v2058, 0.2
      %v2123 = vmul.f32 %v2059, 0.2
      %v2124 = vmul.f32 %v2060, 0.2
      %v2125 = vmul.f32 %v2061, 0.2
      %v2126 = vmul.f32 %v2062, 0.2
      %v2127 = vmul.f32 %v2063, 0.2
      %v2128 = vmul.f32 %v2064, 0.2
      %v2129 = vmul.f32 %v2065, 0.2
      %v2130 = vmul.f32 %v2066, 0.2
      %v2131 = vmul.f32 %v2067, 0.2
      %v2132 = vmul.f32 %v2068, 0.2
      %v2133 = vmul.f32 %v2069, 0.2
      %v2134 = vmul.f32 %v2070, 0.2
      %v2135 = vmul.f32 %v2071, 0.2
      %v2136 = vmul.f32 %v2072, 0.2
      %v2137 = vmul.f32 %v2073, 0.2
      %v2138 = vmul.f32 %v2074, 0.2
      %v2139 = vmul.f32 %v2075, 0.2
      %v2140 = vmul.f32 %v2076, 0.2
      %v2141 = vmul.f32 %v2077, 0.2
      %v2142 = vmul.f32 %v2078, 0.2
      %v2143 = vmul.f32 %v2079, 0.2
      %v2144 = vmul.f32 %v2080, 0.2
      %v2145 = vmul.f32 %v2081, 0.2
      %v2146 = vmul.f32 %v2082, 0.2
      %v2147 = vmul.f32 %v2083, 0.2
      %v2148 = vmul.f32 %v2084, 0.2
      %v2149 = vmul.f32 %v2085, 0.2
      %v2150 = vmul.f32 %v2086, 0.2
      %v2151 = vsel %vm2087, %v2055, %v2119
      %v2152 = vsel %vm2088, %v2056, %v2120
      %v2153 = vsel %vm2089, %v2057, %v2121
      %v2154 = vsel %vm2090, %v2058, %v2122
      %v2155 = vsel %vm2091, %v2059, %v2123
      %v2156 = vsel %vm2092, %v2060, %v2124
      %v2157 = vsel %vm2093, %v2061, %v2125
      %v2158 = vsel %vm2094, %v2062, %v2126
      %v2159 = vsel %vm2095, %v2063, %v2127
      %v2160 = vsel %vm2096, %v2064, %v2128
      %v2161 = vsel %vm2097, %v2065, %v2129
      %v2162 = vsel %vm2098, %v2066, %v2130
      %v2163 = vsel %vm2099, %v2067, %v2131
      %v2164 = vsel %vm2100, %v2068, %v2132
      %v2165 = vsel %vm2101, %v2069, %v2133
      %v2166 = vsel %vm2102, %v2070, %v2134
      %v2167 = vsel %vm2103, %v2071, %v2135
      %v2168 = vsel %vm2104, %v2072, %v2136
      %v2169 = vsel %vm2105, %v2073, %v2137
      %v2170 = vsel %vm2106, %v2074, %v2138
      %v2171 = vsel %vm2107, %v2075, %v2139
      %v2172 = vsel %vm2108, %v2076, %v2140
      %v2173 = vsel %vm2109, %v2077, %v2141
      %v2174 = vsel %vm2110, %v2078, %v2142
      %v2175 = vsel %vm2111, %v2079, %v2143
      %v2176 = vsel %vm2112, %v2080, %v2144
      %v2177 = vsel %vm2113, %v2081, %v2145
      %v2178 = vsel %vm2114, %v2082, %v2146
      %v2179 = vsel %vm2115, %v2083, %v2147
      %v2180 = vsel %vm2116, %v2084, %v2148
      %v2181 = vsel %vm2117, %v2085, %v2149
      %v2182 = vsel %vm2118, %v2086, %v2150
      %v2184 = vsel %vm436, %v2151, 0
      %v2187 = vsel %vm436, %v2152, 0
      %v2190 = vsel %vm436, %v2153, 0
      %v2193 = vsel %vm436, %v2154, 0
      %v2196 = vsel %vm436, %v2155, 0
      %v2199 = vsel %vm436, %v2156, 0
      %v2202 = vsel %vm436, %v2157, 0
      %v2205 = vsel %vm436, %v2158, 0
      %v2208 = vsel %vm436, %v2159, 0
      %v2211 = vsel %vm436, %v2160, 0
      %v2214 = vsel %vm436, %v2161, 0
      %v2217 = vsel %vm436, %v2162, 0
      %v2220 = vsel %vm436, %v2163, 0
      %v2223 = vsel %vm436, %v2164, 0
      %v2226 = vsel %vm436, %v2165, 0
      %v2229 = vsel %vm436, %v2166, 0
      %v2232 = vsel %vm436, %v2167, 0
      %v2235 = vsel %vm436, %v2168, 0
      %v2238 = vsel %vm436, %v2169, 0
      %v2241 = vsel %vm436, %v2170, 0
      %v2244 = vsel %vm436, %v2171, 0
      %v2247 = vsel %vm436, %v2172, 0
      %v2250 = vsel %vm436, %v2173, 0
      %v2253 = vsel %vm436, %v2174, 0
      %v2256 = vsel %vm436, %v2175, 0
      %v2259 = vsel %vm436, %v2176, 0
      %v2262 = vsel %vm436, %v2177, 0
      %v2265 = vsel %vm436, %v2178, 0
      %v2268 = vsel %vm436, %v2179, 0
      %v2271 = vsel %vm436, %v2180, 0
      %v2274 = vsel %vm436, %v2181, 0
      %v2277 = vsel %vm436, %v2182, 0
      %v2280 = vsel %vm533, %v175, 0
      %2282 = vmatprep.subr.mxu0 0.0
      %2283 = vmatpush1.msra.mxu0 0.0
      %2284 = vmatprep.subr.mxu0 0.0
      %2285 = vmatpush1.msra.mxu0 0.0
      %2286 = vmatprep.subr.mxu0 0.0
      %2287 = vmatpush1.msra.mxu0 0.0
      %2288 = vmatprep.subr.mxu0 0.0
      %2289 = vmatpush1.msra.mxu0 0.0
      %2290 = vmatprep.subr.mxu0 0.0
      %2291 = vmatpush1.msra.mxu0 0.0
      %2292 = vmatprep.subr.mxu0 0.0
      %2293 = vmatpush1.msra.mxu0 0.0
      %2294 = vmatprep.subr.mxu0 0.0
      %2295 = vmatpush1.msra.mxu0 0.0
      %2296 = vmatprep.subr.mxu0 0.0
      %2297 = vmatpush1.msra.mxu0 0.0
      %2298 = vmatprep.subr.mxu0 0.0
      %2299 = vmatpush1.msra.mxu0 0.0
      %2300 = vmatprep.subr.mxu0 0.0
      %2301 = vmatpush1.msra.mxu0 0.0
      %2302 = vmatprep.subr.mxu0 0.0
      %2303 = vmatpush1.msra.mxu0 0.0
      %2304 = vmatprep.subr.mxu0 0.0
      %2305 = vmatpush1.msra.mxu0 0.0
      %2306 = vmatprep.subr.mxu0 0.0
      %2307 = vmatpush1.msra.mxu0 0.0
      %2308 = vmatprep.subr.mxu0 0.0
      %2309 = vmatpush1.msra.mxu0 0.0
      %2310 = vmatprep.subr.mxu0 0.0
      %2311 = vmatpush1.msra.mxu0 0.0
      %2312 = vmatprep.subr.mxu0 0.0
      %2313 = vmatpush1.msra.mxu0 %v2280
      %2314 = vmatprep.subr.mxu0 0.0
      %2315 = vmatpush2.msra.mxu0 0.0
      %2316 = vmatprep.subr.mxu0 0.0
      %2317 = vmatpush2.msra.mxu0 0.0
      %2318 = vmatprep.subr.mxu0 0.0
      %2319 = vmatpush2.msra.mxu0 0.0
      %2320 = vmatprep.subr.mxu0 0.0
      %2321 = vmatpush2.msra.mxu0 0.0
      %2322 = vmatprep.subr.mxu0 0.0
      %2323 = vmatpush2.msra.mxu0 0.0
      %2324 = vmatprep.subr.mxu0 0.0
      %2325 = vmatpush2.msra.mxu0 0.0
      %2326 = vmatprep.subr.mxu0 0.0
      %2327 = vmatpush2.msra.mxu0 0.0
      %2328 = vmatprep.subr.mxu0 0.0
      %2329 = vmatpush2.msra.mxu0 0.0
      %2330 = vmatprep.subr.mxu0 0.0
      %2331 = vmatpush2.msra.mxu0 0.0
      %2332 = vmatprep.subr.mxu0 0.0
      %2333 = vmatpush2.msra.mxu0 0.0
      %2334 = vmatprep.subr.mxu0 0.0
      %2335 = vmatpush2.msra.mxu0 0.0
      %2336 = vmatprep.subr.mxu0 0.0
      %2337 = vmatpush2.msra.mxu0 0.0
      %2338 = vmatprep.subr.mxu0 0.0
      %2339 = vmatpush2.msra.mxu0 0.0
      %2340 = vmatprep.subr.mxu0 0.0
      %2341 = vmatpush2.msra.mxu0 0.0
      %2342 = vmatprep.subr.mxu0 0.0
      %2343 = vmatpush2.msra.mxu0 0.0
      %2344 = vmatprep.subr.mxu0 0.0
      %2345 = vmatpush2.msra.mxu0 0.0
      %2346 = vmatprep.mubr.f32.mxu0 0.0
      %2347 = vmatmul.mubr.f32.gmra.mxu0 %v2184
      %v2348 = vpop.f32.mrf.mxu0
      %v2349 = vadd.f32 0.0, %v2348
      %v2350 = vpop.f32.mrf.mxu0
      %2351 = vmatprep.mubr.f32.mxu0 0.0
      %2352 = vmatmul.mubr.f32.gmra.mxu0 %v2187
      %v2353 = vpop.f32.mrf.mxu0
      %v2354 = vadd.f32 0.0, %v2353
      %v2355 = vpop.f32.mrf.mxu0
      %2356 = vmatprep.mubr.f32.mxu0 0.0
      %2357 = vmatmul.mubr.f32.gmra.mxu0 %v2190
      %v2358 = vpop.f32.mrf.mxu0
      %v2359 = vadd.f32 0.0, %v2358
      %v2360 = vpop.f32.mrf.mxu0
      %2361 = vmatprep.mubr.f32.mxu0 0.0
      %2362 = vmatmul.mubr.f32.gmra.mxu0 %v2193
      %v2363 = vpop.f32.mrf.mxu0
      %v2364 = vadd.f32 0.0, %v2363
      %v2365 = vpop.f32.mrf.mxu0
      %2366 = vmatprep.mubr.f32.mxu0 0.0
      %2367 = vmatmul.mubr.f32.gmra.mxu0 %v2196
      %v2368 = vpop.f32.mrf.mxu0
      %v2369 = vadd.f32 0.0, %v2368
      %v2370 = vpop.f32.mrf.mxu0
      %2371 = vmatprep.mubr.f32.mxu0 0.0
      %2372 = vmatmul.mubr.f32.gmra.mxu0 %v2199
      %v2373 = vpop.f32.mrf.mxu0
      %v2374 = vadd.f32 0.0, %v2373
      %v2375 = vpop.f32.mrf.mxu0
      %2376 = vmatprep.mubr.f32.mxu0 0.0
      %2377 = vmatmul.mubr.f32.gmra.mxu0 %v2202
      %v2378 = vpop.f32.mrf.mxu0
      %v2379 = vadd.f32 0.0, %v2378
      %v2380 = vpop.f32.mrf.mxu0
      %2381 = vmatprep.mubr.f32.mxu0 0.0
      %2382 = vmatmul.mubr.f32.gmra.mxu0 %v2205
      %v2383 = vpop.f32.mrf.mxu0
      %v2384 = vadd.f32 0.0, %v2383
      %v2385 = vpop.f32.mrf.mxu0
      %2386 = vmatprep.mubr.f32.mxu0 0.0
      %2387 = vmatmul.mubr.f32.gmra.mxu0 %v2208
      %v2388 = vpop.f32.mrf.mxu0
      %v2389 = vadd.f32 0.0, %v2388
      %v2390 = vpop.f32.mrf.mxu0
      %2391 = vmatprep.mubr.f32.mxu0 0.0
      %2392 = vmatmul.mubr.f32.gmra.mxu0 %v2211
      %v2393 = vpop.f32.mrf.mxu0
      %v2394 = vadd.f32 0.0, %v2393
      %v2395 = vpop.f32.mrf.mxu0
      %2396 = vmatprep.mubr.f32.mxu0 0.0
      %2397 = vmatmul.mubr.f32.gmra.mxu0 %v2214
      %v2398 = vpop.f32.mrf.mxu0
      %v2399 = vadd.f32 0.0, %v2398
      %v2400 = vpop.f32.mrf.mxu0
      %2401 = vmatprep.mubr.f32.mxu0 0.0
      %2402 = vmatmul.mubr.f32.gmra.mxu0 %v2217
      %v2403 = vpop.f32.mrf.mxu0
      %v2404 = vadd.f32 0.0, %v2403
      %v2405 = vpop.f32.mrf.mxu0
      %2406 = vmatprep.mubr.f32.mxu0 0.0
      %2407 = vmatmul.mubr.f32.gmra.mxu0 %v2220
      %v2408 = vpop.f32.mrf.mxu0
      %v2409 = vadd.f32 0.0, %v2408
      %v2410 = vpop.f32.mrf.mxu0
      %2411 = vmatprep.mubr.f32.mxu0 0.0
      %2412 = vmatmul.mubr.f32.gmra.mxu0 %v2223
      %v2413 = vpop.f32.mrf.mxu0
      %v2414 = vadd.f32 0.0, %v2413
      %v2415 = vpop.f32.mrf.mxu0
      %2416 = vmatprep.mubr.f32.mxu0 0.0
      %2417 = vmatmul.mubr.f32.gmra.mxu0 %v2226
      %v2418 = vpop.f32.mrf.mxu0
      %v2419 = vadd.f32 0.0, %v2418
      %v2420 = vpop.f32.mrf.mxu0
      %2421 = vmatprep.mubr.f32.mxu0 0.0
      %2422 = vmatmul.mubr.f32.gmra.mxu0 %v2229
      %v2423 = vpop.f32.mrf.mxu0
      %v2424 = vadd.f32 0.0, %v2423
      %v2425 = vpop.f32.mrf.mxu0
      %2426 = vmatprep.mubr.f32.mxu0 0.0
      %2427 = vmatmul.mubr.f32.gmra.mxu0 %v2232
      %v2428 = vpop.f32.mrf.mxu0
      %v2429 = vadd.f32 0.0, %v2428
      %v2430 = vpop.f32.mrf.mxu0
      %2431 = vmatprep.mubr.f32.mxu0 0.0
      %2432 = vmatmul.mubr.f32.gmra.mxu0 %v2235
      %v2433 = vpop.f32.mrf.mxu0
      %v2434 = vadd.f32 0.0, %v2433
      %v2435 = vpop.f32.mrf.mxu0
      %2436 = vmatprep.mubr.f32.mxu0 0.0
      %2437 = vmatmul.mubr.f32.gmra.mxu0 %v2238
      %v2438 = vpop.f32.mrf.mxu0
      %v2439 = vadd.f32 0.0, %v2438
      %v2440 = vpop.f32.mrf.mxu0
      %2441 = vmatprep.mubr.f32.mxu0 0.0
      %2442 = vmatmul.mubr.f32.gmra.mxu0 %v2241
      %v2443 = vpop.f32.mrf.mxu0
      %v2444 = vadd.f32 0.0, %v2443
      %v2445 = vpop.f32.mrf.mxu0
      %2446 = vmatprep.mubr.f32.mxu0 0.0
      %2447 = vmatmul.mubr.f32.gmra.mxu0 %v2244
      %v2448 = vpop.f32.mrf.mxu0
      %v2449 = vadd.f32 0.0, %v2448
      %v2450 = vpop.f32.mrf.mxu0
      %2451 = vmatprep.mubr.f32.mxu0 0.0
      %2452 = vmatmul.mubr.f32.gmra.mxu0 %v2247
      %v2453 = vpop.f32.mrf.mxu0
      %v2454 = vadd.f32 0.0, %v2453
      %v2455 = vpop.f32.mrf.mxu0
      %2456 = vmatprep.mubr.f32.mxu0 0.0
      %2457 = vmatmul.mubr.f32.gmra.mxu0 %v2250
      %v2458 = vpop.f32.mrf.mxu0
      %v2459 = vadd.f32 0.0, %v2458
      %v2460 = vpop.f32.mrf.mxu0
      %2461 = vmatprep.mubr.f32.mxu0 0.0
      %2462 = vmatmul.mubr.f32.gmra.mxu0 %v2253
      %v2463 = vpop.f32.mrf.mxu0
      %v2464 = vadd.f32 0.0, %v2463
      %v2465 = vpop.f32.mrf.mxu0
      %2466 = vmatprep.mubr.f32.mxu0 0.0
      %2467 = vmatmul.mubr.f32.gmra.mxu0 %v2256
      %v2468 = vpop.f32.mrf.mxu0
      %v2469 = vadd.f32 0.0, %v2468
      %v2470 = vpop.f32.mrf.mxu0
      %2471 = vmatprep.mubr.f32.mxu0 0.0
      %2472 = vmatmul.mubr.f32.gmra.mxu0 %v2259
      %v2473 = vpop.f32.mrf.mxu0
      %v2474 = vadd.f32 0.0, %v2473
      %v2475 = vpop.f32.mrf.mxu0
      %2476 = vmatprep.mubr.f32.mxu0 0.0
      %2477 = vmatmul.mubr.f32.gmra.mxu0 %v2262
      %v2478 = vpop.f32.mrf.mxu0
      %v2479 = vadd.f32 0.0, %v2478
      %v2480 = vpop.f32.mrf.mxu0
      %2481 = vmatprep.mubr.f32.mxu0 0.0
      %2482 = vmatmul.mubr.f32.gmra.mxu0 %v2265
      %v2483 = vpop.f32.mrf.mxu0
      %v2484 = vadd.f32 0.0, %v2483
      %v2485 = vpop.f32.mrf.mxu0
      %2486 = vmatprep.mubr.f32.mxu0 0.0
      %2487 = vmatmul.mubr.f32.gmra.mxu0 %v2268
      %v2488 = vpop.f32.mrf.mxu0
      %v2489 = vadd.f32 0.0, %v2488
      %v2490 = vpop.f32.mrf.mxu0
      %2491 = vmatprep.mubr.f32.mxu0 0.0
      %2492 = vmatmul.mubr.f32.gmra.mxu0 %v2271
      %v2493 = vpop.f32.mrf.mxu0
      %v2494 = vadd.f32 0.0, %v2493
      %v2495 = vpop.f32.mrf.mxu0
      %2496 = vmatprep.mubr.f32.mxu0 0.0
      %2497 = vmatmul.mubr.f32.gmra.mxu0 %v2274
      %v2498 = vpop.f32.mrf.mxu0
      %v2499 = vadd.f32 0.0, %v2498
      %v2500 = vpop.f32.mrf.mxu0
      %2501 = vmatprep.mubr.f32.mxu0 0.0
      %2502 = vmatmul.mubr.f32.gmra.mxu0 %v2277
      %v2503 = vpop.f32.mrf.mxu0
      %v2504 = vadd.f32 0.0, %v2503
      %v2505 = vpop.f32.mrf.mxu0
      %2506 = vdwg.mxu0
      %v2507 = vadd.f32 %v2023, %v2349
      %v2508 = vadd.f32 %v2024, %v2354
      %v2509 = vadd.f32 %v2025, %v2359
      %v2510 = vadd.f32 %v2026, %v2364
      %v2511 = vadd.f32 %v2027, %v2369
      %v2512 = vadd.f32 %v2028, %v2374
      %v2513 = vadd.f32 %v2029, %v2379
      %v2514 = vadd.f32 %v2030, %v2384
      %v2515 = vadd.f32 %v2031, %v2389
      %v2516 = vadd.f32 %v2032, %v2394
      %v2517 = vadd.f32 %v2033, %v2399
      %v2518 = vadd.f32 %v2034, %v2404
      %v2519 = vadd.f32 %v2035, %v2409
      %v2520 = vadd.f32 %v2036, %v2414
      %v2521 = vadd.f32 %v2037, %v2419
      %v2522 = vadd.f32 %v2038, %v2424
      %v2523 = vadd.f32 %v2039, %v2429
      %v2524 = vadd.f32 %v2040, %v2434
      %v2525 = vadd.f32 %v2041, %v2439
      %v2526 = vadd.f32 %v2042, %v2444
      %v2527 = vadd.f32 %v2043, %v2449
      %v2528 = vadd.f32 %v2044, %v2454
      %v2529 = vadd.f32 %v2045, %v2459
      %v2530 = vadd.f32 %v2046, %v2464
      %v2531 = vadd.f32 %v2047, %v2469
      %v2532 = vadd.f32 %v2048, %v2474
      %v2533 = vadd.f32 %v2049, %v2479
      %v2534 = vadd.f32 %v2050, %v2484
      %v2535 = vadd.f32 %v2051, %v2489
      %v2536 = vadd.f32 %v2052, %v2494
      %v2537 = vadd.f32 %v2053, %v2499
      %v2538 = vadd.f32 %v2054, %v2504
      %v2539 = vld [vmem:[%s1570 + $0x2] sm:$0xff]
      %v2540 = vld [vmem:[%s1570 + $0xa] sm:$0xff]
      %v2541 = vld [vmem:[%s1570 + $0x1a] sm:$0xff]
      %v2542 = vld [vmem:[%s1570 + $0x22] sm:$0xff]
      %v2543 = vld [vmem:[%s1570 + $0x32] sm:$0xff]
      %v2544 = vld [vmem:[%s1570 + $0x3a] sm:$0xff]
      %v2545 = vld [vmem:[%s1570 + $0x4a] sm:$0xff]
      %v2546 = vld [vmem:[%s1570 + $0x52] sm:$0xff]
      %v2547 = vld [vmem:[%s1570 + $0x62] sm:$0xff]
      %v2548 = vld [vmem:[%s1570 + $0x6a] sm:$0xff]
      %v2549 = vld [vmem:[%s1570 + $0x7a] sm:$0xff]
      %v2550 = vld [vmem:[%s1570 + $0x82] sm:$0xff]
      %v2551 = vld [vmem:[%s1570 + $0x92] sm:$0xff]
      %v2552 = vld [vmem:[%s1570 + $0x9a] sm:$0xff]
      %v2553 = vld [vmem:[%s1570 + $0xaa] sm:$0xff]
      %v2554 = vld [vmem:[%s1570 + $0xb2] sm:$0xff]
      %v2555 = vld [vmem:[%s1570 + $0xc2] sm:$0xff]
      %v2556 = vld [vmem:[%s1570 + $0xca] sm:$0xff]
      %v2557 = vld [vmem:[%s1570 + $0xda] sm:$0xff]
      %v2558 = vld [vmem:[%s1570 + $0xe2] sm:$0xff]
      %v2559 = vld [vmem:[%s1570 + $0xf2] sm:$0xff]
      %v2560 = vld [vmem:[%s1570 + $0xfa] sm:$0xff]
      %v2561 = vld [vmem:[%s1570 + $0x10a] sm:$0xff]
      %v2562 = vld [vmem:[%s1570 + $0x112] sm:$0xff]
      %v2563 = vld [vmem:[%s1570 + $0x122] sm:$0xff]
      %v2564 = vld [vmem:[%s1570 + $0x12a] sm:$0xff]
      %v2565 = vld [vmem:[%s1570 + $0x13a] sm:$0xff]
      %v2566 = vld [vmem:[%s1570 + $0x142] sm:$0xff]
      %v2567 = vld [vmem:[%s1570 + $0x152] sm:$0xff]
      %v2568 = vld [vmem:[%s1570 + $0x15a] sm:$0xff]
      %v2569 = vld [vmem:[%s1570 + $0x16a] sm:$0xff]
      %v2570 = vld [vmem:[%s1570 + $0x172] sm:$0xff]
      %vm2571 = vcmp.ge.f32.partialorder %v2539, 0.0
      %vm2572 = vcmp.ge.f32.partialorder %v2540, 0.0
      %vm2573 = vcmp.ge.f32.partialorder %v2541, 0.0
      %vm2574 = vcmp.ge.f32.partialorder %v2542, 0.0
      %vm2575 = vcmp.ge.f32.partialorder %v2543, 0.0
      %vm2576 = vcmp.ge.f32.partialorder %v2544, 0.0
      %vm2577 = vcmp.ge.f32.partialorder %v2545, 0.0
      %vm2578 = vcmp.ge.f32.partialorder %v2546, 0.0
      %vm2579 = vcmp.ge.f32.partialorder %v2547, 0.0
      %vm2580 = vcmp.ge.f32.partialorder %v2548, 0.0
      %vm2581 = vcmp.ge.f32.partialorder %v2549, 0.0
      %vm2582 = vcmp.ge.f32.partialorder %v2550, 0.0
      %vm2583 = vcmp.ge.f32.partialorder %v2551, 0.0
      %vm2584 = vcmp.ge.f32.partialorder %v2552, 0.0
      %vm2585 = vcmp.ge.f32.partialorder %v2553, 0.0
      %vm2586 = vcmp.ge.f32.partialorder %v2554, 0.0
      %vm2587 = vcmp.ge.f32.partialorder %v2555, 0.0
      %vm2588 = vcmp.ge.f32.partialorder %v2556, 0.0
      %vm2589 = vcmp.ge.f32.partialorder %v2557, 0.0
      %vm2590 = vcmp.ge.f32.partialorder %v2558, 0.0
      %vm2591 = vcmp.ge.f32.partialorder %v2559, 0.0
      %vm2592 = vcmp.ge.f32.partialorder %v2560, 0.0
      %vm2593 = vcmp.ge.f32.partialorder %v2561, 0.0
      %vm2594 = vcmp.ge.f32.partialorder %v2562, 0.0
      %vm2595 = vcmp.ge.f32.partialorder %v2563, 0.0
      %vm2596 = vcmp.ge.f32.partialorder %v2564, 0.0
      %vm2597 = vcmp.ge.f32.partialorder %v2565, 0.0
      %vm2598 = vcmp.ge.f32.partialorder %v2566, 0.0
      %vm2599 = vcmp.ge.f32.partialorder %v2567, 0.0
      %vm2600 = vcmp.ge.f32.partialorder %v2568, 0.0
      %vm2601 = vcmp.ge.f32.partialorder %v2569, 0.0
      %vm2602 = vcmp.ge.f32.partialorder %v2570, 0.0
      %v2603 = vmul.f32 %v2539, 0.2
      %v2604 = vmul.f32 %v2540, 0.2
      %v2605 = vmul.f32 %v2541, 0.2
      %v2606 = vmul.f32 %v2542, 0.2
      %v2607 = vmul.f32 %v2543, 0.2
      %v2608 = vmul.f32 %v2544, 0.2
      %v2609 = vmul.f32 %v2545, 0.2
      %v2610 = vmul.f32 %v2546, 0.2
      %v2611 = vmul.f32 %v2547, 0.2
      %v2612 = vmul.f32 %v2548, 0.2
      %v2613 = vmul.f32 %v2549, 0.2
      %v2614 = vmul.f32 %v2550, 0.2
      %v2615 = vmul.f32 %v2551, 0.2
      %v2616 = vmul.f32 %v2552, 0.2
      %v2617 = vmul.f32 %v2553, 0.2
      %v2618 = vmul.f32 %v2554, 0.2
      %v2619 = vmul.f32 %v2555, 0.2
      %v2620 = vmul.f32 %v2556, 0.2
      %v2621 = vmul.f32 %v2557, 0.2
      %v2622 = vmul.f32 %v2558, 0.2
      %v2623 = vmul.f32 %v2559, 0.2
      %v2624 = vmul.f32 %v2560, 0.2
      %v2625 = vmul.f32 %v2561, 0.2
      %v2626 = vmul.f32 %v2562, 0.2
      %v2627 = vmul.f32 %v2563, 0.2
      %v2628 = vmul.f32 %v2564, 0.2
      %v2629 = vmul.f32 %v2565, 0.2
      %v2630 = vmul.f32 %v2566, 0.2
      %v2631 = vmul.f32 %v2567, 0.2
      %v2632 = vmul.f32 %v2568, 0.2
      %v2633 = vmul.f32 %v2569, 0.2
      %v2634 = vmul.f32 %v2570, 0.2
      %v2635 = vsel %vm2571, %v2539, %v2603
      %v2636 = vsel %vm2572, %v2540, %v2604
      %v2637 = vsel %vm2573, %v2541, %v2605
      %v2638 = vsel %vm2574, %v2542, %v2606
      %v2639 = vsel %vm2575, %v2543, %v2607
      %v2640 = vsel %vm2576, %v2544, %v2608
      %v2641 = vsel %vm2577, %v2545, %v2609
      %v2642 = vsel %vm2578, %v2546, %v2610
      %v2643 = vsel %vm2579, %v2547, %v2611
      %v2644 = vsel %vm2580, %v2548, %v2612
      %v2645 = vsel %vm2581, %v2549, %v2613
      %v2646 = vsel %vm2582, %v2550, %v2614
      %v2647 = vsel %vm2583, %v2551, %v2615
      %v2648 = vsel %vm2584, %v2552, %v2616
      %v2649 = vsel %vm2585, %v2553, %v2617
      %v2650 = vsel %vm2586, %v2554, %v2618
      %v2651 = vsel %vm2587, %v2555, %v2619
      %v2652 = vsel %vm2588, %v2556, %v2620
      %v2653 = vsel %vm2589, %v2557, %v2621
      %v2654 = vsel %vm2590, %v2558, %v2622
      %v2655 = vsel %vm2591, %v2559, %v2623
      %v2656 = vsel %vm2592, %v2560, %v2624
      %v2657 = vsel %vm2593, %v2561, %v2625
      %v2658 = vsel %vm2594, %v2562, %v2626
      %v2659 = vsel %vm2595, %v2563, %v2627
      %v2660 = vsel %vm2596, %v2564, %v2628
      %v2661 = vsel %vm2597, %v2565, %v2629
      %v2662 = vsel %vm2598, %v2566, %v2630
      %v2663 = vsel %vm2599, %v2567, %v2631
      %v2664 = vsel %vm2600, %v2568, %v2632
      %v2665 = vsel %vm2601, %v2569, %v2633
      %v2666 = vsel %vm2602, %v2570, %v2634
      %v2668 = vsel %vm436, %v2635, 0
      %v2671 = vsel %vm436, %v2636, 0
      %v2674 = vsel %vm436, %v2637, 0
      %v2677 = vsel %vm436, %v2638, 0
      %v2680 = vsel %vm436, %v2639, 0
      %v2683 = vsel %vm436, %v2640, 0
      %v2686 = vsel %vm436, %v2641, 0
      %v2689 = vsel %vm436, %v2642, 0
      %v2692 = vsel %vm436, %v2643, 0
      %v2695 = vsel %vm436, %v2644, 0
      %v2698 = vsel %vm436, %v2645, 0
      %v2701 = vsel %vm436, %v2646, 0
      %v2704 = vsel %vm436, %v2647, 0
      %v2707 = vsel %vm436, %v2648, 0
      %v2710 = vsel %vm436, %v2649, 0
      %v2713 = vsel %vm436, %v2650, 0
      %v2716 = vsel %vm436, %v2651, 0
      %v2719 = vsel %vm436, %v2652, 0
      %v2722 = vsel %vm436, %v2653, 0
      %v2725 = vsel %vm436, %v2654, 0
      %v2728 = vsel %vm436, %v2655, 0
      %v2731 = vsel %vm436, %v2656, 0
      %v2734 = vsel %vm436, %v2657, 0
      %v2737 = vsel %vm436, %v2658, 0
      %v2740 = vsel %vm436, %v2659, 0
      %v2743 = vsel %vm436, %v2660, 0
      %v2746 = vsel %vm436, %v2661, 0
      %v2749 = vsel %vm436, %v2662, 0
      %v2752 = vsel %vm436, %v2663, 0
      %v2755 = vsel %vm436, %v2664, 0
      %v2758 = vsel %vm436, %v2665, 0
      %v2761 = vsel %vm436, %v2666, 0
      %v2764 = vsel %vm533, %v176, 0
      %2766 = vmatprep.subr.mxu0 0.0
      %2767 = vmatpush1.msra.mxu0 0.0
      %2768 = vmatprep.subr.mxu0 0.0
      %2769 = vmatpush1.msra.mxu0 0.0
      %2770 = vmatprep.subr.mxu0 0.0
      %2771 = vmatpush1.msra.mxu0 0.0
      %2772 = vmatprep.subr.mxu0 0.0
      %2773 = vmatpush1.msra.mxu0 0.0
      %2774 = vmatprep.subr.mxu0 0.0
      %2775 = vmatpush1.msra.mxu0 0.0
      %2776 = vmatprep.subr.mxu0 0.0
      %2777 = vmatpush1.msra.mxu0 0.0
      %2778 = vmatprep.subr.mxu0 0.0
      %2779 = vmatpush1.msra.mxu0 0.0
      %2780 = vmatprep.subr.mxu0 0.0
      %2781 = vmatpush1.msra.mxu0 0.0
      %2782 = vmatprep.subr.mxu0 0.0
      %2783 = vmatpush1.msra.mxu0 0.0
      %2784 = vmatprep.subr.mxu0 0.0
      %2785 = vmatpush1.msra.mxu0 0.0
      %2786 = vmatprep.subr.mxu0 0.0
      %2787 = vmatpush1.msra.mxu0 0.0
      %2788 = vmatprep.subr.mxu0 0.0
      %2789 = vmatpush1.msra.mxu0 0.0
      %2790 = vmatprep.subr.mxu0 0.0
      %2791 = vmatpush1.msra.mxu0 0.0
      %2792 = vmatprep.subr.mxu0 0.0
      %2793 = vmatpush1.msra.mxu0 0.0
      %2794 = vmatprep.subr.mxu0 0.0
      %2795 = vmatpush1.msra.mxu0 0.0
      %2796 = vmatprep.subr.mxu0 0.0
      %2797 = vmatpush1.msra.mxu0 %v2764
      %2798 = vmatprep.subr.mxu0 0.0
      %2799 = vmatpush2.msra.mxu0 0.0
      %2800 = vmatprep.subr.mxu0 0.0
      %2801 = vmatpush2.msra.mxu0 0.0
      %2802 = vmatprep.subr.mxu0 0.0
      %2803 = vmatpush2.msra.mxu0 0.0
      %2804 = vmatprep.subr.mxu0 0.0
      %2805 = vmatpush2.msra.mxu0 0.0
      %2806 = vmatprep.subr.mxu0 0.0
      %2807 = vmatpush2.msra.mxu0 0.0
      %2808 = vmatprep.subr.mxu0 0.0
      %2809 = vmatpush2.msra.mxu0 0.0
      %2810 = vmatprep.subr.mxu0 0.0
      %2811 = vmatpush2.msra.mxu0 0.0
      %2812 = vmatprep.subr.mxu0 0.0
      %2813 = vmatpush2.msra.mxu0 0.0
      %2814 = vmatprep.subr.mxu0 0.0
      %2815 = vmatpush2.msra.mxu0 0.0
      %2816 = vmatprep.subr.mxu0 0.0
      %2817 = vmatpush2.msra.mxu0 0.0
      %2818 = vmatprep.subr.mxu0 0.0
      %2819 = vmatpush2.msra.mxu0 0.0
      %2820 = vmatprep.subr.mxu0 0.0
      %2821 = vmatpush2.msra.mxu0 0.0
      %2822 = vmatprep.subr.mxu0 0.0
      %2823 = vmatpush2.msra.mxu0 0.0
      %2824 = vmatprep.subr.mxu0 0.0
      %2825 = vmatpush2.msra.mxu0 0.0
      %2826 = vmatprep.subr.mxu0 0.0
      %2827 = vmatpush2.msra.mxu0 0.0
      %2828 = vmatprep.subr.mxu0 0.0
      %2829 = vmatpush2.msra.mxu0 0.0
      %2830 = vmatprep.mubr.f32.mxu0 0.0
      %2831 = vmatmul.mubr.f32.gmra.mxu0 %v2668
      %v2832 = vpop.f32.mrf.mxu0
      %v2833 = vadd.f32 0.0, %v2832
      %v2834 = vpop.f32.mrf.mxu0
      %2835 = vmatprep.mubr.f32.mxu0 0.0
      %2836 = vmatmul.mubr.f32.gmra.mxu0 %v2671
      %v2837 = vpop.f32.mrf.mxu0
      %v2838 = vadd.f32 0.0, %v2837
      %v2839 = vpop.f32.mrf.mxu0
      %2840 = vmatprep.mubr.f32.mxu0 0.0
      %2841 = vmatmul.mubr.f32.gmra.mxu0 %v2674
      %v2842 = vpop.f32.mrf.mxu0
      %v2843 = vadd.f32 0.0, %v2842
      %v2844 = vpop.f32.mrf.mxu0
      %2845 = vmatprep.mubr.f32.mxu0 0.0
      %2846 = vmatmul.mubr.f32.gmra.mxu0 %v2677
      %v2847 = vpop.f32.mrf.mxu0
      %v2848 = vadd.f32 0.0, %v2847
      %v2849 = vpop.f32.mrf.mxu0
      %2850 = vmatprep.mubr.f32.mxu0 0.0
      %2851 = vmatmul.mubr.f32.gmra.mxu0 %v2680
      %v2852 = vpop.f32.mrf.mxu0
      %v2853 = vadd.f32 0.0, %v2852
      %v2854 = vpop.f32.mrf.mxu0
      %2855 = vmatprep.mubr.f32.mxu0 0.0
      %2856 = vmatmul.mubr.f32.gmra.mxu0 %v2683
      %v2857 = vpop.f32.mrf.mxu0
      %v2858 = vadd.f32 0.0, %v2857
      %v2859 = vpop.f32.mrf.mxu0
      %2860 = vmatprep.mubr.f32.mxu0 0.0
      %2861 = vmatmul.mubr.f32.gmra.mxu0 %v2686
      %v2862 = vpop.f32.mrf.mxu0
      %v2863 = vadd.f32 0.0, %v2862
      %v2864 = vpop.f32.mrf.mxu0
      %2865 = vmatprep.mubr.f32.mxu0 0.0
      %2866 = vmatmul.mubr.f32.gmra.mxu0 %v2689
      %v2867 = vpop.f32.mrf.mxu0
      %v2868 = vadd.f32 0.0, %v2867
      %v2869 = vpop.f32.mrf.mxu0
      %2870 = vmatprep.mubr.f32.mxu0 0.0
      %2871 = vmatmul.mubr.f32.gmra.mxu0 %v2692
      %v2872 = vpop.f32.mrf.mxu0
      %v2873 = vadd.f32 0.0, %v2872
      %v2874 = vpop.f32.mrf.mxu0
      %2875 = vmatprep.mubr.f32.mxu0 0.0
      %2876 = vmatmul.mubr.f32.gmra.mxu0 %v2695
      %v2877 = vpop.f32.mrf.mxu0
      %v2878 = vadd.f32 0.0, %v2877
      %v2879 = vpop.f32.mrf.mxu0
      %2880 = vmatprep.mubr.f32.mxu0 0.0
      %2881 = vmatmul.mubr.f32.gmra.mxu0 %v2698
      %v2882 = vpop.f32.mrf.mxu0
      %v2883 = vadd.f32 0.0, %v2882
      %v2884 = vpop.f32.mrf.mxu0
      %2885 = vmatprep.mubr.f32.mxu0 0.0
      %2886 = vmatmul.mubr.f32.gmra.mxu0 %v2701
      %v2887 = vpop.f32.mrf.mxu0
      %v2888 = vadd.f32 0.0, %v2887
      %v2889 = vpop.f32.mrf.mxu0
      %2890 = vmatprep.mubr.f32.mxu0 0.0
      %2891 = vmatmul.mubr.f32.gmra.mxu0 %v2704
      %v2892 = vpop.f32.mrf.mxu0
      %v2893 = vadd.f32 0.0, %v2892
      %v2894 = vpop.f32.mrf.mxu0
      %2895 = vmatprep.mubr.f32.mxu0 0.0
      %2896 = vmatmul.mubr.f32.gmra.mxu0 %v2707
      %v2897 = vpop.f32.mrf.mxu0
      %v2898 = vadd.f32 0.0, %v2897
      %v2899 = vpop.f32.mrf.mxu0
      %2900 = vmatprep.mubr.f32.mxu0 0.0
      %2901 = vmatmul.mubr.f32.gmra.mxu0 %v2710
      %v2902 = vpop.f32.mrf.mxu0
      %v2903 = vadd.f32 0.0, %v2902
      %v2904 = vpop.f32.mrf.mxu0
      %2905 = vmatprep.mubr.f32.mxu0 0.0
      %2906 = vmatmul.mubr.f32.gmra.mxu0 %v2713
      %v2907 = vpop.f32.mrf.mxu0
      %v2908 = vadd.f32 0.0, %v2907
      %v2909 = vpop.f32.mrf.mxu0
      %2910 = vmatprep.mubr.f32.mxu0 0.0
      %2911 = vmatmul.mubr.f32.gmra.mxu0 %v2716
      %v2912 = vpop.f32.mrf.mxu0
      %v2913 = vadd.f32 0.0, %v2912
      %v2914 = vpop.f32.mrf.mxu0
      %2915 = vmatprep.mubr.f32.mxu0 0.0
      %2916 = vmatmul.mubr.f32.gmra.mxu0 %v2719
      %v2917 = vpop.f32.mrf.mxu0
      %v2918 = vadd.f32 0.0, %v2917
      %v2919 = vpop.f32.mrf.mxu0
      %2920 = vmatprep.mubr.f32.mxu0 0.0
      %2921 = vmatmul.mubr.f32.gmra.mxu0 %v2722
      %v2922 = vpop.f32.mrf.mxu0
      %v2923 = vadd.f32 0.0, %v2922
      %v2924 = vpop.f32.mrf.mxu0
      %2925 = vmatprep.mubr.f32.mxu0 0.0
      %2926 = vmatmul.mubr.f32.gmra.mxu0 %v2725
      %v2927 = vpop.f32.mrf.mxu0
      %v2928 = vadd.f32 0.0, %v2927
      %v2929 = vpop.f32.mrf.mxu0
      %2930 = vmatprep.mubr.f32.mxu0 0.0
      %2931 = vmatmul.mubr.f32.gmra.mxu0 %v2728
      %v2932 = vpop.f32.mrf.mxu0
      %v2933 = vadd.f32 0.0, %v2932
      %v2934 = vpop.f32.mrf.mxu0
      %2935 = vmatprep.mubr.f32.mxu0 0.0
      %2936 = vmatmul.mubr.f32.gmra.mxu0 %v2731
      %v2937 = vpop.f32.mrf.mxu0
      %v2938 = vadd.f32 0.0, %v2937
      %v2939 = vpop.f32.mrf.mxu0
      %2940 = vmatprep.mubr.f32.mxu0 0.0
      %2941 = vmatmul.mubr.f32.gmra.mxu0 %v2734
      %v2942 = vpop.f32.mrf.mxu0
      %v2943 = vadd.f32 0.0, %v2942
      %v2944 = vpop.f32.mrf.mxu0
      %2945 = vmatprep.mubr.f32.mxu0 0.0
      %2946 = vmatmul.mubr.f32.gmra.mxu0 %v2737
      %v2947 = vpop.f32.mrf.mxu0
      %v2948 = vadd.f32 0.0, %v2947
      %v2949 = vpop.f32.mrf.mxu0
      %2950 = vmatprep.mubr.f32.mxu0 0.0
      %2951 = vmatmul.mubr.f32.gmra.mxu0 %v2740
      %v2952 = vpop.f32.mrf.mxu0
      %v2953 = vadd.f32 0.0, %v2952
      %v2954 = vpop.f32.mrf.mxu0
      %2955 = vmatprep.mubr.f32.mxu0 0.0
      %2956 = vmatmul.mubr.f32.gmra.mxu0 %v2743
      %v2957 = vpop.f32.mrf.mxu0
      %v2958 = vadd.f32 0.0, %v2957
      %v2959 = vpop.f32.mrf.mxu0
      %2960 = vmatprep.mubr.f32.mxu0 0.0
      %2961 = vmatmul.mubr.f32.gmra.mxu0 %v2746
      %v2962 = vpop.f32.mrf.mxu0
      %v2963 = vadd.f32 0.0, %v2962
      %v2964 = vpop.f32.mrf.mxu0
      %2965 = vmatprep.mubr.f32.mxu0 0.0
      %2966 = vmatmul.mubr.f32.gmra.mxu0 %v2749
      %v2967 = vpop.f32.mrf.mxu0
      %v2968 = vadd.f32 0.0, %v2967
      %v2969 = vpop.f32.mrf.mxu0
      %2970 = vmatprep.mubr.f32.mxu0 0.0
      %2971 = vmatmul.mubr.f32.gmra.mxu0 %v2752
      %v2972 = vpop.f32.mrf.mxu0
      %v2973 = vadd.f32 0.0, %v2972
      %v2974 = vpop.f32.mrf.mxu0
      %2975 = vmatprep.mubr.f32.mxu0 0.0
      %2976 = vmatmul.mubr.f32.gmra.mxu0 %v2755
      %v2977 = vpop.f32.mrf.mxu0
      %v2978 = vadd.f32 0.0, %v2977
      %v2979 = vpop.f32.mrf.mxu0
      %2980 = vmatprep.mubr.f32.mxu0 0.0
      %2981 = vmatmul.mubr.f32.gmra.mxu0 %v2758
      %v2982 = vpop.f32.mrf.mxu0
      %v2983 = vadd.f32 0.0, %v2982
      %v2984 = vpop.f32.mrf.mxu0
      %2985 = vmatprep.mubr.f32.mxu0 0.0
      %2986 = vmatmul.mubr.f32.gmra.mxu0 %v2761
      %v2987 = vpop.f32.mrf.mxu0
      %v2988 = vadd.f32 0.0, %v2987
      %v2989 = vpop.f32.mrf.mxu0
      %2990 = vdwg.mxu0
      %v2991 = vadd.f32 %v2507, %v2833
      %v2992 = vadd.f32 %v2508, %v2838
      %v2993 = vadd.f32 %v2509, %v2843
      %v2994 = vadd.f32 %v2510, %v2848
      %v2995 = vadd.f32 %v2511, %v2853
      %v2996 = vadd.f32 %v2512, %v2858
      %v2997 = vadd.f32 %v2513, %v2863
      %v2998 = vadd.f32 %v2514, %v2868
      %v2999 = vadd.f32 %v2515, %v2873
      %v3000 = vadd.f32 %v2516, %v2878
      %v3001 = vadd.f32 %v2517, %v2883
      %v3002 = vadd.f32 %v2518, %v2888
      %v3003 = vadd.f32 %v2519, %v2893
      %v3004 = vadd.f32 %v2520, %v2898
      %v3005 = vadd.f32 %v2521, %v2903
      %v3006 = vadd.f32 %v2522, %v2908
      %v3007 = vadd.f32 %v2523, %v2913
      %v3008 = vadd.f32 %v2524, %v2918
      %v3009 = vadd.f32 %v2525, %v2923
      %v3010 = vadd.f32 %v2526, %v2928
      %v3011 = vadd.f32 %v2527, %v2933
      %v3012 = vadd.f32 %v2528, %v2938
      %v3013 = vadd.f32 %v2529, %v2943
      %v3014 = vadd.f32 %v2530, %v2948
      %v3015 = vadd.f32 %v2531, %v2953
      %v3016 = vadd.f32 %v2532, %v2958
      %v3017 = vadd.f32 %v2533, %v2963
      %v3018 = vadd.f32 %v2534, %v2968
      %v3019 = vadd.f32 %v2535, %v2973
      %v3020 = vadd.f32 %v2536, %v2978
      %v3021 = vadd.f32 %v2537, %v2983
      %v3022 = vadd.f32 %v2538, %v2988
      %s3023 = scalar_lea.vmem %s165, 48
      %v3024 = vld [vmem:[%s3023] sm:$0xff]
      %v3025 = vld [vmem:[%s3023 + $0x8] sm:$0xff]
      %v3026 = vld [vmem:[%s3023 + $0x18] sm:$0xff]
      %v3027 = vld [vmem:[%s3023 + $0x20] sm:$0xff]
      %v3028 = vld [vmem:[%s3023 + $0x30] sm:$0xff]
      %v3029 = vld [vmem:[%s3023 + $0x38] sm:$0xff]
      %v3030 = vld [vmem:[%s3023 + $0x48] sm:$0xff]
      %v3031 = vld [vmem:[%s3023 + $0x50] sm:$0xff]
      %v3032 = vld [vmem:[%s3023 + $0x60] sm:$0xff]
      %v3033 = vld [vmem:[%s3023 + $0x68] sm:$0xff]
      %v3034 = vld [vmem:[%s3023 + $0x78] sm:$0xff]
      %v3035 = vld [vmem:[%s3023 + $0x80] sm:$0xff]
      %v3036 = vld [vmem:[%s3023 + $0x90] sm:$0xff]
      %v3037 = vld [vmem:[%s3023 + $0x98] sm:$0xff]
      %v3038 = vld [vmem:[%s3023 + $0xa8] sm:$0xff]
      %v3039 = vld [vmem:[%s3023 + $0xb0] sm:$0xff]
      %v3040 = vld [vmem:[%s3023 + $0xc0] sm:$0xff]
      %v3041 = vld [vmem:[%s3023 + $0xc8] sm:$0xff]
      %v3042 = vld [vmem:[%s3023 + $0xd8] sm:$0xff]
      %v3043 = vld [vmem:[%s3023 + $0xe0] sm:$0xff]
      %v3044 = vld [vmem:[%s3023 + $0xf0] sm:$0xff]
      %v3045 = vld [vmem:[%s3023 + $0xf8] sm:$0xff]
      %v3046 = vld [vmem:[%s3023 + $0x108] sm:$0xff]
      %v3047 = vld [vmem:[%s3023 + $0x110] sm:$0xff]
      %v3048 = vld [vmem:[%s3023 + $0x120] sm:$0xff]
      %v3049 = vld [vmem:[%s3023 + $0x128] sm:$0xff]
      %v3050 = vld [vmem:[%s3023 + $0x138] sm:$0xff]
      %v3051 = vld [vmem:[%s3023 + $0x140] sm:$0xff]
      %v3052 = vld [vmem:[%s3023 + $0x150] sm:$0xff]
      %v3053 = vld [vmem:[%s3023 + $0x158] sm:$0xff]
      %v3054 = vld [vmem:[%s3023 + $0x168] sm:$0xff]
      %v3055 = vld [vmem:[%s3023 + $0x170] sm:$0xff]
      %vm3056 = vcmp.ge.f32.partialorder %v3024, 0.0
      %vm3057 = vcmp.ge.f32.partialorder %v3025, 0.0
      %vm3058 = vcmp.ge.f32.partialorder %v3026, 0.0
      %vm3059 = vcmp.ge.f32.partialorder %v3027, 0.0
      %vm3060 = vcmp.ge.f32.partialorder %v3028, 0.0
      %vm3061 = vcmp.ge.f32.partialorder %v3029, 0.0
      %vm3062 = vcmp.ge.f32.partialorder %v3030, 0.0
      %vm3063 = vcmp.ge.f32.partialorder %v3031, 0.0
      %vm3064 = vcmp.ge.f32.partialorder %v3032, 0.0
      %vm3065 = vcmp.ge.f32.partialorder %v3033, 0.0
      %vm3066 = vcmp.ge.f32.partialorder %v3034, 0.0
      %vm3067 = vcmp.ge.f32.partialorder %v3035, 0.0
      %vm3068 = vcmp.ge.f32.partialorder %v3036, 0.0
      %vm3069 = vcmp.ge.f32.partialorder %v3037, 0.0
      %vm3070 = vcmp.ge.f32.partialorder %v3038, 0.0
      %vm3071 = vcmp.ge.f32.partialorder %v3039, 0.0
      %vm3072 = vcmp.ge.f32.partialorder %v3040, 0.0
      %vm3073 = vcmp.ge.f32.partialorder %v3041, 0.0
      %vm3074 = vcmp.ge.f32.partialorder %v3042, 0.0
      %vm3075 = vcmp.ge.f32.partialorder %v3043, 0.0
      %vm3076 = vcmp.ge.f32.partialorder %v3044, 0.0
      %vm3077 = vcmp.ge.f32.partialorder %v3045, 0.0
      %vm3078 = vcmp.ge.f32.partialorder %v3046, 0.0
      %vm3079 = vcmp.ge.f32.partialorder %v3047, 0.0
      %vm3080 = vcmp.ge.f32.partialorder %v3048, 0.0
      %vm3081 = vcmp.ge.f32.partialorder %v3049, 0.0
      %vm3082 = vcmp.ge.f32.partialorder %v3050, 0.0
      %vm3083 = vcmp.ge.f32.partialorder %v3051, 0.0
      %vm3084 = vcmp.ge.f32.partialorder %v3052, 0.0
      %vm3085 = vcmp.ge.f32.partialorder %v3053, 0.0
      %vm3086 = vcmp.ge.f32.partialorder %v3054, 0.0
      %vm3087 = vcmp.ge.f32.partialorder %v3055, 0.0
      %v3088 = vmul.f32 %v3024, 0.2
      %v3089 = vmul.f32 %v3025, 0.2
      %v3090 = vmul.f32 %v3026, 0.2
      %v3091 = vmul.f32 %v3027, 0.2
      %v3092 = vmul.f32 %v3028, 0.2
      %v3093 = vmul.f32 %v3029, 0.2
      %v3094 = vmul.f32 %v3030, 0.2
      %v3095 = vmul.f32 %v3031, 0.2
      %v3096 = vmul.f32 %v3032, 0.2
      %v3097 = vmul.f32 %v3033, 0.2
      %v3098 = vmul.f32 %v3034, 0.2
      %v3099 = vmul.f32 %v3035, 0.2
      %v3100 = vmul.f32 %v3036, 0.2
      %v3101 = vmul.f32 %v3037, 0.2
      %v3102 = vmul.f32 %v3038, 0.2
      %v3103 = vmul.f32 %v3039, 0.2
      %v3104 = vmul.f32 %v3040, 0.2
      %v3105 = vmul.f32 %v3041, 0.2
      %v3106 = vmul.f32 %v3042, 0.2
      %v3107 = vmul.f32 %v3043, 0.2
      %v3108 = vmul.f32 %v3044, 0.2
      %v3109 = vmul.f32 %v3045, 0.2
      %v3110 = vmul.f32 %v3046, 0.2
      %v3111 = vmul.f32 %v3047, 0.2
      %v3112 = vmul.f32 %v3048, 0.2
      %v3113 = vmul.f32 %v3049, 0.2
      %v3114 = vmul.f32 %v3050, 0.2
      %v3115 = vmul.f32 %v3051, 0.2
      %v3116 = vmul.f32 %v3052, 0.2
      %v3117 = vmul.f32 %v3053, 0.2
      %v3118 = vmul.f32 %v3054, 0.2
      %v3119 = vmul.f32 %v3055, 0.2
      %v3120 = vsel %vm3056, %v3024, %v3088
      %v3121 = vsel %vm3057, %v3025, %v3089
      %v3122 = vsel %vm3058, %v3026, %v3090
      %v3123 = vsel %vm3059, %v3027, %v3091
      %v3124 = vsel %vm3060, %v3028, %v3092
      %v3125 = vsel %vm3061, %v3029, %v3093
      %v3126 = vsel %vm3062, %v3030, %v3094
      %v3127 = vsel %vm3063, %v3031, %v3095
      %v3128 = vsel %vm3064, %v3032, %v3096
      %v3129 = vsel %vm3065, %v3033, %v3097
      %v3130 = vsel %vm3066, %v3034, %v3098
      %v3131 = vsel %vm3067, %v3035, %v3099
      %v3132 = vsel %vm3068, %v3036, %v3100
      %v3133 = vsel %vm3069, %v3037, %v3101
      %v3134 = vsel %vm3070, %v3038, %v3102
      %v3135 = vsel %vm3071, %v3039, %v3103
      %v3136 = vsel %vm3072, %v3040, %v3104
      %v3137 = vsel %vm3073, %v3041, %v3105
      %v3138 = vsel %vm3074, %v3042, %v3106
      %v3139 = vsel %vm3075, %v3043, %v3107
      %v3140 = vsel %vm3076, %v3044, %v3108
      %v3141 = vsel %vm3077, %v3045, %v3109
      %v3142 = vsel %vm3078, %v3046, %v3110
      %v3143 = vsel %vm3079, %v3047, %v3111
      %v3144 = vsel %vm3080, %v3048, %v3112
      %v3145 = vsel %vm3081, %v3049, %v3113
      %v3146 = vsel %vm3082, %v3050, %v3114
      %v3147 = vsel %vm3083, %v3051, %v3115
      %v3148 = vsel %vm3084, %v3052, %v3116
      %v3149 = vsel %vm3085, %v3053, %v3117
      %v3150 = vsel %vm3086, %v3054, %v3118
      %v3151 = vsel %vm3087, %v3055, %v3119
      %v3153 = vsel %vm436, %v3120, 0
      %v3156 = vsel %vm436, %v3121, 0
      %v3159 = vsel %vm436, %v3122, 0
      %v3162 = vsel %vm436, %v3123, 0
      %v3165 = vsel %vm436, %v3124, 0
      %v3168 = vsel %vm436, %v3125, 0
      %v3171 = vsel %vm436, %v3126, 0
      %v3174 = vsel %vm436, %v3127, 0
      %v3177 = vsel %vm436, %v3128, 0
      %v3180 = vsel %vm436, %v3129, 0
      %v3183 = vsel %vm436, %v3130, 0
      %v3186 = vsel %vm436, %v3131, 0
      %v3189 = vsel %vm436, %v3132, 0
      %v3192 = vsel %vm436, %v3133, 0
      %v3195 = vsel %vm436, %v3134, 0
      %v3198 = vsel %vm436, %v3135, 0
      %v3201 = vsel %vm436, %v3136, 0
      %v3204 = vsel %vm436, %v3137, 0
      %v3207 = vsel %vm436, %v3138, 0
      %v3210 = vsel %vm436, %v3139, 0
      %v3213 = vsel %vm436, %v3140, 0
      %v3216 = vsel %vm436, %v3141, 0
      %v3219 = vsel %vm436, %v3142, 0
      %v3222 = vsel %vm436, %v3143, 0
      %v3225 = vsel %vm436, %v3144, 0
      %v3228 = vsel %vm436, %v3145, 0
      %v3231 = vsel %vm436, %v3146, 0
      %v3234 = vsel %vm436, %v3147, 0
      %v3237 = vsel %vm436, %v3148, 0
      %v3240 = vsel %vm436, %v3149, 0
      %v3243 = vsel %vm436, %v3150, 0
      %v3246 = vsel %vm436, %v3151, 0
      %v3249 = vsel %vm533, %v177, 0
      %3251 = vmatprep.subr.mxu0 0.0
      %3252 = vmatpush1.msra.mxu0 0.0
      %3253 = vmatprep.subr.mxu0 0.0
      %3254 = vmatpush1.msra.mxu0 0.0
      %3255 = vmatprep.subr.mxu0 0.0
      %3256 = vmatpush1.msra.mxu0 0.0
      %3257 = vmatprep.subr.mxu0 0.0
      %3258 = vmatpush1.msra.mxu0 0.0
      %3259 = vmatprep.subr.mxu0 0.0
      %3260 = vmatpush1.msra.mxu0 0.0
      %3261 = vmatprep.subr.mxu0 0.0
      %3262 = vmatpush1.msra.mxu0 0.0
      %3263 = vmatprep.subr.mxu0 0.0
      %3264 = vmatpush1.msra.mxu0 0.0
      %3265 = vmatprep.subr.mxu0 0.0
      %3266 = vmatpush1.msra.mxu0 0.0
      %3267 = vmatprep.subr.mxu0 0.0
      %3268 = vmatpush1.msra.mxu0 0.0
      %3269 = vmatprep.subr.mxu0 0.0
      %3270 = vmatpush1.msra.mxu0 0.0
      %3271 = vmatprep.subr.mxu0 0.0
      %3272 = vmatpush1.msra.mxu0 0.0
      %3273 = vmatprep.subr.mxu0 0.0
      %3274 = vmatpush1.msra.mxu0 0.0
      %3275 = vmatprep.subr.mxu0 0.0
      %3276 = vmatpush1.msra.mxu0 0.0
      %3277 = vmatprep.subr.mxu0 0.0
      %3278 = vmatpush1.msra.mxu0 0.0
      %3279 = vmatprep.subr.mxu0 0.0
      %3280 = vmatpush1.msra.mxu0 0.0
      %3281 = vmatprep.subr.mxu0 0.0
      %3282 = vmatpush1.msra.mxu0 %v3249
      %3283 = vmatprep.subr.mxu0 0.0
      %3284 = vmatpush2.msra.mxu0 0.0
      %3285 = vmatprep.subr.mxu0 0.0
      %3286 = vmatpush2.msra.mxu0 0.0
      %3287 = vmatprep.subr.mxu0 0.0
      %3288 = vmatpush2.msra.mxu0 0.0
      %3289 = vmatprep.subr.mxu0 0.0
      %3290 = vmatpush2.msra.mxu0 0.0
      %3291 = vmatprep.subr.mxu0 0.0
      %3292 = vmatpush2.msra.mxu0 0.0
      %3293 = vmatprep.subr.mxu0 0.0
      %3294 = vmatpush2.msra.mxu0 0.0
      %3295 = vmatprep.subr.mxu0 0.0
      %3296 = vmatpush2.msra.mxu0 0.0
      %3297 = vmatprep.subr.mxu0 0.0
      %3298 = vmatpush2.msra.mxu0 0.0
      %3299 = vmatprep.subr.mxu0 0.0
      %3300 = vmatpush2.msra.mxu0 0.0
      %3301 = vmatprep.subr.mxu0 0.0
      %3302 = vmatpush2.msra.mxu0 0.0
      %3303 = vmatprep.subr.mxu0 0.0
      %3304 = vmatpush2.msra.mxu0 0.0
      %3305 = vmatprep.subr.mxu0 0.0
      %3306 = vmatpush2.msra.mxu0 0.0
      %3307 = vmatprep.subr.mxu0 0.0
      %3308 = vmatpush2.msra.mxu0 0.0
      %3309 = vmatprep.subr.mxu0 0.0
      %3310 = vmatpush2.msra.mxu0 0.0
      %3311 = vmatprep.subr.mxu0 0.0
      %3312 = vmatpush2.msra.mxu0 0.0
      %3313 = vmatprep.subr.mxu0 0.0
      %3314 = vmatpush2.msra.mxu0 0.0
      %3315 = vmatprep.mubr.f32.mxu0 0.0
      %3316 = vmatmul.mubr.f32.gmra.mxu0 %v3153
      %v3317 = vpop.f32.mrf.mxu0
      %v3318 = vadd.f32 0.0, %v3317
      %v3319 = vpop.f32.mrf.mxu0
      %3320 = vmatprep.mubr.f32.mxu0 0.0
      %3321 = vmatmul.mubr.f32.gmra.mxu0 %v3156
      %v3322 = vpop.f32.mrf.mxu0
      %v3323 = vadd.f32 0.0, %v3322
      %v3324 = vpop.f32.mrf.mxu0
      %3325 = vmatprep.mubr.f32.mxu0 0.0
      %3326 = vmatmul.mubr.f32.gmra.mxu0 %v3159
      %v3327 = vpop.f32.mrf.mxu0
      %v3328 = vadd.f32 0.0, %v3327
      %v3329 = vpop.f32.mrf.mxu0
      %3330 = vmatprep.mubr.f32.mxu0 0.0
      %3331 = vmatmul.mubr.f32.gmra.mxu0 %v3162
      %v3332 = vpop.f32.mrf.mxu0
      %v3333 = vadd.f32 0.0, %v3332
      %v3334 = vpop.f32.mrf.mxu0
      %3335 = vmatprep.mubr.f32.mxu0 0.0
      %3336 = vmatmul.mubr.f32.gmra.mxu0 %v3165
      %v3337 = vpop.f32.mrf.mxu0
      %v3338 = vadd.f32 0.0, %v3337
      %v3339 = vpop.f32.mrf.mxu0
      %3340 = vmatprep.mubr.f32.mxu0 0.0
      %3341 = vmatmul.mubr.f32.gmra.mxu0 %v3168
      %v3342 = vpop.f32.mrf.mxu0
      %v3343 = vadd.f32 0.0, %v3342
      %v3344 = vpop.f32.mrf.mxu0
      %3345 = vmatprep.mubr.f32.mxu0 0.0
      %3346 = vmatmul.mubr.f32.gmra.mxu0 %v3171
      %v3347 = vpop.f32.mrf.mxu0
      %v3348 = vadd.f32 0.0, %v3347
      %v3349 = vpop.f32.mrf.mxu0
      %3350 = vmatprep.mubr.f32.mxu0 0.0
      %3351 = vmatmul.mubr.f32.gmra.mxu0 %v3174
      %v3352 = vpop.f32.mrf.mxu0
      %v3353 = vadd.f32 0.0, %v3352
      %v3354 = vpop.f32.mrf.mxu0
      %3355 = vmatprep.mubr.f32.mxu0 0.0
      %3356 = vmatmul.mubr.f32.gmra.mxu0 %v3177
      %v3357 = vpop.f32.mrf.mxu0
      %v3358 = vadd.f32 0.0, %v3357
      %v3359 = vpop.f32.mrf.mxu0
      %3360 = vmatprep.mubr.f32.mxu0 0.0
      %3361 = vmatmul.mubr.f32.gmra.mxu0 %v3180
      %v3362 = vpop.f32.mrf.mxu0
      %v3363 = vadd.f32 0.0, %v3362
      %v3364 = vpop.f32.mrf.mxu0
      %3365 = vmatprep.mubr.f32.mxu0 0.0
      %3366 = vmatmul.mubr.f32.gmra.mxu0 %v3183
      %v3367 = vpop.f32.mrf.mxu0
      %v3368 = vadd.f32 0.0, %v3367
      %v3369 = vpop.f32.mrf.mxu0
      %3370 = vmatprep.mubr.f32.mxu0 0.0
      %3371 = vmatmul.mubr.f32.gmra.mxu0 %v3186
      %v3372 = vpop.f32.mrf.mxu0
      %v3373 = vadd.f32 0.0, %v3372
      %v3374 = vpop.f32.mrf.mxu0
      %3375 = vmatprep.mubr.f32.mxu0 0.0
      %3376 = vmatmul.mubr.f32.gmra.mxu0 %v3189
      %v3377 = vpop.f32.mrf.mxu0
      %v3378 = vadd.f32 0.0, %v3377
      %v3379 = vpop.f32.mrf.mxu0
      %3380 = vmatprep.mubr.f32.mxu0 0.0
      %3381 = vmatmul.mubr.f32.gmra.mxu0 %v3192
      %v3382 = vpop.f32.mrf.mxu0
      %v3383 = vadd.f32 0.0, %v3382
      %v3384 = vpop.f32.mrf.mxu0
      %3385 = vmatprep.mubr.f32.mxu0 0.0
      %3386 = vmatmul.mubr.f32.gmra.mxu0 %v3195
      %v3387 = vpop.f32.mrf.mxu0
      %v3388 = vadd.f32 0.0, %v3387
      %v3389 = vpop.f32.mrf.mxu0
      %3390 = vmatprep.mubr.f32.mxu0 0.0
      %3391 = vmatmul.mubr.f32.gmra.mxu0 %v3198
      %v3392 = vpop.f32.mrf.mxu0
      %v3393 = vadd.f32 0.0, %v3392
      %v3394 = vpop.f32.mrf.mxu0
      %3395 = vmatprep.mubr.f32.mxu0 0.0
      %3396 = vmatmul.mubr.f32.gmra.mxu0 %v3201
      %v3397 = vpop.f32.mrf.mxu0
      %v3398 = vadd.f32 0.0, %v3397
      %v3399 = vpop.f32.mrf.mxu0
      %3400 = vmatprep.mubr.f32.mxu0 0.0
      %3401 = vmatmul.mubr.f32.gmra.mxu0 %v3204
      %v3402 = vpop.f32.mrf.mxu0
      %v3403 = vadd.f32 0.0, %v3402
      %v3404 = vpop.f32.mrf.mxu0
      %3405 = vmatprep.mubr.f32.mxu0 0.0
      %3406 = vmatmul.mubr.f32.gmra.mxu0 %v3207
      %v3407 = vpop.f32.mrf.mxu0
      %v3408 = vadd.f32 0.0, %v3407
      %v3409 = vpop.f32.mrf.mxu0
      %3410 = vmatprep.mubr.f32.mxu0 0.0
      %3411 = vmatmul.mubr.f32.gmra.mxu0 %v3210
      %v3412 = vpop.f32.mrf.mxu0
      %v3413 = vadd.f32 0.0, %v3412
      %v3414 = vpop.f32.mrf.mxu0
      %3415 = vmatprep.mubr.f32.mxu0 0.0
      %3416 = vmatmul.mubr.f32.gmra.mxu0 %v3213
      %v3417 = vpop.f32.mrf.mxu0
      %v3418 = vadd.f32 0.0, %v3417
      %v3419 = vpop.f32.mrf.mxu0
      %3420 = vmatprep.mubr.f32.mxu0 0.0
      %3421 = vmatmul.mubr.f32.gmra.mxu0 %v3216
      %v3422 = vpop.f32.mrf.mxu0
      %v3423 = vadd.f32 0.0, %v3422
      %v3424 = vpop.f32.mrf.mxu0
      %3425 = vmatprep.mubr.f32.mxu0 0.0
      %3426 = vmatmul.mubr.f32.gmra.mxu0 %v3219
      %v3427 = vpop.f32.mrf.mxu0
      %v3428 = vadd.f32 0.0, %v3427
      %v3429 = vpop.f32.mrf.mxu0
      %3430 = vmatprep.mubr.f32.mxu0 0.0
      %3431 = vmatmul.mubr.f32.gmra.mxu0 %v3222
      %v3432 = vpop.f32.mrf.mxu0
      %v3433 = vadd.f32 0.0, %v3432
      %v3434 = vpop.f32.mrf.mxu0
      %3435 = vmatprep.mubr.f32.mxu0 0.0
      %3436 = vmatmul.mubr.f32.gmra.mxu0 %v3225
      %v3437 = vpop.f32.mrf.mxu0
      %v3438 = vadd.f32 0.0, %v3437
      %v3439 = vpop.f32.mrf.mxu0
      %3440 = vmatprep.mubr.f32.mxu0 0.0
      %3441 = vmatmul.mubr.f32.gmra.mxu0 %v3228
      %v3442 = vpop.f32.mrf.mxu0
      %v3443 = vadd.f32 0.0, %v3442
      %v3444 = vpop.f32.mrf.mxu0
      %3445 = vmatprep.mubr.f32.mxu0 0.0
      %3446 = vmatmul.mubr.f32.gmra.mxu0 %v3231
      %v3447 = vpop.f32.mrf.mxu0
      %v3448 = vadd.f32 0.0, %v3447
      %v3449 = vpop.f32.mrf.mxu0
      %3450 = vmatprep.mubr.f32.mxu0 0.0
      %3451 = vmatmul.mubr.f32.gmra.mxu0 %v3234
      %v3452 = vpop.f32.mrf.mxu0
      %v3453 = vadd.f32 0.0, %v3452
      %v3454 = vpop.f32.mrf.mxu0
      %3455 = vmatprep.mubr.f32.mxu0 0.0
      %3456 = vmatmul.mubr.f32.gmra.mxu0 %v3237
      %v3457 = vpop.f32.mrf.mxu0
      %v3458 = vadd.f32 0.0, %v3457
      %v3459 = vpop.f32.mrf.mxu0
      %3460 = vmatprep.mubr.f32.mxu0 0.0
      %3461 = vmatmul.mubr.f32.gmra.mxu0 %v3240
      %v3462 = vpop.f32.mrf.mxu0
      %v3463 = vadd.f32 0.0, %v3462
      %v3464 = vpop.f32.mrf.mxu0
      %3465 = vmatprep.mubr.f32.mxu0 0.0
      %3466 = vmatmul.mubr.f32.gmra.mxu0 %v3243
      %v3467 = vpop.f32.mrf.mxu0
      %v3468 = vadd.f32 0.0, %v3467
      %v3469 = vpop.f32.mrf.mxu0
      %3470 = vmatprep.mubr.f32.mxu0 0.0
      %3471 = vmatmul.mubr.f32.gmra.mxu0 %v3246
      %v3472 = vpop.f32.mrf.mxu0
      %v3473 = vadd.f32 0.0, %v3472
      %v3474 = vpop.f32.mrf.mxu0
      %3475 = vdwg.mxu0
      %v3476 = vadd.f32 %v2991, %v3318
      %v3477 = vadd.f32 %v2992, %v3323
      %v3478 = vadd.f32 %v2993, %v3328
      %v3479 = vadd.f32 %v2994, %v3333
      %v3480 = vadd.f32 %v2995, %v3338
      %v3481 = vadd.f32 %v2996, %v3343
      %v3482 = vadd.f32 %v2997, %v3348
      %v3483 = vadd.f32 %v2998, %v3353
      %v3484 = vadd.f32 %v2999, %v3358
      %v3485 = vadd.f32 %v3000, %v3363
      %v3486 = vadd.f32 %v3001, %v3368
      %v3487 = vadd.f32 %v3002, %v3373
      %v3488 = vadd.f32 %v3003, %v3378
      %v3489 = vadd.f32 %v3004, %v3383
      %v3490 = vadd.f32 %v3005, %v3388
      %v3491 = vadd.f32 %v3006, %v3393
      %v3492 = vadd.f32 %v3007, %v3398
      %v3493 = vadd.f32 %v3008, %v3403
      %v3494 = vadd.f32 %v3009, %v3408
      %v3495 = vadd.f32 %v3010, %v3413
      %v3496 = vadd.f32 %v3011, %v3418
      %v3497 = vadd.f32 %v3012, %v3423
      %v3498 = vadd.f32 %v3013, %v3428
      %v3499 = vadd.f32 %v3014, %v3433
      %v3500 = vadd.f32 %v3015, %v3438
      %v3501 = vadd.f32 %v3016, %v3443
      %v3502 = vadd.f32 %v3017, %v3448
      %v3503 = vadd.f32 %v3018, %v3453
      %v3504 = vadd.f32 %v3019, %v3458
      %v3505 = vadd.f32 %v3020, %v3463
      %v3506 = vadd.f32 %v3021, %v3468
      %v3507 = vadd.f32 %v3022, %v3473
      %v3508 = vld [vmem:[%s3023 + $0x1] sm:$0xff]
      %v3509 = vld [vmem:[%s3023 + $0x9] sm:$0xff]
      %v3510 = vld [vmem:[%s3023 + $0x19] sm:$0xff]
      %v3511 = vld [vmem:[%s3023 + $0x21] sm:$0xff]
      %v3512 = vld [vmem:[%s3023 + $0x31] sm:$0xff]
      %v3513 = vld [vmem:[%s3023 + $0x39] sm:$0xff]
      %v3514 = vld [vmem:[%s3023 + $0x49] sm:$0xff]
      %v3515 = vld [vmem:[%s3023 + $0x51] sm:$0xff]
      %v3516 = vld [vmem:[%s3023 + $0x61] sm:$0xff]
      %v3517 = vld [vmem:[%s3023 + $0x69] sm:$0xff]
      %v3518 = vld [vmem:[%s3023 + $0x79] sm:$0xff]
      %v3519 = vld [vmem:[%s3023 + $0x81] sm:$0xff]
      %v3520 = vld [vmem:[%s3023 + $0x91] sm:$0xff]
      %v3521 = vld [vmem:[%s3023 + $0x99] sm:$0xff]
      %v3522 = vld [vmem:[%s3023 + $0xa9] sm:$0xff]
      %v3523 = vld [vmem:[%s3023 + $0xb1] sm:$0xff]
      %v3524 = vld [vmem:[%s3023 + $0xc1] sm:$0xff]
      %v3525 = vld [vmem:[%s3023 + $0xc9] sm:$0xff]
      %v3526 = vld [vmem:[%s3023 + $0xd9] sm:$0xff]
      %v3527 = vld [vmem:[%s3023 + $0xe1] sm:$0xff]
      %v3528 = vld [vmem:[%s3023 + $0xf1] sm:$0xff]
      %v3529 = vld [vmem:[%s3023 + $0xf9] sm:$0xff]
      %v3530 = vld [vmem:[%s3023 + $0x109] sm:$0xff]
      %v3531 = vld [vmem:[%s3023 + $0x111] sm:$0xff]
      %v3532 = vld [vmem:[%s3023 + $0x121] sm:$0xff]
      %v3533 = vld [vmem:[%s3023 + $0x129] sm:$0xff]
      %v3534 = vld [vmem:[%s3023 + $0x139] sm:$0xff]
      %v3535 = vld [vmem:[%s3023 + $0x141] sm:$0xff]
      %v3536 = vld [vmem:[%s3023 + $0x151] sm:$0xff]
      %v3537 = vld [vmem:[%s3023 + $0x159] sm:$0xff]
      %v3538 = vld [vmem:[%s3023 + $0x169] sm:$0xff]
      %v3539 = vld [vmem:[%s3023 + $0x171] sm:$0xff]
      %vm3540 = vcmp.ge.f32.partialorder %v3508, 0.0
      %vm3541 = vcmp.ge.f32.partialorder %v3509, 0.0
      %vm3542 = vcmp.ge.f32.partialorder %v3510, 0.0
      %vm3543 = vcmp.ge.f32.partialorder %v3511, 0.0
      %vm3544 = vcmp.ge.f32.partialorder %v3512, 0.0
      %vm3545 = vcmp.ge.f32.partialorder %v3513, 0.0
      %vm3546 = vcmp.ge.f32.partialorder %v3514, 0.0
      %vm3547 = vcmp.ge.f32.partialorder %v3515, 0.0
      %vm3548 = vcmp.ge.f32.partialorder %v3516, 0.0
      %vm3549 = vcmp.ge.f32.partialorder %v3517, 0.0
      %vm3550 = vcmp.ge.f32.partialorder %v3518, 0.0
      %vm3551 = vcmp.ge.f32.partialorder %v3519, 0.0
      %vm3552 = vcmp.ge.f32.partialorder %v3520, 0.0
      %vm3553 = vcmp.ge.f32.partialorder %v3521, 0.0
      %vm3554 = vcmp.ge.f32.partialorder %v3522, 0.0
      %vm3555 = vcmp.ge.f32.partialorder %v3523, 0.0
      %vm3556 = vcmp.ge.f32.partialorder %v3524, 0.0
      %vm3557 = vcmp.ge.f32.partialorder %v3525, 0.0
      %vm3558 = vcmp.ge.f32.partialorder %v3526, 0.0
      %vm3559 = vcmp.ge.f32.partialorder %v3527, 0.0
      %vm3560 = vcmp.ge.f32.partialorder %v3528, 0.0
      %vm3561 = vcmp.ge.f32.partialorder %v3529, 0.0
      %vm3562 = vcmp.ge.f32.partialorder %v3530, 0.0
      %vm3563 = vcmp.ge.f32.partialorder %v3531, 0.0
      %vm3564 = vcmp.ge.f32.partialorder %v3532, 0.0
      %vm3565 = vcmp.ge.f32.partialorder %v3533, 0.0
      %vm3566 = vcmp.ge.f32.partialorder %v3534, 0.0
      %vm3567 = vcmp.ge.f32.partialorder %v3535, 0.0
      %vm3568 = vcmp.ge.f32.partialorder %v3536, 0.0
      %vm3569 = vcmp.ge.f32.partialorder %v3537, 0.0
      %vm3570 = vcmp.ge.f32.partialorder %v3538, 0.0
      %vm3571 = vcmp.ge.f32.partialorder %v3539, 0.0
      %v3572 = vmul.f32 %v3508, 0.2
      %v3573 = vmul.f32 %v3509, 0.2
      %v3574 = vmul.f32 %v3510, 0.2
      %v3575 = vmul.f32 %v3511, 0.2
      %v3576 = vmul.f32 %v3512, 0.2
      %v3577 = vmul.f32 %v3513, 0.2
      %v3578 = vmul.f32 %v3514, 0.2
      %v3579 = vmul.f32 %v3515, 0.2
      %v3580 = vmul.f32 %v3516, 0.2
      %v3581 = vmul.f32 %v3517, 0.2
      %v3582 = vmul.f32 %v3518, 0.2
      %v3583 = vmul.f32 %v3519, 0.2
      %v3584 = vmul.f32 %v3520, 0.2
      %v3585 = vmul.f32 %v3521, 0.2
      %v3586 = vmul.f32 %v3522, 0.2
      %v3587 = vmul.f32 %v3523, 0.2
      %v3588 = vmul.f32 %v3524, 0.2
      %v3589 = vmul.f32 %v3525, 0.2
      %v3590 = vmul.f32 %v3526, 0.2
      %v3591 = vmul.f32 %v3527, 0.2
      %v3592 = vmul.f32 %v3528, 0.2
      %v3593 = vmul.f32 %v3529, 0.2
      %v3594 = vmul.f32 %v3530, 0.2
      %v3595 = vmul.f32 %v3531, 0.2
      %v3596 = vmul.f32 %v3532, 0.2
      %v3597 = vmul.f32 %v3533, 0.2
      %v3598 = vmul.f32 %v3534, 0.2
      %v3599 = vmul.f32 %v3535, 0.2
      %v3600 = vmul.f32 %v3536, 0.2
      %v3601 = vmul.f32 %v3537, 0.2
      %v3602 = vmul.f32 %v3538, 0.2
      %v3603 = vmul.f32 %v3539, 0.2
      %v3604 = vsel %vm3540, %v3508, %v3572
      %v3605 = vsel %vm3541, %v3509, %v3573
      %v3606 = vsel %vm3542, %v3510, %v3574
      %v3607 = vsel %vm3543, %v3511, %v3575
      %v3608 = vsel %vm3544, %v3512, %v3576
      %v3609 = vsel %vm3545, %v3513, %v3577
      %v3610 = vsel %vm3546, %v3514, %v3578
      %v3611 = vsel %vm3547, %v3515, %v3579
      %v3612 = vsel %vm3548, %v3516, %v3580
      %v3613 = vsel %vm3549, %v3517, %v3581
      %v3614 = vsel %vm3550, %v3518, %v3582
      %v3615 = vsel %vm3551, %v3519, %v3583
      %v3616 = vsel %vm3552, %v3520, %v3584
      %v3617 = vsel %vm3553, %v3521, %v3585
      %v3618 = vsel %vm3554, %v3522, %v3586
      %v3619 = vsel %vm3555, %v3523, %v3587
      %v3620 = vsel %vm3556, %v3524, %v3588
      %v3621 = vsel %vm3557, %v3525, %v3589
      %v3622 = vsel %vm3558, %v3526, %v3590
      %v3623 = vsel %vm3559, %v3527, %v3591
      %v3624 = vsel %vm3560, %v3528, %v3592
      %v3625 = vsel %vm3561, %v3529, %v3593
      %v3626 = vsel %vm3562, %v3530, %v3594
      %v3627 = vsel %vm3563, %v3531, %v3595
      %v3628 = vsel %vm3564, %v3532, %v3596
      %v3629 = vsel %vm3565, %v3533, %v3597
      %v3630 = vsel %vm3566, %v3534, %v3598
      %v3631 = vsel %vm3567, %v3535, %v3599
      %v3632 = vsel %vm3568, %v3536, %v3600
      %v3633 = vsel %vm3569, %v3537, %v3601
      %v3634 = vsel %vm3570, %v3538, %v3602
      %v3635 = vsel %vm3571, %v3539, %v3603
      %v3637 = vsel %vm436, %v3604, 0
      %v3640 = vsel %vm436, %v3605, 0
      %v3643 = vsel %vm436, %v3606, 0
      %v3646 = vsel %vm436, %v3607, 0
      %v3649 = vsel %vm436, %v3608, 0
      %v3652 = vsel %vm436, %v3609, 0
      %v3655 = vsel %vm436, %v3610, 0
      %v3658 = vsel %vm436, %v3611, 0
      %v3661 = vsel %vm436, %v3612, 0
      %v3664 = vsel %vm436, %v3613, 0
      %v3667 = vsel %vm436, %v3614, 0
      %v3670 = vsel %vm436, %v3615, 0
      %v3673 = vsel %vm436, %v3616, 0
      %v3676 = vsel %vm436, %v3617, 0
      %v3679 = vsel %vm436, %v3618, 0
      %v3682 = vsel %vm436, %v3619, 0
      %v3685 = vsel %vm436, %v3620, 0
      %v3688 = vsel %vm436, %v3621, 0
      %v3691 = vsel %vm436, %v3622, 0
      %v3694 = vsel %vm436, %v3623, 0
      %v3697 = vsel %vm436, %v3624, 0
      %v3700 = vsel %vm436, %v3625, 0
      %v3703 = vsel %vm436, %v3626, 0
      %v3706 = vsel %vm436, %v3627, 0
      %v3709 = vsel %vm436, %v3628, 0
      %v3712 = vsel %vm436, %v3629, 0
      %v3715 = vsel %vm436, %v3630, 0
      %v3718 = vsel %vm436, %v3631, 0
      %v3721 = vsel %vm436, %v3632, 0
      %v3724 = vsel %vm436, %v3633, 0
      %v3727 = vsel %vm436, %v3634, 0
      %v3730 = vsel %vm436, %v3635, 0
      %v3733 = vsel %vm533, %v178, 0
      %3735 = vmatprep.subr.mxu0 0.0
      %3736 = vmatpush1.msra.mxu0 0.0
      %3737 = vmatprep.subr.mxu0 0.0
      %3738 = vmatpush1.msra.mxu0 0.0
      %3739 = vmatprep.subr.mxu0 0.0
      %3740 = vmatpush1.msra.mxu0 0.0
      %3741 = vmatprep.subr.mxu0 0.0
      %3742 = vmatpush1.msra.mxu0 0.0
      %3743 = vmatprep.subr.mxu0 0.0
      %3744 = vmatpush1.msra.mxu0 0.0
      %3745 = vmatprep.subr.mxu0 0.0
      %3746 = vmatpush1.msra.mxu0 0.0
      %3747 = vmatprep.subr.mxu0 0.0
      %3748 = vmatpush1.msra.mxu0 0.0
      %3749 = vmatprep.subr.mxu0 0.0
      %3750 = vmatpush1.msra.mxu0 0.0
      %3751 = vmatprep.subr.mxu0 0.0
      %3752 = vmatpush1.msra.mxu0 0.0
      %3753 = vmatprep.subr.mxu0 0.0
      %3754 = vmatpush1.msra.mxu0 0.0
      %3755 = vmatprep.subr.mxu0 0.0
      %3756 = vmatpush1.msra.mxu0 0.0
      %3757 = vmatprep.subr.mxu0 0.0
      %3758 = vmatpush1.msra.mxu0 0.0
      %3759 = vmatprep.subr.mxu0 0.0
      %3760 = vmatpush1.msra.mxu0 0.0
      %3761 = vmatprep.subr.mxu0 0.0
      %3762 = vmatpush1.msra.mxu0 0.0
      %3763 = vmatprep.subr.mxu0 0.0
      %3764 = vmatpush1.msra.mxu0 0.0
      %3765 = vmatprep.subr.mxu0 0.0
      %3766 = vmatpush1.msra.mxu0 %v3733
      %3767 = vmatprep.subr.mxu0 0.0
      %3768 = vmatpush2.msra.mxu0 0.0
      %3769 = vmatprep.subr.mxu0 0.0
      %3770 = vmatpush2.msra.mxu0 0.0
      %3771 = vmatprep.subr.mxu0 0.0
      %3772 = vmatpush2.msra.mxu0 0.0
      %3773 = vmatprep.subr.mxu0 0.0
      %3774 = vmatpush2.msra.mxu0 0.0
      %3775 = vmatprep.subr.mxu0 0.0
      %3776 = vmatpush2.msra.mxu0 0.0
      %3777 = vmatprep.subr.mxu0 0.0
      %3778 = vmatpush2.msra.mxu0 0.0
      %3779 = vmatprep.subr.mxu0 0.0
      %3780 = vmatpush2.msra.mxu0 0.0
      %3781 = vmatprep.subr.mxu0 0.0
      %3782 = vmatpush2.msra.mxu0 0.0
      %3783 = vmatprep.subr.mxu0 0.0
      %3784 = vmatpush2.msra.mxu0 0.0
      %3785 = vmatprep.subr.mxu0 0.0
      %3786 = vmatpush2.msra.mxu0 0.0
      %3787 = vmatprep.subr.mxu0 0.0
      %3788 = vmatpush2.msra.mxu0 0.0
      %3789 = vmatprep.subr.mxu0 0.0
      %3790 = vmatpush2.msra.mxu0 0.0
      %3791 = vmatprep.subr.mxu0 0.0
      %3792 = vmatpush2.msra.mxu0 0.0
      %3793 = vmatprep.subr.mxu0 0.0
      %3794 = vmatpush2.msra.mxu0 0.0
      %3795 = vmatprep.subr.mxu0 0.0
      %3796 = vmatpush2.msra.mxu0 0.0
      %3797 = vmatprep.subr.mxu0 0.0
      %3798 = vmatpush2.msra.mxu0 0.0
      %3799 = vmatprep.mubr.f32.mxu0 0.0
      %3800 = vmatmul.mubr.f32.gmra.mxu0 %v3637
      %v3801 = vpop.f32.mrf.mxu0
      %v3802 = vadd.f32 0.0, %v3801
      %v3803 = vpop.f32.mrf.mxu0
      %3804 = vmatprep.mubr.f32.mxu0 0.0
      %3805 = vmatmul.mubr.f32.gmra.mxu0 %v3640
      %v3806 = vpop.f32.mrf.mxu0
      %v3807 = vadd.f32 0.0, %v3806
      %v3808 = vpop.f32.mrf.mxu0
      %3809 = vmatprep.mubr.f32.mxu0 0.0
      %3810 = vmatmul.mubr.f32.gmra.mxu0 %v3643
      %v3811 = vpop.f32.mrf.mxu0
      %v3812 = vadd.f32 0.0, %v3811
      %v3813 = vpop.f32.mrf.mxu0
      %3814 = vmatprep.mubr.f32.mxu0 0.0
      %3815 = vmatmul.mubr.f32.gmra.mxu0 %v3646
      %v3816 = vpop.f32.mrf.mxu0
      %v3817 = vadd.f32 0.0, %v3816
      %v3818 = vpop.f32.mrf.mxu0
      %3819 = vmatprep.mubr.f32.mxu0 0.0
      %3820 = vmatmul.mubr.f32.gmra.mxu0 %v3649
      %v3821 = vpop.f32.mrf.mxu0
      %v3822 = vadd.f32 0.0, %v3821
      %v3823 = vpop.f32.mrf.mxu0
      %3824 = vmatprep.mubr.f32.mxu0 0.0
      %3825 = vmatmul.mubr.f32.gmra.mxu0 %v3652
      %v3826 = vpop.f32.mrf.mxu0
      %v3827 = vadd.f32 0.0, %v3826
      %v3828 = vpop.f32.mrf.mxu0
      %3829 = vmatprep.mubr.f32.mxu0 0.0
      %3830 = vmatmul.mubr.f32.gmra.mxu0 %v3655
      %v3831 = vpop.f32.mrf.mxu0
      %v3832 = vadd.f32 0.0, %v3831
      %v3833 = vpop.f32.mrf.mxu0
      %3834 = vmatprep.mubr.f32.mxu0 0.0
      %3835 = vmatmul.mubr.f32.gmra.mxu0 %v3658
      %v3836 = vpop.f32.mrf.mxu0
      %v3837 = vadd.f32 0.0, %v3836
      %v3838 = vpop.f32.mrf.mxu0
      %3839 = vmatprep.mubr.f32.mxu0 0.0
      %3840 = vmatmul.mubr.f32.gmra.mxu0 %v3661
      %v3841 = vpop.f32.mrf.mxu0
      %v3842 = vadd.f32 0.0, %v3841
      %v3843 = vpop.f32.mrf.mxu0
      %3844 = vmatprep.mubr.f32.mxu0 0.0
      %3845 = vmatmul.mubr.f32.gmra.mxu0 %v3664
      %v3846 = vpop.f32.mrf.mxu0
      %v3847 = vadd.f32 0.0, %v3846
      %v3848 = vpop.f32.mrf.mxu0
      %3849 = vmatprep.mubr.f32.mxu0 0.0
      %3850 = vmatmul.mubr.f32.gmra.mxu0 %v3667
      %v3851 = vpop.f32.mrf.mxu0
      %v3852 = vadd.f32 0.0, %v3851
      %v3853 = vpop.f32.mrf.mxu0
      %3854 = vmatprep.mubr.f32.mxu0 0.0
      %3855 = vmatmul.mubr.f32.gmra.mxu0 %v3670
      %v3856 = vpop.f32.mrf.mxu0
      %v3857 = vadd.f32 0.0, %v3856
      %v3858 = vpop.f32.mrf.mxu0
      %3859 = vmatprep.mubr.f32.mxu0 0.0
      %3860 = vmatmul.mubr.f32.gmra.mxu0 %v3673
      %v3861 = vpop.f32.mrf.mxu0
      %v3862 = vadd.f32 0.0, %v3861
      %v3863 = vpop.f32.mrf.mxu0
      %3864 = vmatprep.mubr.f32.mxu0 0.0
      %3865 = vmatmul.mubr.f32.gmra.mxu0 %v3676
      %v3866 = vpop.f32.mrf.mxu0
      %v3867 = vadd.f32 0.0, %v3866
      %v3868 = vpop.f32.mrf.mxu0
      %3869 = vmatprep.mubr.f32.mxu0 0.0
      %3870 = vmatmul.mubr.f32.gmra.mxu0 %v3679
      %v3871 = vpop.f32.mrf.mxu0
      %v3872 = vadd.f32 0.0, %v3871
      %v3873 = vpop.f32.mrf.mxu0
      %3874 = vmatprep.mubr.f32.mxu0 0.0
      %3875 = vmatmul.mubr.f32.gmra.mxu0 %v3682
      %v3876 = vpop.f32.mrf.mxu0
      %v3877 = vadd.f32 0.0, %v3876
      %v3878 = vpop.f32.mrf.mxu0
      %3879 = vmatprep.mubr.f32.mxu0 0.0
      %3880 = vmatmul.mubr.f32.gmra.mxu0 %v3685
      %v3881 = vpop.f32.mrf.mxu0
      %v3882 = vadd.f32 0.0, %v3881
      %v3883 = vpop.f32.mrf.mxu0
      %3884 = vmatprep.mubr.f32.mxu0 0.0
      %3885 = vmatmul.mubr.f32.gmra.mxu0 %v3688
      %v3886 = vpop.f32.mrf.mxu0
      %v3887 = vadd.f32 0.0, %v3886
      %v3888 = vpop.f32.mrf.mxu0
      %3889 = vmatprep.mubr.f32.mxu0 0.0
      %3890 = vmatmul.mubr.f32.gmra.mxu0 %v3691
      %v3891 = vpop.f32.mrf.mxu0
      %v3892 = vadd.f32 0.0, %v3891
      %v3893 = vpop.f32.mrf.mxu0
      %3894 = vmatprep.mubr.f32.mxu0 0.0
      %3895 = vmatmul.mubr.f32.gmra.mxu0 %v3694
      %v3896 = vpop.f32.mrf.mxu0
      %v3897 = vadd.f32 0.0, %v3896
      %v3898 = vpop.f32.mrf.mxu0
      %3899 = vmatprep.mubr.f32.mxu0 0.0
      %3900 = vmatmul.mubr.f32.gmra.mxu0 %v3697
      %v3901 = vpop.f32.mrf.mxu0
      %v3902 = vadd.f32 0.0, %v3901
      %v3903 = vpop.f32.mrf.mxu0
      %3904 = vmatprep.mubr.f32.mxu0 0.0
      %3905 = vmatmul.mubr.f32.gmra.mxu0 %v3700
      %v3906 = vpop.f32.mrf.mxu0
      %v3907 = vadd.f32 0.0, %v3906
      %v3908 = vpop.f32.mrf.mxu0
      %3909 = vmatprep.mubr.f32.mxu0 0.0
      %3910 = vmatmul.mubr.f32.gmra.mxu0 %v3703
      %v3911 = vpop.f32.mrf.mxu0
      %v3912 = vadd.f32 0.0, %v3911
      %v3913 = vpop.f32.mrf.mxu0
      %3914 = vmatprep.mubr.f32.mxu0 0.0
      %3915 = vmatmul.mubr.f32.gmra.mxu0 %v3706
      %v3916 = vpop.f32.mrf.mxu0
      %v3917 = vadd.f32 0.0, %v3916
      %v3918 = vpop.f32.mrf.mxu0
      %3919 = vmatprep.mubr.f32.mxu0 0.0
      %3920 = vmatmul.mubr.f32.gmra.mxu0 %v3709
      %v3921 = vpop.f32.mrf.mxu0
      %v3922 = vadd.f32 0.0, %v3921
      %v3923 = vpop.f32.mrf.mxu0
      %3924 = vmatprep.mubr.f32.mxu0 0.0
      %3925 = vmatmul.mubr.f32.gmra.mxu0 %v3712
      %v3926 = vpop.f32.mrf.mxu0
      %v3927 = vadd.f32 0.0, %v3926
      %v3928 = vpop.f32.mrf.mxu0
      %3929 = vmatprep.mubr.f32.mxu0 0.0
      %3930 = vmatmul.mubr.f32.gmra.mxu0 %v3715
      %v3931 = vpop.f32.mrf.mxu0
      %v3932 = vadd.f32 0.0, %v3931
      %v3933 = vpop.f32.mrf.mxu0
      %3934 = vmatprep.mubr.f32.mxu0 0.0
      %3935 = vmatmul.mubr.f32.gmra.mxu0 %v3718
      %v3936 = vpop.f32.mrf.mxu0
      %v3937 = vadd.f32 0.0, %v3936
      %v3938 = vpop.f32.mrf.mxu0
      %3939 = vmatprep.mubr.f32.mxu0 0.0
      %3940 = vmatmul.mubr.f32.gmra.mxu0 %v3721
      %v3941 = vpop.f32.mrf.mxu0
      %v3942 = vadd.f32 0.0, %v3941
      %v3943 = vpop.f32.mrf.mxu0
      %3944 = vmatprep.mubr.f32.mxu0 0.0
      %3945 = vmatmul.mubr.f32.gmra.mxu0 %v3724
      %v3946 = vpop.f32.mrf.mxu0
      %v3947 = vadd.f32 0.0, %v3946
      %v3948 = vpop.f32.mrf.mxu0
      %3949 = vmatprep.mubr.f32.mxu0 0.0
      %3950 = vmatmul.mubr.f32.gmra.mxu0 %v3727
      %v3951 = vpop.f32.mrf.mxu0
      %v3952 = vadd.f32 0.0, %v3951
      %v3953 = vpop.f32.mrf.mxu0
      %3954 = vmatprep.mubr.f32.mxu0 0.0
      %3955 = vmatmul.mubr.f32.gmra.mxu0 %v3730
      %v3956 = vpop.f32.mrf.mxu0
      %v3957 = vadd.f32 0.0, %v3956
      %v3958 = vpop.f32.mrf.mxu0
      %3959 = vdwg.mxu0
      %v3960 = vadd.f32 %v3476, %v3802
      %v3961 = vadd.f32 %v3477, %v3807
      %v3962 = vadd.f32 %v3478, %v3812
      %v3963 = vadd.f32 %v3479, %v3817
      %v3964 = vadd.f32 %v3480, %v3822
      %v3965 = vadd.f32 %v3481, %v3827
      %v3966 = vadd.f32 %v3482, %v3832
      %v3967 = vadd.f32 %v3483, %v3837
      %v3968 = vadd.f32 %v3484, %v3842
      %v3969 = vadd.f32 %v3485, %v3847
      %v3970 = vadd.f32 %v3486, %v3852
      %v3971 = vadd.f32 %v3487, %v3857
      %v3972 = vadd.f32 %v3488, %v3862
      %v3973 = vadd.f32 %v3489, %v3867
      %v3974 = vadd.f32 %v3490, %v3872
      %v3975 = vadd.f32 %v3491, %v3877
      %v3976 = vadd.f32 %v3492, %v3882
      %v3977 = vadd.f32 %v3493, %v3887
      %v3978 = vadd.f32 %v3494, %v3892
      %v3979 = vadd.f32 %v3495, %v3897
      %v3980 = vadd.f32 %v3496, %v3902
      %v3981 = vadd.f32 %v3497, %v3907
      %v3982 = vadd.f32 %v3498, %v3912
      %v3983 = vadd.f32 %v3499, %v3917
      %v3984 = vadd.f32 %v3500, %v3922
      %v3985 = vadd.f32 %v3501, %v3927
      %v3986 = vadd.f32 %v3502, %v3932
      %v3987 = vadd.f32 %v3503, %v3937
      %v3988 = vadd.f32 %v3504, %v3942
      %v3989 = vadd.f32 %v3505, %v3947
      %v3990 = vadd.f32 %v3506, %v3952
      %v3991 = vadd.f32 %v3507, %v3957
      %v3992 = vld [vmem:[%s3023 + $0x2] sm:$0xff]
      %v3993 = vld [vmem:[%s3023 + $0xa] sm:$0xff]
      %v3994 = vld [vmem:[%s3023 + $0x1a] sm:$0xff]
      %v3995 = vld [vmem:[%s3023 + $0x22] sm:$0xff]
      %v3996 = vld [vmem:[%s3023 + $0x32] sm:$0xff]
      %v3997 = vld [vmem:[%s3023 + $0x3a] sm:$0xff]
      %v3998 = vld [vmem:[%s3023 + $0x4a] sm:$0xff]
      %v3999 = vld [vmem:[%s3023 + $0x52] sm:$0xff]
      %v4000 = vld [vmem:[%s3023 + $0x62] sm:$0xff]
      %v4001 = vld [vmem:[%s3023 + $0x6a] sm:$0xff]
      %v4002 = vld [vmem:[%s3023 + $0x7a] sm:$0xff]
      %v4003 = vld [vmem:[%s3023 + $0x82] sm:$0xff]
      %v4004 = vld [vmem:[%s3023 + $0x92] sm:$0xff]
      %v4005 = vld [vmem:[%s3023 + $0x9a] sm:$0xff]
      %v4006 = vld [vmem:[%s3023 + $0xaa] sm:$0xff]
      %v4007 = vld [vmem:[%s3023 + $0xb2] sm:$0xff]
      %v4008 = vld [vmem:[%s3023 + $0xc2] sm:$0xff]
      %v4009 = vld [vmem:[%s3023 + $0xca] sm:$0xff]
      %v4010 = vld [vmem:[%s3023 + $0xda] sm:$0xff]
      %v4011 = vld [vmem:[%s3023 + $0xe2] sm:$0xff]
      %v4012 = vld [vmem:[%s3023 + $0xf2] sm:$0xff]
      %v4013 = vld [vmem:[%s3023 + $0xfa] sm:$0xff]
      %v4014 = vld [vmem:[%s3023 + $0x10a] sm:$0xff]
      %v4015 = vld [vmem:[%s3023 + $0x112] sm:$0xff]
      %v4016 = vld [vmem:[%s3023 + $0x122] sm:$0xff]
      %v4017 = vld [vmem:[%s3023 + $0x12a] sm:$0xff]
      %v4018 = vld [vmem:[%s3023 + $0x13a] sm:$0xff]
      %v4019 = vld [vmem:[%s3023 + $0x142] sm:$0xff]
      %v4020 = vld [vmem:[%s3023 + $0x152] sm:$0xff]
      %v4021 = vld [vmem:[%s3023 + $0x15a] sm:$0xff]
      %v4022 = vld [vmem:[%s3023 + $0x16a] sm:$0xff]
      %v4023 = vld [vmem:[%s3023 + $0x172] sm:$0xff]
      %vm4024 = vcmp.ge.f32.partialorder %v3992, 0.0
      %vm4025 = vcmp.ge.f32.partialorder %v3993, 0.0
      %vm4026 = vcmp.ge.f32.partialorder %v3994, 0.0
      %vm4027 = vcmp.ge.f32.partialorder %v3995, 0.0
      %vm4028 = vcmp.ge.f32.partialorder %v3996, 0.0
      %vm4029 = vcmp.ge.f32.partialorder %v3997, 0.0
      %vm4030 = vcmp.ge.f32.partialorder %v3998, 0.0
      %vm4031 = vcmp.ge.f32.partialorder %v3999, 0.0
      %vm4032 = vcmp.ge.f32.partialorder %v4000, 0.0
      %vm4033 = vcmp.ge.f32.partialorder %v4001, 0.0
      %vm4034 = vcmp.ge.f32.partialorder %v4002, 0.0
      %vm4035 = vcmp.ge.f32.partialorder %v4003, 0.0
      %vm4036 = vcmp.ge.f32.partialorder %v4004, 0.0
      %vm4037 = vcmp.ge.f32.partialorder %v4005, 0.0
      %vm4038 = vcmp.ge.f32.partialorder %v4006, 0.0
      %vm4039 = vcmp.ge.f32.partialorder %v4007, 0.0
      %vm4040 = vcmp.ge.f32.partialorder %v4008, 0.0
      %vm4041 = vcmp.ge.f32.partialorder %v4009, 0.0
      %vm4042 = vcmp.ge.f32.partialorder %v4010, 0.0
      %vm4043 = vcmp.ge.f32.partialorder %v4011, 0.0
      %vm4044 = vcmp.ge.f32.partialorder %v4012, 0.0
      %vm4045 = vcmp.ge.f32.partialorder %v4013, 0.0
      %vm4046 = vcmp.ge.f32.partialorder %v4014, 0.0
      %vm4047 = vcmp.ge.f32.partialorder %v4015, 0.0
      %vm4048 = vcmp.ge.f32.partialorder %v4016, 0.0
      %vm4049 = vcmp.ge.f32.partialorder %v4017, 0.0
      %vm4050 = vcmp.ge.f32.partialorder %v4018, 0.0
      %vm4051 = vcmp.ge.f32.partialorder %v4019, 0.0
      %vm4052 = vcmp.ge.f32.partialorder %v4020, 0.0
      %vm4053 = vcmp.ge.f32.partialorder %v4021, 0.0
      %vm4054 = vcmp.ge.f32.partialorder %v4022, 0.0
      %vm4055 = vcmp.ge.f32.partialorder %v4023, 0.0
      %v4056 = vmul.f32 %v3992, 0.2
      %v4057 = vmul.f32 %v3993, 0.2
      %v4058 = vmul.f32 %v3994, 0.2
      %v4059 = vmul.f32 %v3995, 0.2
      %v4060 = vmul.f32 %v3996, 0.2
      %v4061 = vmul.f32 %v3997, 0.2
      %v4062 = vmul.f32 %v3998, 0.2
      %v4063 = vmul.f32 %v3999, 0.2
      %v4064 = vmul.f32 %v4000, 0.2
      %v4065 = vmul.f32 %v4001, 0.2
      %v4066 = vmul.f32 %v4002, 0.2
      %v4067 = vmul.f32 %v4003, 0.2
      %v4068 = vmul.f32 %v4004, 0.2
      %v4069 = vmul.f32 %v4005, 0.2
      %v4070 = vmul.f32 %v4006, 0.2
      %v4071 = vmul.f32 %v4007, 0.2
      %v4072 = vmul.f32 %v4008, 0.2
      %v4073 = vmul.f32 %v4009, 0.2
      %v4074 = vmul.f32 %v4010, 0.2
      %v4075 = vmul.f32 %v4011, 0.2
      %v4076 = vmul.f32 %v4012, 0.2
      %v4077 = vmul.f32 %v4013, 0.2
      %v4078 = vmul.f32 %v4014, 0.2
      %v4079 = vmul.f32 %v4015, 0.2
      %v4080 = vmul.f32 %v4016, 0.2
      %v4081 = vmul.f32 %v4017, 0.2
      %v4082 = vmul.f32 %v4018, 0.2
      %v4083 = vmul.f32 %v4019, 0.2
      %v4084 = vmul.f32 %v4020, 0.2
      %v4085 = vmul.f32 %v4021, 0.2
      %v4086 = vmul.f32 %v4022, 0.2
      %v4087 = vmul.f32 %v4023, 0.2
      %v4088 = vsel %vm4024, %v3992, %v4056
      %v4089 = vsel %vm4025, %v3993, %v4057
      %v4090 = vsel %vm4026, %v3994, %v4058
      %v4091 = vsel %vm4027, %v3995, %v4059
      %v4092 = vsel %vm4028, %v3996, %v4060
      %v4093 = vsel %vm4029, %v3997, %v4061
      %v4094 = vsel %vm4030, %v3998, %v4062
      %v4095 = vsel %vm4031, %v3999, %v4063
      %v4096 = vsel %vm4032, %v4000, %v4064
      %v4097 = vsel %vm4033, %v4001, %v4065
      %v4098 = vsel %vm4034, %v4002, %v4066
      %v4099 = vsel %vm4035, %v4003, %v4067
      %v4100 = vsel %vm4036, %v4004, %v4068
      %v4101 = vsel %vm4037, %v4005, %v4069
      %v4102 = vsel %vm4038, %v4006, %v4070
      %v4103 = vsel %vm4039, %v4007, %v4071
      %v4104 = vsel %vm4040, %v4008, %v4072
      %v4105 = vsel %vm4041, %v4009, %v4073
      %v4106 = vsel %vm4042, %v4010, %v4074
      %v4107 = vsel %vm4043, %v4011, %v4075
      %v4108 = vsel %vm4044, %v4012, %v4076
      %v4109 = vsel %vm4045, %v4013, %v4077
      %v4110 = vsel %vm4046, %v4014, %v4078
      %v4111 = vsel %vm4047, %v4015, %v4079
      %v4112 = vsel %vm4048, %v4016, %v4080
      %v4113 = vsel %vm4049, %v4017, %v4081
      %v4114 = vsel %vm4050, %v4018, %v4082
      %v4115 = vsel %vm4051, %v4019, %v4083
      %v4116 = vsel %vm4052, %v4020, %v4084
      %v4117 = vsel %vm4053, %v4021, %v4085
      %v4118 = vsel %vm4054, %v4022, %v4086
      %v4119 = vsel %vm4055, %v4023, %v4087
      %v4121 = vsel %vm436, %v4088, 0
      %v4124 = vsel %vm436, %v4089, 0
      %v4127 = vsel %vm436, %v4090, 0
      %v4130 = vsel %vm436, %v4091, 0
      %v4133 = vsel %vm436, %v4092, 0
      %v4136 = vsel %vm436, %v4093, 0
      %v4139 = vsel %vm436, %v4094, 0
      %v4142 = vsel %vm436, %v4095, 0
      %v4145 = vsel %vm436, %v4096, 0
      %v4148 = vsel %vm436, %v4097, 0
      %v4151 = vsel %vm436, %v4098, 0
      %v4154 = vsel %vm436, %v4099, 0
      %v4157 = vsel %vm436, %v4100, 0
      %v4160 = vsel %vm436, %v4101, 0
      %v4163 = vsel %vm436, %v4102, 0
      %v4166 = vsel %vm436, %v4103, 0
      %v4169 = vsel %vm436, %v4104, 0
      %v4172 = vsel %vm436, %v4105, 0
      %v4175 = vsel %vm436, %v4106, 0
      %v4178 = vsel %vm436, %v4107, 0
      %v4181 = vsel %vm436, %v4108, 0
      %v4184 = vsel %vm436, %v4109, 0
      %v4187 = vsel %vm436, %v4110, 0
      %v4190 = vsel %vm436, %v4111, 0
      %v4193 = vsel %vm436, %v4112, 0
      %v4196 = vsel %vm436, %v4113, 0
      %v4199 = vsel %vm436, %v4114, 0
      %v4202 = vsel %vm436, %v4115, 0
      %v4205 = vsel %vm436, %v4116, 0
      %v4208 = vsel %vm436, %v4117, 0
      %v4211 = vsel %vm436, %v4118, 0
      %v4214 = vsel %vm436, %v4119, 0
      %v4217 = vsel %vm533, %v179, 0
      %4219 = vmatprep.subr.mxu0 0.0
      %4220 = vmatpush1.msra.mxu0 0.0
      %4221 = vmatprep.subr.mxu0 0.0
      %4222 = vmatpush1.msra.mxu0 0.0
      %4223 = vmatprep.subr.mxu0 0.0
      %4224 = vmatpush1.msra.mxu0 0.0
      %4225 = vmatprep.subr.mxu0 0.0
      %4226 = vmatpush1.msra.mxu0 0.0
      %4227 = vmatprep.subr.mxu0 0.0
      %4228 = vmatpush1.msra.mxu0 0.0
      %4229 = vmatprep.subr.mxu0 0.0
      %4230 = vmatpush1.msra.mxu0 0.0
      %4231 = vmatprep.subr.mxu0 0.0
      %4232 = vmatpush1.msra.mxu0 0.0
      %4233 = vmatprep.subr.mxu0 0.0
      %4234 = vmatpush1.msra.mxu0 0.0
      %4235 = vmatprep.subr.mxu0 0.0
      %4236 = vmatpush1.msra.mxu0 0.0
      %4237 = vmatprep.subr.mxu0 0.0
      %4238 = vmatpush1.msra.mxu0 0.0
      %4239 = vmatprep.subr.mxu0 0.0
      %4240 = vmatpush1.msra.mxu0 0.0
      %4241 = vmatprep.subr.mxu0 0.0
      %4242 = vmatpush1.msra.mxu0 0.0
      %4243 = vmatprep.subr.mxu0 0.0
      %4244 = vmatpush1.msra.mxu0 0.0
      %4245 = vmatprep.subr.mxu0 0.0
      %4246 = vmatpush1.msra.mxu0 0.0
      %4247 = vmatprep.subr.mxu0 0.0
      %4248 = vmatpush1.msra.mxu0 0.0
      %4249 = vmatprep.subr.mxu0 0.0
      %4250 = vmatpush1.msra.mxu0 %v4217
      %4251 = vmatprep.subr.mxu0 0.0
      %4252 = vmatpush2.msra.mxu0 0.0
      %4253 = vmatprep.subr.mxu0 0.0
      %4254 = vmatpush2.msra.mxu0 0.0
      %4255 = vmatprep.subr.mxu0 0.0
      %4256 = vmatpush2.msra.mxu0 0.0
      %4257 = vmatprep.subr.mxu0 0.0
      %4258 = vmatpush2.msra.mxu0 0.0
      %4259 = vmatprep.subr.mxu0 0.0
      %4260 = vmatpush2.msra.mxu0 0.0
      %4261 = vmatprep.subr.mxu0 0.0
      %4262 = vmatpush2.msra.mxu0 0.0
      %4263 = vmatprep.subr.mxu0 0.0
      %4264 = vmatpush2.msra.mxu0 0.0
      %4265 = vmatprep.subr.mxu0 0.0
      %4266 = vmatpush2.msra.mxu0 0.0
      %4267 = vmatprep.subr.mxu0 0.0
      %4268 = vmatpush2.msra.mxu0 0.0
      %4269 = vmatprep.subr.mxu0 0.0
      %4270 = vmatpush2.msra.mxu0 0.0
      %4271 = vmatprep.subr.mxu0 0.0
      %4272 = vmatpush2.msra.mxu0 0.0
      %4273 = vmatprep.subr.mxu0 0.0
      %4274 = vmatpush2.msra.mxu0 0.0
      %4275 = vmatprep.subr.mxu0 0.0
      %4276 = vmatpush2.msra.mxu0 0.0
      %4277 = vmatprep.subr.mxu0 0.0
      %4278 = vmatpush2.msra.mxu0 0.0
      %4279 = vmatprep.subr.mxu0 0.0
      %4280 = vmatpush2.msra.mxu0 0.0
      %4281 = vmatprep.subr.mxu0 0.0
      %4282 = vmatpush2.msra.mxu0 0.0
      %4283 = vmatprep.mubr.f32.mxu0 0.0
      %4284 = vmatmul.mubr.f32.gmra.mxu0 %v4121
      %v4285 = vpop.f32.mrf.mxu0
      %v4286 = vadd.f32 0.0, %v4285
      %v4287 = vpop.f32.mrf.mxu0
      %4288 = vmatprep.mubr.f32.mxu0 0.0
      %4289 = vmatmul.mubr.f32.gmra.mxu0 %v4124
      %v4290 = vpop.f32.mrf.mxu0
      %v4291 = vadd.f32 0.0, %v4290
      %v4292 = vpop.f32.mrf.mxu0
      %4293 = vmatprep.mubr.f32.mxu0 0.0
      %4294 = vmatmul.mubr.f32.gmra.mxu0 %v4127
      %v4295 = vpop.f32.mrf.mxu0
      %v4296 = vadd.f32 0.0, %v4295
      %v4297 = vpop.f32.mrf.mxu0
      %4298 = vmatprep.mubr.f32.mxu0 0.0
      %4299 = vmatmul.mubr.f32.gmra.mxu0 %v4130
      %v4300 = vpop.f32.mrf.mxu0
      %v4301 = vadd.f32 0.0, %v4300
      %v4302 = vpop.f32.mrf.mxu0
      %4303 = vmatprep.mubr.f32.mxu0 0.0
      %4304 = vmatmul.mubr.f32.gmra.mxu0 %v4133
      %v4305 = vpop.f32.mrf.mxu0
      %v4306 = vadd.f32 0.0, %v4305
      %v4307 = vpop.f32.mrf.mxu0
      %4308 = vmatprep.mubr.f32.mxu0 0.0
      %4309 = vmatmul.mubr.f32.gmra.mxu0 %v4136
      %v4310 = vpop.f32.mrf.mxu0
      %v4311 = vadd.f32 0.0, %v4310
      %v4312 = vpop.f32.mrf.mxu0
      %4313 = vmatprep.mubr.f32.mxu0 0.0
      %4314 = vmatmul.mubr.f32.gmra.mxu0 %v4139
      %v4315 = vpop.f32.mrf.mxu0
      %v4316 = vadd.f32 0.0, %v4315
      %v4317 = vpop.f32.mrf.mxu0
      %4318 = vmatprep.mubr.f32.mxu0 0.0
      %4319 = vmatmul.mubr.f32.gmra.mxu0 %v4142
      %v4320 = vpop.f32.mrf.mxu0
      %v4321 = vadd.f32 0.0, %v4320
      %v4322 = vpop.f32.mrf.mxu0
      %4323 = vmatprep.mubr.f32.mxu0 0.0
      %4324 = vmatmul.mubr.f32.gmra.mxu0 %v4145
      %v4325 = vpop.f32.mrf.mxu0
      %v4326 = vadd.f32 0.0, %v4325
      %v4327 = vpop.f32.mrf.mxu0
      %4328 = vmatprep.mubr.f32.mxu0 0.0
      %4329 = vmatmul.mubr.f32.gmra.mxu0 %v4148
      %v4330 = vpop.f32.mrf.mxu0
      %v4331 = vadd.f32 0.0, %v4330
      %v4332 = vpop.f32.mrf.mxu0
      %4333 = vmatprep.mubr.f32.mxu0 0.0
      %4334 = vmatmul.mubr.f32.gmra.mxu0 %v4151
      %v4335 = vpop.f32.mrf.mxu0
      %v4336 = vadd.f32 0.0, %v4335
      %v4337 = vpop.f32.mrf.mxu0
      %4338 = vmatprep.mubr.f32.mxu0 0.0
      %4339 = vmatmul.mubr.f32.gmra.mxu0 %v4154
      %v4340 = vpop.f32.mrf.mxu0
      %v4341 = vadd.f32 0.0, %v4340
      %v4342 = vpop.f32.mrf.mxu0
      %4343 = vmatprep.mubr.f32.mxu0 0.0
      %4344 = vmatmul.mubr.f32.gmra.mxu0 %v4157
      %v4345 = vpop.f32.mrf.mxu0
      %v4346 = vadd.f32 0.0, %v4345
      %v4347 = vpop.f32.mrf.mxu0
      %4348 = vmatprep.mubr.f32.mxu0 0.0
      %4349 = vmatmul.mubr.f32.gmra.mxu0 %v4160
      %v4350 = vpop.f32.mrf.mxu0
      %v4351 = vadd.f32 0.0, %v4350
      %v4352 = vpop.f32.mrf.mxu0
      %4353 = vmatprep.mubr.f32.mxu0 0.0
      %4354 = vmatmul.mubr.f32.gmra.mxu0 %v4163
      %v4355 = vpop.f32.mrf.mxu0
      %v4356 = vadd.f32 0.0, %v4355
      %v4357 = vpop.f32.mrf.mxu0
      %4358 = vmatprep.mubr.f32.mxu0 0.0
      %4359 = vmatmul.mubr.f32.gmra.mxu0 %v4166
      %v4360 = vpop.f32.mrf.mxu0
      %v4361 = vadd.f32 0.0, %v4360
      %v4362 = vpop.f32.mrf.mxu0
      %4363 = vmatprep.mubr.f32.mxu0 0.0
      %4364 = vmatmul.mubr.f32.gmra.mxu0 %v4169
      %v4365 = vpop.f32.mrf.mxu0
      %v4366 = vadd.f32 0.0, %v4365
      %v4367 = vpop.f32.mrf.mxu0
      %4368 = vmatprep.mubr.f32.mxu0 0.0
      %4369 = vmatmul.mubr.f32.gmra.mxu0 %v4172
      %v4370 = vpop.f32.mrf.mxu0
      %v4371 = vadd.f32 0.0, %v4370
      %v4372 = vpop.f32.mrf.mxu0
      %4373 = vmatprep.mubr.f32.mxu0 0.0
      %4374 = vmatmul.mubr.f32.gmra.mxu0 %v4175
      %v4375 = vpop.f32.mrf.mxu0
      %v4376 = vadd.f32 0.0, %v4375
      %v4377 = vpop.f32.mrf.mxu0
      %4378 = vmatprep.mubr.f32.mxu0 0.0
      %4379 = vmatmul.mubr.f32.gmra.mxu0 %v4178
      %v4380 = vpop.f32.mrf.mxu0
      %v4381 = vadd.f32 0.0, %v4380
      %v4382 = vpop.f32.mrf.mxu0
      %4383 = vmatprep.mubr.f32.mxu0 0.0
      %4384 = vmatmul.mubr.f32.gmra.mxu0 %v4181
      %v4385 = vpop.f32.mrf.mxu0
      %v4386 = vadd.f32 0.0, %v4385
      %v4387 = vpop.f32.mrf.mxu0
      %4388 = vmatprep.mubr.f32.mxu0 0.0
      %4389 = vmatmul.mubr.f32.gmra.mxu0 %v4184
      %v4390 = vpop.f32.mrf.mxu0
      %v4391 = vadd.f32 0.0, %v4390
      %v4392 = vpop.f32.mrf.mxu0
      %4393 = vmatprep.mubr.f32.mxu0 0.0
      %4394 = vmatmul.mubr.f32.gmra.mxu0 %v4187
      %v4395 = vpop.f32.mrf.mxu0
      %v4396 = vadd.f32 0.0, %v4395
      %v4397 = vpop.f32.mrf.mxu0
      %4398 = vmatprep.mubr.f32.mxu0 0.0
      %4399 = vmatmul.mubr.f32.gmra.mxu0 %v4190
      %v4400 = vpop.f32.mrf.mxu0
      %v4401 = vadd.f32 0.0, %v4400
      %v4402 = vpop.f32.mrf.mxu0
      %4403 = vmatprep.mubr.f32.mxu0 0.0
      %4404 = vmatmul.mubr.f32.gmra.mxu0 %v4193
      %v4405 = vpop.f32.mrf.mxu0
      %v4406 = vadd.f32 0.0, %v4405
      %v4407 = vpop.f32.mrf.mxu0
      %4408 = vmatprep.mubr.f32.mxu0 0.0
      %4409 = vmatmul.mubr.f32.gmra.mxu0 %v4196
      %v4410 = vpop.f32.mrf.mxu0
      %v4411 = vadd.f32 0.0, %v4410
      %v4412 = vpop.f32.mrf.mxu0
      %4413 = vmatprep.mubr.f32.mxu0 0.0
      %4414 = vmatmul.mubr.f32.gmra.mxu0 %v4199
      %v4415 = vpop.f32.mrf.mxu0
      %v4416 = vadd.f32 0.0, %v4415
      %v4417 = vpop.f32.mrf.mxu0
      %4418 = vmatprep.mubr.f32.mxu0 0.0
      %4419 = vmatmul.mubr.f32.gmra.mxu0 %v4202
      %v4420 = vpop.f32.mrf.mxu0
      %v4421 = vadd.f32 0.0, %v4420
      %v4422 = vpop.f32.mrf.mxu0
      %4423 = vmatprep.mubr.f32.mxu0 0.0
      %4424 = vmatmul.mubr.f32.gmra.mxu0 %v4205
      %v4425 = vpop.f32.mrf.mxu0
      %v4426 = vadd.f32 0.0, %v4425
      %v4427 = vpop.f32.mrf.mxu0
      %4428 = vmatprep.mubr.f32.mxu0 0.0
      %4429 = vmatmul.mubr.f32.gmra.mxu0 %v4208
      %v4430 = vpop.f32.mrf.mxu0
      %v4431 = vadd.f32 0.0, %v4430
      %v4432 = vpop.f32.mrf.mxu0
      %4433 = vmatprep.mubr.f32.mxu0 0.0
      %4434 = vmatmul.mubr.f32.gmra.mxu0 %v4211
      %v4435 = vpop.f32.mrf.mxu0
      %v4436 = vadd.f32 0.0, %v4435
      %v4437 = vpop.f32.mrf.mxu0
      %4438 = vmatprep.mubr.f32.mxu0 0.0
      %4439 = vmatmul.mubr.f32.gmra.mxu0 %v4214
      %v4440 = vpop.f32.mrf.mxu0
      %v4441 = vadd.f32 0.0, %v4440
      %v4442 = vpop.f32.mrf.mxu0
      %4443 = vdwg.mxu0
      %v4444 = vadd.f32 %v3960, %v4286
      %v4445 = vadd.f32 %v3961, %v4291
      %v4446 = vadd.f32 %v3962, %v4296
      %v4447 = vadd.f32 %v3963, %v4301
      %v4448 = vadd.f32 %v3964, %v4306
      %v4449 = vadd.f32 %v3965, %v4311
      %v4450 = vadd.f32 %v3966, %v4316
      %v4451 = vadd.f32 %v3967, %v4321
      %v4452 = vadd.f32 %v3968, %v4326
      %v4453 = vadd.f32 %v3969, %v4331
      %v4454 = vadd.f32 %v3970, %v4336
      %v4455 = vadd.f32 %v3971, %v4341
      %v4456 = vadd.f32 %v3972, %v4346
      %v4457 = vadd.f32 %v3973, %v4351
      %v4458 = vadd.f32 %v3974, %v4356
      %v4459 = vadd.f32 %v3975, %v4361
      %v4460 = vadd.f32 %v3976, %v4366
      %v4461 = vadd.f32 %v3977, %v4371
      %v4462 = vadd.f32 %v3978, %v4376
      %v4463 = vadd.f32 %v3979, %v4381
      %v4464 = vadd.f32 %v3980, %v4386
      %v4465 = vadd.f32 %v3981, %v4391
      %v4466 = vadd.f32 %v3982, %v4396
      %v4467 = vadd.f32 %v3983, %v4401
      %v4468 = vadd.f32 %v3984, %v4406
      %v4469 = vadd.f32 %v3985, %v4411
      %v4470 = vadd.f32 %v3986, %v4416
      %v4471 = vadd.f32 %v3987, %v4421
      %v4472 = vadd.f32 %v3988, %v4426
      %v4473 = vadd.f32 %v3989, %v4431
      %v4474 = vadd.f32 %v3990, %v4436
      %v4475 = vadd.f32 %v3991, %v4441
      %v4476 = vld [vmem:[%s2] sm:$0x1]
      %v4478 = vlaneseq
      %v4479 = vshrl.u32 %v4478, 7
      %v4480 = vsub.s32 0, %v4479
      %v4481 = vrot.slane %v4476, %v4480
      %v4483 = vadd.f32 %v4444, %v4481
      %v4484 = vadd.f32 %v4445, %v4481
      %v4485 = vadd.f32 %v4446, %v4481
      %v4486 = vadd.f32 %v4447, %v4481
      %v4487 = vadd.f32 %v4448, %v4481
      %v4488 = vadd.f32 %v4449, %v4481
      %v4489 = vadd.f32 %v4450, %v4481
      %v4490 = vadd.f32 %v4451, %v4481
      %v4491 = vadd.f32 %v4452, %v4481
      %v4492 = vadd.f32 %v4453, %v4481
      %v4493 = vadd.f32 %v4454, %v4481
      %v4494 = vadd.f32 %v4455, %v4481
      %v4495 = vadd.f32 %v4456, %v4481
      %v4496 = vadd.f32 %v4457, %v4481
      %v4497 = vadd.f32 %v4458, %v4481
      %v4498 = vadd.f32 %v4459, %v4481
      %v4499 = vadd.f32 %v4460, %v4481
      %v4500 = vadd.f32 %v4461, %v4481
      %v4501 = vadd.f32 %v4462, %v4481
      %v4502 = vadd.f32 %v4463, %v4481
      %v4503 = vadd.f32 %v4464, %v4481
      %v4504 = vadd.f32 %v4465, %v4481
      %v4505 = vadd.f32 %v4466, %v4481
      %v4506 = vadd.f32 %v4467, %v4481
      %v4507 = vadd.f32 %v4468, %v4481
      %v4508 = vadd.f32 %v4469, %v4481
      %v4509 = vadd.f32 %v4470, %v4481
      %v4510 = vadd.f32 %v4471, %v4481
      %v4511 = vadd.f32 %v4472, %v4481
      %v4512 = vadd.f32 %v4473, %v4481
      %v4513 = vadd.f32 %v4474, %v4481
      %v4514 = vadd.f32 %v4475, %v4481
      %4515 = vst.msk [vmem:[%s170] sm:$0xff] %vm436, %v4483
      %4516 = vst.msk [vmem:[%s170 + $0x8] sm:$0xff] %vm436, %v4484
      %4517 = vst.msk [vmem:[%s170 + $0x10] sm:$0xff] %vm436, %v4485
      %4518 = vst.msk [vmem:[%s170 + $0x18] sm:$0xff] %vm436, %v4486
      %4519 = vst.msk [vmem:[%s170 + $0x20] sm:$0xff] %vm436, %v4487
      %4520 = vst.msk [vmem:[%s170 + $0x28] sm:$0xff] %vm436, %v4488
      %4521 = vst.msk [vmem:[%s170 + $0x30] sm:$0xff] %vm436, %v4489
      %4522 = vst.msk [vmem:[%s170 + $0x38] sm:$0xff] %vm436, %v4490
      %4523 = vst.msk [vmem:[%s170 + $0x40] sm:$0xff] %vm436, %v4491
      %4524 = vst.msk [vmem:[%s170 + $0x48] sm:$0xff] %vm436, %v4492
      %4525 = vst.msk [vmem:[%s170 + $0x50] sm:$0xff] %vm436, %v4493
      %4526 = vst.msk [vmem:[%s170 + $0x58] sm:$0xff] %vm436, %v4494
      %4527 = vst.msk [vmem:[%s170 + $0x60] sm:$0xff] %vm436, %v4495
      %4528 = vst.msk [vmem:[%s170 + $0x68] sm:$0xff] %vm436, %v4496
      %4529 = vst.msk [vmem:[%s170 + $0x70] sm:$0xff] %vm436, %v4497
      %4530 = vst.msk [vmem:[%s170 + $0x78] sm:$0xff] %vm436, %v4498
      %4531 = vst.msk [vmem:[%s170 + $0x80] sm:$0xff] %vm436, %v4499
      %4532 = vst.msk [vmem:[%s170 + $0x88] sm:$0xff] %vm436, %v4500
      %4533 = vst.msk [vmem:[%s170 + $0x90] sm:$0xff] %vm436, %v4501
      %4534 = vst.msk [vmem:[%s170 + $0x98] sm:$0xff] %vm436, %v4502
      %4535 = vst.msk [vmem:[%s170 + $0xa0] sm:$0xff] %vm436, %v4503
      %4536 = vst.msk [vmem:[%s170 + $0xa8] sm:$0xff] %vm436, %v4504
      %4537 = vst.msk [vmem:[%s170 + $0xb0] sm:$0xff] %vm436, %v4505
      %4538 = vst.msk [vmem:[%s170 + $0xb8] sm:$0xff] %vm436, %v4506
      %4539 = vst.msk [vmem:[%s170 + $0xc0] sm:$0xff] %vm436, %v4507
      %4540 = vst.msk [vmem:[%s170 + $0xc8] sm:$0xff] %vm436, %v4508
      %4541 = vst.msk [vmem:[%s170 + $0xd0] sm:$0xff] %vm436, %v4509
      %4542 = vst.msk [vmem:[%s170 + $0xd8] sm:$0xff] %vm436, %v4510
      %4543 = vst.msk [vmem:[%s170 + $0xe0] sm:$0xff] %vm436, %v4511
      %4544 = vst.msk [vmem:[%s170 + $0xe8] sm:$0xff] %vm436, %v4512
      %4545 = vst.msk [vmem:[%s170 + $0xf0] sm:$0xff] %vm436, %v4513
      %4546 = vst.msk [vmem:[%s170 + $0xf8] sm:$0xff] %vm436, %v4514
      %p4547 = scmp.lt.s32.totalorder %s14, 1
      %s4548 = scalar_select %p4547, %s14, 1
      %s4549 = smul.addr %s4548, 32
      %s4550 = smul.addr %s4549, 8
      %s4551 = scalar_lea.vmem %s3, %s4550
      // Predicated region
      $region33: #{tpu_custom_call.1} parent=31 // pred_check
        %p4552 = pneg %p100
      $region34: #{tpu_custom_call.1} parent=31 // pred_check_branch
        %4554 = sbr.rel (%p4552) target = $region36
      $region35: #{tpu_custom_call.1} parent=31 // pred_region
        _
      $region36: #{tpu_custom_call.1} parent=31 // pred_fallthru
        _
    $region32: #{tpu_custom_call.1} parent=5 // pred_fallthru
      _
    %p4555 = scmp.le.s32.totalorder 2, %s9
    // Predicated region
    $region37: #{tpu_custom_call.1} parent=5 // pred_check
      %p4556 = pneg %p4555
    $region38: #{tpu_custom_call.1} parent=5 // pred_check_branch
      %4558 = sbr.rel (%p4556) target = $region40
    $region39: #{tpu_custom_call.1} parent=5 // pred_region
      %s4559 = ssub.s32 %s9, 2
      // Predicated region
      $region41: #{tpu_custom_call.1} parent=39 // pred_check
        %p4560 = pneg %p106
      $region42: #{tpu_custom_call.1} parent=39 // pred_check_branch
        %4562 = sbr.rel (%p4560) target = $region44
      $region43: #{tpu_custom_call.1} parent=39 // pred_region
        %p4563 = scmp.lt.s32.totalorder %s15, 1
        %s4564 = scalar_select %p4563, %s15, 1
        %s4565 = smul.addr %s4564, 32
        %s4566 = smul.addr %s4565, 8
        %s4567 = scalar_lea.vmem %s3, %s4566
      $region44: #{tpu_custom_call.1} parent=39 // pred_fallthru
        _
    $region40: #{tpu_custom_call.1} parent=5 // pred_fallthru
      _
  $region6: #{tpu_custom_call.1} parent=0 // loop_footer
    %s13 = sadd.s32 1, %s9
  $region7: #{tpu_custom_call.1} parent=0 // loop_footer_branch
    %8 = sbr.rel target = $region3
  $region8: #{tpu_custom_call.1} parent=0 // loop_exit
    _

</llo_original>
